<compile_context>
chip_gen: v5e
topology: v5e:2x2
jax: 0.10.0
libtpu: 0.0.40
codegen_flags: <defaults>
</compile_context>

<pallas_src>
import functools
import math

import jax
import jax.numpy as jnp
from jax.experimental import pallas as pl
from jax.experimental.pallas import tpu as pltpu


# ----------------------------- Pallas kernel --------------------------------

def _layernorm(v, g, b, eps=1e-5):
    mu = jnp.mean(v, axis=-1, keepdims=True)
    var = jnp.mean(jnp.square(v - mu), axis=-1, keepdims=True)
    return (v - mu) * jax.lax.rsqrt(var + eps) * g + b


def mldecoder_kernel(
    x_ref,                      # (1, C, bb*S) bf16  activation block, channels-major
    q_ref,                      # (H, L, hd) bf16    pre-scaled per-head queries (hoisted)
    tgtn_ref,                   # (L, E)     f32     norm1(2 * query_embed) (hoisted)
    we_ref, be_ref,             # (E, C) bf16, (E, 1) f32    embed_standart
    wkv_ref, bkv_ref,           # (2E, E) bf16, (2E, 1) f32  fused K|V projection
    wo_ref, bo_ref,             # (H, hd, E) bf16, (1, E) f32 attn out_proj (head-split)
    g2_ref, b2_ref,             # (1, E) f32  norm2
    g3_ref, b3_ref,             # (1, E) f32  norm3
    w1_ref, fb1_ref,            # (E, F) bf16, (1, F) f32  linear1
    w2_ref, fb2_ref,            # (F, E) bf16, (1, E) f32  linear2
    wdp_ref, bdp_ref,           # (L, E) f32, (1, L) f32   duplicate_pooling (+bias)
    out_ref,                    # (1, bb, L) f32
    kv_ref,                     # scratch (2E, bb*S) bf16
    tgt_ref,                    # scratch (bb*L, E) f32
    *, n_heads, batch_block, seq_len):
    f32, bf16 = jnp.float32, jnp.bfloat16
    L, E = tgtn_ref.shape
    hd = E // n_heads
    S = seq_len

    # ---- batched memory path: embed + ReLU + fused K/V projection for the
    #      whole batch block (N = bb*S -> good MXU fill).
    x_blk = x_ref[0]                                                   # (C, bb*S)
    emb = jnp.dot(we_ref[...], x_blk, preferred_element_type=f32) + be_ref[...]
    emb = jnp.maximum(emb, 0.0).astype(bf16)                           # (E, bb*S)
    kv = jnp.dot(wkv_ref[...], emb, preferred_element_type=f32) + bkv_ref[...]
    kv_ref[...] = kv.astype(bf16)          # single bf16 cast; sliced per head below

    # ---- per-sample multi-head cross attention + residual + norm2.
    #      fori_loop bounds live ranges; results land in tgt_ref rows.
    def attn_body(bi, carry):
        col0 = pl.multiple_of(bi * S, S)
        acc = jnp.zeros((L, E), f32)
        for h in range(n_heads):                     # static unroll, n_heads small
            kh = kv_ref[pl.ds(h * hd, hd), pl.ds(col0, S)]             # (hd, S) bf16
            vh = kv_ref[pl.ds(E + h * hd, hd), pl.ds(col0, S)]         # (hd, S) bf16
            s = jnp.dot(q_ref[h], kh, preferred_element_type=f32)      # (L, S)
            s = s - jnp.max(s, axis=-1, keepdims=True)
            p = jnp.exp(s)
            p = p * pl.reciprocal(jnp.sum(p, axis=-1, keepdims=True), approx=True)
            ctx = jax.lax.dot_general(p.astype(bf16), vh,
                                      (((1,), (1,)), ((), ())),
                                      preferred_element_type=f32)      # (L, hd)
            acc = acc + jnp.dot(ctx.astype(bf16), wo_ref[h],
                                preferred_element_type=f32)            # (L, E)
        tgt_bi = _layernorm(tgtn_ref[...] + acc + bo_ref[...],
                            g2_ref[...], b2_ref[...])
        row0 = pl.multiple_of(bi * L, L)
        tgt_ref[pl.ds(row0, L), :] = tgt_bi
        return carry

    jax.lax.fori_loop(0, batch_block, attn_body, 0)

    # ---- batched FFN + residual + norm3 over all bb*L decoder tokens at once.
    tgt_all = tgt_ref[...]                                             # (bb*L, E)
    ff = jnp.dot(tgt_all.astype(bf16), w1_ref[...],
                 preferred_element_type=f32) + fb1_ref[...]
    ff = jnp.maximum(ff, 0.0)
    y = jnp.dot(ff.astype(bf16), w2_ref[...],
                preferred_element_type=f32) + fb2_ref[...]
    h_dec = _layernorm(tgt_all + y, g3_ref[...], b3_ref[...])          # (bb*L, E)

    # ---- GroupFC (duplicate_factor == 1) for the whole block, single store.
    prod = h_dec.reshape(batch_block, L, E) * wdp_ref[...][None]
    logits = jnp.sum(prod, axis=-1) + bdp_ref[...]                     # (bb, L)
    out_ref[0] = logits.astype(out_ref.dtype)


# ------------------------- parameter packing (once) --------------------------

_WEIGHT_KEYS = ("q_heads", "tgt_norm", "we", "be", "wkv", "bkv", "wo", "bo",
                "g2", "b2", "g3", "b3", "w1", "fb1", "w2", "fb2", "wdp", "bdp")


def pack_mldecoder_params(p, *, n_heads):
    """Pre-computes the kernel operand set (bf16 casts, transposes, fused K|V,
    head-split out_proj, hoisted query path).  Call once at model init."""
    f32, bf16 = jnp.float32, jnp.bfloat16
    L, E = p["query_embed"].shape
    assert E % n_heads == 0
    hd = E // n_heads

    wq, wk, wv = jnp.split(p["in_proj_w"], 3, axis=0)
    bq, bk, bv = jnp.split(p["in_proj_b"], 3)

    def _ln(v, g, b, eps=1e-5):
        mu = v.mean(-1, keepdims=True)
        var = ((v - mu) ** 2).mean(-1, keepdims=True)
        return (v - mu) / jnp.sqrt(var + eps) * g + b

    # Batch-invariant query path: tgt = 2*query_embed -> norm1 -> Q proj -> scale.
    tgt_norm = _ln(2.0 * p["query_embed"], p["norm1_g"], p["norm1_b"])     # (L, E)
    q = tgt_norm @ wq.T + bq                                               # (L, E)
    q_heads = ((q / math.sqrt(hd)).reshape(L, n_heads, hd)
               .transpose(1, 0, 2).astype(bf16))                           # (H, L, hd)

    row = lambda v: v.reshape(1, -1).astype(f32)
    col = lambda v: v.reshape(-1, 1).astype(f32)

    return {
        "q_heads": q_heads,
        "tgt_norm": tgt_norm.astype(f32),
        "we": p["embed_w"].astype(bf16), "be": col(p["embed_b"]),
        "wkv": jnp.concatenate([wk, wv], axis=0).astype(bf16),
        "bkv": col(jnp.concatenate([bk, bv])),
        "wo": p["out_proj_w"].T.reshape(n_heads, hd, E).astype(bf16),
        "bo": row(p["out_proj_b"]),
        "g2": row(p["norm2_g"]), "b2": row(p["norm2_b"]),
        "g3": row(p["norm3_g"]), "b3": row(p["norm3_b"]),
        "w1": p["linear1_w"].T.astype(bf16), "fb1": row(p["linear1_b"]),
        "w2": p["linear2_w"].T.astype(bf16), "fb2": row(p["linear2_b"]),
        "wdp": p["dup_pool"][..., 0].astype(f32), "bdp": row(p["dup_pool_b"]),
    }


# ------------------------------- wrapper -------------------------------------

def ml_decoder_forward(x, packed, *, n_heads, batch_block=None):
    B, C, Hs, Ws = x.shape
    S = Hs * Ws
    L, E = packed["tgt_norm"].shape
    F = packed["w1"].shape[1]
    f32, bf16 = jnp.float32, jnp.bfloat16

    if batch_block is None:
        # Largest divisor of B (capped at 8 samples/step) that still leaves a
        # grid of >= 2 steps so v7x's two TensorCores both get work.
        divisors = [d for d in range(1, min(B, 8) + 1) if B % d == 0]
        multi = [d for d in divisors if B // d >= 2]
        batch_block = max(multi) if multi else max(divisors)
    assert B % batch_block == 0, "batch size must be divisible by batch_block"
    bb = batch_block
    G = B // bb

    # Activation laid out as (grid, C, bb*S) bf16 (one cheap XLA transpose+cast);
    # last two block dims cover the full array so any S works.
    x_g = (x.reshape(B, C, S)
             .reshape(G, bb, C, S)
             .transpose(0, 2, 1, 3)
             .reshape(G, C, bb * S)
             .astype(bf16))

    weights = [packed[k] for k in _WEIGHT_KEYS]

    # ---- VMEM budget: weights counted per their buffering, activation/output
    #      blocks double-buffered, scratch + f32 intermediates + slack; capped
    #      at real device capacity minus headroom (critical on v7x's 64 MiB).
    try:
        cap = int(pltpu.get_tpu_info().vmem_capacity_bytes)
    except Exception:
        cap = 64 * 1024 * 1024
    weight_bytes = sum(int(w.size) * w.dtype.itemsize for w in weights)
    x_block_bytes = C * bb * S * 2
    out_block_bytes = bb * L * 4
    scratch_bytes = 2 * E * bb * S * 2 + bb * L * E * 4
    interm_bytes = (3 * E * bb * S + bb * L * F + 3 * bb * L * E + 2 * L * S) * 4

    def _vmem_limit(weight_buffers):
        need = (weight_buffers * weight_bytes
                + 2 * (x_block_bytes + out_block_bytes)
                + scratch_bytes + interm_bytes)
        return int(min(cap - (8 << 20), max(32 << 20, need + (16 << 20))))

    def _run(weight_mode, weight_buffers):
        def wspec(arr):
            zeros = (0,) * arr.ndim
            if weight_mode is None:
                return pl.BlockSpec(arr.shape, lambda *_: zeros)
            return pl.BlockSpec(arr.shape, lambda *_: zeros,
                                pipeline_mode=weight_mode)

        in_specs = [pl.BlockSpec((1, C, bb * S), lambda i: (i, 0, 0))]
        in_specs += [wspec(w) for w in weights]

        out = pl.pallas_call(
            functools.partial(mldecoder_kernel, n_heads=n_heads,
                              batch_block=bb, seq_len=S),
            out_shape=jax.ShapeDtypeStruct((G, bb, L), f32),
            grid=(G,),
            in_specs=in_specs,
            out_specs=pl.BlockSpec((1, bb, L), lambda i: (i, 0, 0)),
            scratch_shapes=[pltpu.VMEM((2 * E, bb * S), bf16),
                            pltpu.VMEM((bb * L, E), f32)],
            compiler_params=pltpu.CompilerParams(
                dimension_semantics=("parallel",),
                vmem_limit_bytes=_vmem_limit(weight_buffers)),
        )(x_g, *weights)
        # flatten(1)[:, :num_classes] with duplicate_factor == 1 -> (B, num_classes)
        return out.reshape(B, L)

    try:
        # Grid-invariant weights: request single buffering (saves their second
        # VMEM copy; important under v7x's 64 MiB).
        return _run(pl.Buffered(1), 1)
    except Exception:
        # Fallback if this Pallas build rejects single-buffered inputs.
        return _run(None, 2)


# ------------------------ pure-JAX reference (check) --------------------------

def ref_forward(x, p, *, n_heads):
    B, C, Hs, Ws = x.shape
    S = Hs * Ws
    xs = jnp.transpose(x.reshape(B, C, S), (0, 2, 1))
    emb = jax.nn.relu(xs @ p["embed_w"].T + p["embed_b"])
    L, E = p["query_embed"].shape
    hd = E // n_heads

    def ln(v, g, b):
        mu = v.mean(-1, keepdims=True)
        var = ((v - mu) ** 2).mean(-1, keepdims=True)
        return (v - mu) / jnp.sqrt(var + 1e-5) * g + b

    tgt = jnp.broadcast_to(p["query_embed"][None], (B, L, E)) * 2.0
    tgt = ln(tgt, p["norm1_g"], p["norm1_b"])
    wq, wk, wv = jnp.split(p["in_proj_w"], 3, axis=0)
    bq, bk, bv = jnp.split(p["in_proj_b"], 3)
    q = (tgt @ wq.T + bq).reshape(B, L, n_heads, hd).transpose(0, 2, 1, 3)
    k = (emb @ wk.T + bk).reshape(B, S, n_heads, hd).transpose(0, 2, 1, 3)
    v = (emb @ wv.T + bv).reshape(B, S, n_heads, hd).transpose(0, 2, 1, 3)
    s = (q @ jnp.swapaxes(k, -1, -2)) / math.sqrt(hd)
    ctx = (jax.nn.softmax(s, axis=-1) @ v).transpose(0, 2, 1, 3).reshape(B, L, E)
    attn = ctx @ p["out_proj_w"].T + p["out_proj_b"]
    tgt = ln(tgt + attn, p["norm2_g"], p["norm2_b"])
    ff = jax.nn.relu(tgt @ p["linear1_w"].T + p["linear1_b"]) @ p["linear2_w"].T + p["linear2_b"]
    h = ln(tgt + ff, p["norm3_g"], p["norm3_b"])
    return jnp.einsum("ble,le->bl", h, p["dup_pool"][..., 0]) + p["dup_pool_b"]


# --------------------------------- main --------------------------------------

if __name__ == "__main__":
    # Small, forward-consistent shapes.
    B, hidden_dim, Hs, Ws = 2, 32, 16, 16
    num_classes, n_heads, d_ff, dec_emb = 8, 4, 64, 32
    E, L, F = dec_emb, num_classes, d_ff

    key = jax.random.PRNGKey(0)
    ks = jax.random.split(key, 12)
    nrm = lambda k, s, sc=0.05: (jax.random.normal(k, s) * sc).astype(jnp.float32)

    params = {
        "embed_w": nrm(ks[0], (E, hidden_dim)),
        "embed_b": nrm(ks[1], (E,)),
        "query_embed": nrm(ks[2], (L, E), 1.0),
        "in_proj_w": nrm(ks[3], (3 * E, E)),
        "in_proj_b": nrm(ks[4], (3 * E,)),
        "out_proj_w": nrm(ks[5], (E, E)),
        "out_proj_b": nrm(ks[6], (E,)),
        "norm1_g": jnp.ones((E,), jnp.float32), "norm1_b": jnp.zeros((E,), jnp.float32),
        "norm2_g": jnp.ones((E,), jnp.float32), "norm2_b": jnp.zeros((E,), jnp.float32),
        "norm3_g": jnp.ones((E,), jnp.float32), "norm3_b": jnp.zeros((E,), jnp.float32),
        "linear1_w": nrm(ks[7], (F, E)),
        "linear1_b": nrm(ks[8], (F,)),
        "linear2_w": nrm(ks[9], (E, F)),
        "linear2_b": nrm(ks[10], (E,)),
        "dup_pool": nrm(ks[11], (L, E, 1), 0.1),          # xavier_normal-ish
        "dup_pool_b": jnp.zeros((L,), jnp.float32),       # constant_(0)
    }

    x = jax.random.normal(jax.random.PRNGKey(1), (B, hidden_dim, Hs, Ws), jnp.float32)

    packed = pack_mldecoder_params(params, n_heads=n_heads)          # once, reused
    logits = jax.block_until_ready(ml_decoder_forward(x, packed, n_heads=n_heads))
    ref = jax.block_until_ready(ref_forward(x, params, n_heads=n_heads))

    assert logits.shape == (B, num_classes), logits.shape
    # bf16 MXU inputs + bf16 activation stream + approx reciprocal -> compare
    # against the f32 reference with a bf16-appropriate tolerance.
    assert jnp.allclose(logits, ref, atol=5e-2, rtol=5e-2), (logits, ref)
    print("KERNEL_OK")
</pallas_src>

<mosaic_0001>
module attributes {stable_mosaic.version = 11 : i64} {
  func.func @mldecoder_kernel(%arg0: i32, %arg1: memref<1x32x256xbf16, #tpu.memory_space<vmem>>, %arg2: memref<4x8x8xbf16, #tpu.memory_space<vmem>>, %arg3: memref<8x32xf32, #tpu.memory_space<vmem>>, %arg4: memref<32x32xbf16, #tpu.memory_space<vmem>>, %arg5: memref<32x1xf32, #tpu.memory_space<vmem>>, %arg6: memref<64x32xbf16, #tpu.memory_space<vmem>>, %arg7: memref<64x1xf32, #tpu.memory_space<vmem>>, %arg8: memref<4x8x32xbf16, #tpu.memory_space<vmem>>, %arg9: memref<1x32xf32, #tpu.memory_space<vmem>>, %arg10: memref<1x32xf32, #tpu.memory_space<vmem>>, %arg11: memref<1x32xf32, #tpu.memory_space<vmem>>, %arg12: memref<1x32xf32, #tpu.memory_space<vmem>>, %arg13: memref<1x32xf32, #tpu.memory_space<vmem>>, %arg14: memref<32x64xbf16, #tpu.memory_space<vmem>>, %arg15: memref<1x64xf32, #tpu.memory_space<vmem>>, %arg16: memref<64x32xbf16, #tpu.memory_space<vmem>>, %arg17: memref<1x32xf32, #tpu.memory_space<vmem>>, %arg18: memref<8x32xf32, #tpu.memory_space<vmem>>, %arg19: memref<1x8xf32, #tpu.memory_space<vmem>>, %arg20: memref<1x1x8xf32, #tpu.memory_space<vmem>>, %arg21: memref<64x256xbf16, #tpu.memory_space<vmem>>, %arg22: memref<8x32xf32, #tpu.memory_space<vmem>>) attributes {dimension_semantics = [#tpu.dimension_semantics<parallel>], iteration_bounds = array<i64: 2>, scalar_prefetch = 0 : i64, scratch_operands = 2 : i64, tpu.core_type = #tpu.core_type<tc>, window_params = [{transform_indices = @transform_0, window_bounds = array<i64: 1, 32, 256>}, {pipeline_mode = #tpu.pipeline_mode<synchronous>, transform_indices = @transform_1, window_bounds = array<i64: 4, 8, 8>}, {pipeline_mode = #tpu.pipeline_mode<synchronous>, transform_indices = @transform_2, window_bounds = array<i64: 8, 32>}, {pipeline_mode = #tpu.pipeline_mode<synchronous>, transform_indices = @transform_3, window_bounds = array<i64: 32, 32>}, {pipeline_mode = #tpu.pipeline_mode<synchronous>, transform_indices = @transform_4, window_bounds = array<i64: 32, 1>}, {pipeline_mode = #tpu.pipeline_mode<synchronous>, transform_indices = @transform_5, window_bounds = array<i64: 64, 32>}, {pipeline_mode = #tpu.pipeline_mode<synchronous>, transform_indices = @transform_6, window_bounds = array<i64: 64, 1>}, {pipeline_mode = #tpu.pipeline_mode<synchronous>, transform_indices = @transform_7, window_bounds = array<i64: 4, 8, 32>}, {pipeline_mode = #tpu.pipeline_mode<synchronous>, transform_indices = @transform_8, window_bounds = array<i64: 1, 32>}, {pipeline_mode = #tpu.pipeline_mode<synchronous>, transform_indices = @transform_9, window_bounds = array<i64: 1, 32>}, {pipeline_mode = #tpu.pipeline_mode<synchronous>, transform_indices = @transform_10, window_bounds = array<i64: 1, 32>}, {pipeline_mode = #tpu.pipeline_mode<synchronous>, transform_indices = @transform_11, window_bounds = array<i64: 1, 32>}, {pipeline_mode = #tpu.pipeline_mode<synchronous>, transform_indices = @transform_12, window_bounds = array<i64: 1, 32>}, {pipeline_mode = #tpu.pipeline_mode<synchronous>, transform_indices = @transform_13, window_bounds = array<i64: 32, 64>}, {pipeline_mode = #tpu.pipeline_mode<synchronous>, transform_indices = @transform_14, window_bounds = array<i64: 1, 64>}, {pipeline_mode = #tpu.pipeline_mode<synchronous>, transform_indices = @transform_15, window_bounds = array<i64: 64, 32>}, {pipeline_mode = #tpu.pipeline_mode<synchronous>, transform_indices = @transform_16, window_bounds = array<i64: 1, 32>}, {pipeline_mode = #tpu.pipeline_mode<synchronous>, transform_indices = @transform_17, window_bounds = array<i64: 8, 32>}, {pipeline_mode = #tpu.pipeline_mode<synchronous>, transform_indices = @transform_18, window_bounds = array<i64: 1, 8>}, {transform_indices = @transform_19, window_bounds = array<i64: 1, 1, 8>}]} {
    %c0 = arith.constant 0 : index
    %c0_0 = arith.constant 0 : index
    %c0_1 = arith.constant 0 : index
    %0 = vector.load %arg1[%c0, %c0_0, %c0_1] : memref<1x32x256xbf16, #tpu.memory_space<vmem>>, vector<1x32x256xbf16>
    %1 = vector.shape_cast %0 : vector<1x32x256xbf16> to vector<32x256xbf16>
    %c0_2 = arith.constant 0 : index
    %c0_3 = arith.constant 0 : index
    %2 = vector.load %arg4[%c0_2, %c0_3] : memref<32x32xbf16, #tpu.memory_space<vmem>>, vector<32x32xbf16>
    %cst = arith.constant dense<0.000000e+00> : vector<32x256xf32>
    %3 = tpu.matmul %2, %1, %cst {dimension_numbers = #tpu.dot_dimension_numbers<[1], [0], [0], [1], [0, 0, 1, 1], [], []>} : vector<32x32xbf16>, vector<32x256xbf16>, vector<32x256xf32> -> vector<32x256xf32>
    %c0_4 = arith.constant 0 : index
    %c0_5 = arith.constant 0 : index
    %4 = vector.load %arg5[%c0_4, %c0_5] : memref<32x1xf32, #tpu.memory_space<vmem>>, vector<32x1xf32>
    %5 = vector.broadcast %4 : vector<32x1xf32> to vector<32x256xf32>
    %6 = arith.addf %3, %5 : vector<32x256xf32>
    %cst_6 = arith.constant 0.000000e+00 : f32
    %7 = vector.broadcast %cst_6 : f32 to vector<32x256xf32>
    %8 = arith.maximumf %6, %7 : vector<32x256xf32>
    %9 = arith.truncf %8 : vector<32x256xf32> to vector<32x256xbf16>
    %c0_7 = arith.constant 0 : index
    %c0_8 = arith.constant 0 : index
    %10 = vector.load %arg6[%c0_7, %c0_8] : memref<64x32xbf16, #tpu.memory_space<vmem>>, vector<64x32xbf16>
    %cst_9 = arith.constant dense<0.000000e+00> : vector<64x256xf32>
    %11 = tpu.matmul %10, %9, %cst_9 {dimension_numbers = #tpu.dot_dimension_numbers<[1], [0], [0], [1], [0, 0, 1, 1], [], []>} : vector<64x32xbf16>, vector<32x256xbf16>, vector<64x256xf32> -> vector<64x256xf32>
    %c0_10 = arith.constant 0 : index
    %c0_11 = arith.constant 0 : index
    %12 = vector.load %arg7[%c0_10, %c0_11] : memref<64x1xf32, #tpu.memory_space<vmem>>, vector<64x1xf32>
    %13 = vector.broadcast %12 : vector<64x1xf32> to vector<64x256xf32>
    %14 = arith.addf %11, %13 : vector<64x256xf32>
    %15 = arith.truncf %14 : vector<64x256xf32> to vector<64x256xbf16>
    %c0_12 = arith.constant 0 : index
    %c0_13 = arith.constant 0 : index
    %16 = vector.load %arg21[%c0_12, %c0_13] : memref<64x256xbf16, #tpu.memory_space<vmem>>, vector<64x256xbf16>
    tpu.vector_store %arg21[%c0_12, %c0_13], %15 {strides = array<i32>} : memref<64x256xbf16, #tpu.memory_space<vmem>>, vector<64x256xbf16>,
    %c0_i32 = arith.constant 0 : i32
    %c256_i32 = arith.constant 256 : i32
    %17 = arith.muli %c0_i32, %c256_i32 : i32
    %18 = tpu.assume_multiple %17, 256 : i32
    %cst_14 = arith.constant 0.000000e+00 : f32
    %19 = vector.broadcast %cst_14 : f32 to vector<8x32xf32>
    %c0_15 = arith.constant 0 : index
    %20 = arith.index_cast %18 : i32 to index
    %21 = vector.load %arg21[%c0_15, %20] : memref<64x256xbf16, #tpu.memory_space<vmem>>, vector<8x256xbf16>
    %c32 = arith.constant 32 : index
    %22 = arith.index_cast %18 : i32 to index
    %23 = vector.load %arg21[%c32, %22] : memref<64x256xbf16, #tpu.memory_space<vmem>>, vector<8x256xbf16>
    %c0_16 = arith.constant 0 : index
    %c0_17 = arith.constant 0 : index
    %c0_18 = arith.constant 0 : index
    %24 = vector.load %arg2[%c0_16, %c0_17, %c0_18] : memref<4x8x8xbf16, #tpu.memory_space<vmem>>, vector<1x8x8xbf16>
    %25 = vector.shape_cast %24 : vector<1x8x8xbf16> to vector<8x8xbf16>
    %cst_19 = arith.constant dense<0.000000e+00> : vector<8x256xf32>
    %26 = tpu.matmul %25, %21, %cst_19 {dimension_numbers = #tpu.dot_dimension_numbers<[1], [0], [0], [1], [0, 0, 1, 1], [], []>} : vector<8x8xbf16>, vector<8x256xbf16>, vector<8x256xf32> -> vector<8x256xf32>
    %cst_20 = arith.constant dense<0xFF800000> : vector<8xf32>
    %27 = vector.multi_reduction <maximumf>, %26, %cst_20 [1] : vector<8x256xf32> to vector<8xf32>
    %28 = vector.shape_cast %27 : vector<8xf32> to vector<8x1xf32>
    %29 = vector.broadcast %28 : vector<8x1xf32> to vector<8x256xf32>
    %30 = arith.subf %26, %29 : vector<8x256xf32>
    %31 = math.exp %30 : vector<8x256xf32>
    %cst_21 = arith.constant dense<0.000000e+00> : vector<8xf32>
    %32 = vector.multi_reduction <add>, %31, %cst_21 [1] : vector<8x256xf32> to vector<8xf32>
    %33 = vector.shape_cast %32 : vector<8xf32> to vector<8x1xf32>
    %34 = tpu.reciprocal %33 {approx = true} : vector<8x1xf32> -> vector<8x1xf32>
    %35 = vector.broadcast %34 : vector<8x1xf32> to vector<8x256xf32>
    %36 = arith.mulf %31, %35 : vector<8x256xf32>
    %37 = arith.truncf %36 : vector<8x256xf32> to vector<8x256xbf16>
    %cst_22 = arith.constant dense<0.000000e+00> : vector<8x8xf32>
    %38 = tpu.matmul %37, %23, %cst_22 {dimension_numbers = #tpu.dot_dimension_numbers<[1], [1], [0], [0], [0, 0, 1, 0], [], []>} : vector<8x256xbf16>, vector<8x256xbf16>, vector<8x8xf32> -> vector<8x8xf32>
    %39 = arith.truncf %38 : vector<8x8xf32> to vector<8x8xbf16>
    %c0_23 = arith.constant 0 : index
    %c0_24 = arith.constant 0 : index
    %c0_25 = arith.constant 0 : index
    %40 = vector.load %arg8[%c0_23, %c0_24, %c0_25] : memref<4x8x32xbf16, #tpu.memory_space<vmem>>, vector<1x8x32xbf16>
    %41 = vector.shape_cast %40 : vector<1x8x32xbf16> to vector<8x32xbf16>
    %cst_26 = arith.constant dense<0.000000e+00> : vector<8x32xf32>
    %42 = tpu.matmul %39, %41, %cst_26 {dimension_numbers = #tpu.dot_dimension_numbers<[1], [0], [0], [1], [0, 0, 1, 1], [], []>} : vector<8x8xbf16>, vector<8x32xbf16>, vector<8x32xf32> -> vector<8x32xf32>
    %43 = arith.addf %19, %42 : vector<8x32xf32>
    %c8 = arith.constant 8 : index
    %44 = arith.index_cast %18 : i32 to index
    %45 = vector.load %arg21[%c8, %44] : memref<64x256xbf16, #tpu.memory_space<vmem>>, vector<8x256xbf16>
    %c40 = arith.constant 40 : index
    %46 = arith.index_cast %18 : i32 to index
    %47 = vector.load %arg21[%c40, %46] : memref<64x256xbf16, #tpu.memory_space<vmem>>, vector<8x256xbf16>
    %c1 = arith.constant 1 : index
    %c0_27 = arith.constant 0 : index
    %c0_28 = arith.constant 0 : index
    %48 = vector.load %arg2[%c1, %c0_27, %c0_28] : memref<4x8x8xbf16, #tpu.memory_space<vmem>>, vector<1x8x8xbf16>
    %49 = vector.shape_cast %48 : vector<1x8x8xbf16> to vector<8x8xbf16>
    %cst_29 = arith.constant dense<0.000000e+00> : vector<8x256xf32>
    %50 = tpu.matmul %49, %45, %cst_29 {dimension_numbers = #tpu.dot_dimension_numbers<[1], [0], [0], [1], [0, 0, 1, 1], [], []>} : vector<8x8xbf16>, vector<8x256xbf16>, vector<8x256xf32> -> vector<8x256xf32>
    %cst_30 = arith.constant dense<0xFF800000> : vector<8xf32>
    %51 = vector.multi_reduction <maximumf>, %50, %cst_30 [1] : vector<8x256xf32> to vector<8xf32>
    %52 = vector.shape_cast %51 : vector<8xf32> to vector<8x1xf32>
    %53 = vector.broadcast %52 : vector<8x1xf32> to vector<8x256xf32>
    %54 = arith.subf %50, %53 : vector<8x256xf32>
    %55 = math.exp %54 : vector<8x256xf32>
    %cst_31 = arith.constant dense<0.000000e+00> : vector<8xf32>
    %56 = vector.multi_reduction <add>, %55, %cst_31 [1] : vector<8x256xf32> to vector<8xf32>
    %57 = vector.shape_cast %56 : vector<8xf32> to vector<8x1xf32>
    %58 = tpu.reciprocal %57 {approx = true} : vector<8x1xf32> -> vector<8x1xf32>
    %59 = vector.broadcast %58 : vector<8x1xf32> to vector<8x256xf32>
    %60 = arith.mulf %55, %59 : vector<8x256xf32>
    %61 = arith.truncf %60 : vector<8x256xf32> to vector<8x256xbf16>
    %cst_32 = arith.constant dense<0.000000e+00> : vector<8x8xf32>
    %62 = tpu.matmul %61, %47, %cst_32 {dimension_numbers = #tpu.dot_dimension_numbers<[1], [1], [0], [0], [0, 0, 1, 0], [], []>} : vector<8x256xbf16>, vector<8x256xbf16>, vector<8x8xf32> -> vector<8x8xf32>
    %63 = arith.truncf %62 : vector<8x8xf32> to vector<8x8xbf16>
    %c1_33 = arith.constant 1 : index
    %c0_34 = arith.constant 0 : index
    %c0_35 = arith.constant 0 : index
    %64 = vector.load %arg8[%c1_33, %c0_34, %c0_35] : memref<4x8x32xbf16, #tpu.memory_space<vmem>>, vector<1x8x32xbf16>
    %65 = vector.shape_cast %64 : vector<1x8x32xbf16> to vector<8x32xbf16>
    %cst_36 = arith.constant dense<0.000000e+00> : vector<8x32xf32>
    %66 = tpu.matmul %63, %65, %cst_36 {dimension_numbers = #tpu.dot_dimension_numbers<[1], [0], [0], [1], [0, 0, 1, 1], [], []>} : vector<8x8xbf16>, vector<8x32xbf16>, vector<8x32xf32> -> vector<8x32xf32>
    %67 = arith.addf %43, %66 : vector<8x32xf32>
    %c16 = arith.constant 16 : index
    %68 = arith.index_cast %18 : i32 to index
    %69 = vector.load %arg21[%c16, %68] : memref<64x256xbf16, #tpu.memory_space<vmem>>, vector<8x256xbf16>
    %c48 = arith.constant 48 : index
    %70 = arith.index_cast %18 : i32 to index
    %71 = vector.load %arg21[%c48, %70] : memref<64x256xbf16, #tpu.memory_space<vmem>>, vector<8x256xbf16>
    %c2 = arith.constant 2 : index
    %c0_37 = arith.constant 0 : index
    %c0_38 = arith.constant 0 : index
    %72 = vector.load %arg2[%c2, %c0_37, %c0_38] : memref<4x8x8xbf16, #tpu.memory_space<vmem>>, vector<1x8x8xbf16>
    %73 = vector.shape_cast %72 : vector<1x8x8xbf16> to vector<8x8xbf16>
    %cst_39 = arith.constant dense<0.000000e+00> : vector<8x256xf32>
    %74 = tpu.matmul %73, %69, %cst_39 {dimension_numbers = #tpu.dot_dimension_numbers<[1], [0], [0], [1], [0, 0, 1, 1], [], []>} : vector<8x8xbf16>, vector<8x256xbf16>, vector<8x256xf32> -> vector<8x256xf32>
    %cst_40 = arith.constant dense<0xFF800000> : vector<8xf32>
    %75 = vector.multi_reduction <maximumf>, %74, %cst_40 [1] : vector<8x256xf32> to vector<8xf32>
    %76 = vector.shape_cast %75 : vector<8xf32> to vector<8x1xf32>
    %77 = vector.broadcast %76 : vector<8x1xf32> to vector<8x256xf32>
    %78 = arith.subf %74, %77 : vector<8x256xf32>
    %79 = math.exp %78 : vector<8x256xf32>
    %cst_41 = arith.constant dense<0.000000e+00> : vector<8xf32>
    %80 = vector.multi_reduction <add>, %79, %cst_41 [1] : vector<8x256xf32> to vector<8xf32>
    %81 = vector.shape_cast %80 : vector<8xf32> to vector<8x1xf32>
    %82 = tpu.reciprocal %81 {approx = true} : vector<8x1xf32> -> vector<8x1xf32>
    %83 = vector.broadcast %82 : vector<8x1xf32> to vector<8x256xf32>
    %84 = arith.mulf %79, %83 : vector<8x256xf32>
    %85 = arith.truncf %84 : vector<8x256xf32> to vector<8x256xbf16>
    %cst_42 = arith.constant dense<0.000000e+00> : vector<8x8xf32>
    %86 = tpu.matmul %85, %71, %cst_42 {dimension_numbers = #tpu.dot_dimension_numbers<[1], [1], [0], [0], [0, 0, 1, 0], [], []>} : vector<8x256xbf16>, vector<8x256xbf16>, vector<8x8xf32> -> vector<8x8xf32>
    %87 = arith.truncf %86 : vector<8x8xf32> to vector<8x8xbf16>
    %c2_43 = arith.constant 2 : index
    %c0_44 = arith.constant 0 : index
    %c0_45 = arith.constant 0 : index
    %88 = vector.load %arg8[%c2_43, %c0_44, %c0_45] : memref<4x8x32xbf16, #tpu.memory_space<vmem>>, vector<1x8x32xbf16>
    %89 = vector.shape_cast %88 : vector<1x8x32xbf16> to vector<8x32xbf16>
    %cst_46 = arith.constant dense<0.000000e+00> : vector<8x32xf32>
    %90 = tpu.matmul %87, %89, %cst_46 {dimension_numbers = #tpu.dot_dimension_numbers<[1], [0], [0], [1], [0, 0, 1, 1], [], []>} : vector<8x8xbf16>, vector<8x32xbf16>, vector<8x32xf32> -> vector<8x32xf32>
    %91 = arith.addf %67, %90 : vector<8x32xf32>
    %c24 = arith.constant 24 : index
    %92 = arith.index_cast %18 : i32 to index
    %93 = vector.load %arg21[%c24, %92] : memref<64x256xbf16, #tpu.memory_space<vmem>>, vector<8x256xbf16>
    %c56 = arith.constant 56 : index
    %94 = arith.index_cast %18 : i32 to index
    %95 = vector.load %arg21[%c56, %94] : memref<64x256xbf16, #tpu.memory_space<vmem>>, vector<8x256xbf16>
    %c3 = arith.constant 3 : index
    %c0_47 = arith.constant 0 : index
    %c0_48 = arith.constant 0 : index
    %96 = vector.load %arg2[%c3, %c0_47, %c0_48] : memref<4x8x8xbf16, #tpu.memory_space<vmem>>, vector<1x8x8xbf16>
    %97 = vector.shape_cast %96 : vector<1x8x8xbf16> to vector<8x8xbf16>
    %cst_49 = arith.constant dense<0.000000e+00> : vector<8x256xf32>
    %98 = tpu.matmul %97, %93, %cst_49 {dimension_numbers = #tpu.dot_dimension_numbers<[1], [0], [0], [1], [0, 0, 1, 1], [], []>} : vector<8x8xbf16>, vector<8x256xbf16>, vector<8x256xf32> -> vector<8x256xf32>
    %cst_50 = arith.constant dense<0xFF800000> : vector<8xf32>
    %99 = vector.multi_reduction <maximumf>, %98, %cst_50 [1] : vector<8x256xf32> to vector<8xf32>
    %100 = vector.shape_cast %99 : vector<8xf32> to vector<8x1xf32>
    %101 = vector.broadcast %100 : vector<8x1xf32> to vector<8x256xf32>
    %102 = arith.subf %98, %101 : vector<8x256xf32>
    %103 = math.exp %102 : vector<8x256xf32>
    %cst_51 = arith.constant dense<0.000000e+00> : vector<8xf32>
    %104 = vector.multi_reduction <add>, %103, %cst_51 [1] : vector<8x256xf32> to vector<8xf32>
    %105 = vector.shape_cast %104 : vector<8xf32> to vector<8x1xf32>
    %106 = tpu.reciprocal %105 {approx = true} : vector<8x1xf32> -> vector<8x1xf32>
    %107 = vector.broadcast %106 : vector<8x1xf32> to vector<8x256xf32>
    %108 = arith.mulf %103, %107 : vector<8x256xf32>
    %109 = arith.truncf %108 : vector<8x256xf32> to vector<8x256xbf16>
    %cst_52 = arith.constant dense<0.000000e+00> : vector<8x8xf32>
    %110 = tpu.matmul %109, %95, %cst_52 {dimension_numbers = #tpu.dot_dimension_numbers<[1], [1], [0], [0], [0, 0, 1, 0], [], []>} : vector<8x256xbf16>, vector<8x256xbf16>, vector<8x8xf32> -> vector<8x8xf32>
    %111 = arith.truncf %110 : vector<8x8xf32> to vector<8x8xbf16>
    %c3_53 = arith.constant 3 : index
    %c0_54 = arith.constant 0 : index
    %c0_55 = arith.constant 0 : index
    %112 = vector.load %arg8[%c3_53, %c0_54, %c0_55] : memref<4x8x32xbf16, #tpu.memory_space<vmem>>, vector<1x8x32xbf16>
    %113 = vector.shape_cast %112 : vector<1x8x32xbf16> to vector<8x32xbf16>
    %cst_56 = arith.constant dense<0.000000e+00> : vector<8x32xf32>
    %114 = tpu.matmul %111, %113, %cst_56 {dimension_numbers = #tpu.dot_dimension_numbers<[1], [0], [0], [1], [0, 0, 1, 1], [], []>} : vector<8x8xbf16>, vector<8x32xbf16>, vector<8x32xf32> -> vector<8x32xf32>
    %115 = arith.addf %91, %114 : vector<8x32xf32>
    %c0_57 = arith.constant 0 : index
    %c0_58 = arith.constant 0 : index
    %116 = vector.load %arg3[%c0_57, %c0_58] : memref<8x32xf32, #tpu.memory_space<vmem>>, vector<8x32xf32>
    %117 = arith.addf %116, %115 : vector<8x32xf32>
    %c0_59 = arith.constant 0 : index
    %c0_60 = arith.constant 0 : index
    %118 = vector.load %arg9[%c0_59, %c0_60] : memref<1x32xf32, #tpu.memory_space<vmem>>, vector<1x32xf32>
    %119 = vector.broadcast %118 : vector<1x32xf32> to vector<8x32xf32>
    %120 = arith.addf %117, %119 : vector<8x32xf32>
    %c0_61 = arith.constant 0 : index
    %c0_62 = arith.constant 0 : index
    %121 = vector.load %arg10[%c0_61, %c0_62] : memref<1x32xf32, #tpu.memory_space<vmem>>, vector<1x32xf32>
    %c0_63 = arith.constant 0 : index
    %c0_64 = arith.constant 0 : index
    %122 = vector.load %arg11[%c0_63, %c0_64] : memref<1x32xf32, #tpu.memory_space<vmem>>, vector<1x32xf32>
    %cst_65 = arith.constant dense<0.000000e+00> : vector<8xf32>
    %123 = vector.multi_reduction <add>, %120, %cst_65 [1] : vector<8x32xf32> to vector<8xf32>
    %124 = vector.shape_cast %123 : vector<8xf32> to vector<8x1xf32>
    %cst_66 = arith.constant 3.200000e+01 : f32
    %125 = vector.broadcast %cst_66 : f32 to vector<8x1xf32>
    %126 = arith.divf %124, %125 : vector<8x1xf32>
    %127 = vector.broadcast %126 : vector<8x1xf32> to vector<8x32xf32>
    %128 = arith.subf %120, %127 : vector<8x32xf32>
    %129 = arith.mulf %128, %128 : vector<8x32xf32>
    %cst_67 = arith.constant dense<0.000000e+00> : vector<8xf32>
    %130 = vector.multi_reduction <add>, %129, %cst_67 [1] : vector<8x32xf32> to vector<8xf32>
    %131 = vector.shape_cast %130 : vector<8xf32> to vector<8x1xf32>
    %cst_68 = arith.constant 3.200000e+01 : f32
    %132 = vector.broadcast %cst_68 : f32 to vector<8x1xf32>
    %133 = arith.divf %131, %132 : vector<8x1xf32>
    %134 = vector.broadcast %126 : vector<8x1xf32> to vector<8x32xf32>
    %135 = arith.subf %120, %134 : vector<8x32xf32>
    %cst_69 = arith.constant 9.99999974E-6 : f32
    %136 = vector.broadcast %cst_69 : f32 to vector<8x1xf32>
    %137 = arith.addf %133, %136 : vector<8x1xf32>
    %138 = math.rsqrt %137 : vector<8x1xf32>
    %139 = vector.broadcast %138 : vector<8x1xf32> to vector<8x32xf32>
    %140 = arith.mulf %135, %139 : vector<8x32xf32>
    %141 = vector.broadcast %121 : vector<1x32xf32> to vector<8x32xf32>
    %142 = arith.mulf %140, %141 : vector<8x32xf32>
    %143 = vector.broadcast %122 : vector<1x32xf32> to vector<8x32xf32>
    %144 = arith.addf %142, %143 : vector<8x32xf32>
    %c8_i32 = arith.constant 8 : i32
    %145 = arith.muli %c0_i32, %c8_i32 : i32
    %146 = tpu.assume_multiple %145, 8 : i32
    %147 = arith.index_cast %146 : i32 to index
    %c0_70 = arith.constant 0 : index
    %148 = vector.load %arg22[%147, %c0_70] : memref<8x32xf32, #tpu.memory_space<vmem>>, vector<8x32xf32>
    tpu.vector_store %arg22[%147, %c0_70], %144 {strides = array<i32>} : memref<8x32xf32, #tpu.memory_space<vmem>>, vector<8x32xf32>,
    %c1_i32 = arith.constant 1 : i32
    %c0_71 = arith.constant 0 : index
    %c0_72 = arith.constant 0 : index
    %149 = vector.load %arg22[%c0_71, %c0_72] : memref<8x32xf32, #tpu.memory_space<vmem>>, vector<8x32xf32>
    %150 = arith.truncf %149 : vector<8x32xf32> to vector<8x32xbf16>
    %c0_73 = arith.constant 0 : index
    %c0_74 = arith.constant 0 : index
    %151 = vector.load %arg14[%c0_73, %c0_74] : memref<32x64xbf16, #tpu.memory_space<vmem>>, vector<32x64xbf16>
    %cst_75 = arith.constant dense<0.000000e+00> : vector<8x64xf32>
    %152 = tpu.matmul %150, %151, %cst_75 {dimension_numbers = #tpu.dot_dimension_numbers<[1], [0], [0], [1], [0, 0, 1, 1], [], []>} : vector<8x32xbf16>, vector<32x64xbf16>, vector<8x64xf32> -> vector<8x64xf32>
    %c0_76 = arith.constant 0 : index
    %c0_77 = arith.constant 0 : index
    %153 = vector.load %arg15[%c0_76, %c0_77] : memref<1x64xf32, #tpu.memory_space<vmem>>, vector<1x64xf32>
    %154 = vector.broadcast %153 : vector<1x64xf32> to vector<8x64xf32>
    %155 = arith.addf %152, %154 : vector<8x64xf32>
    %cst_78 = arith.constant 0.000000e+00 : f32
    %156 = vector.broadcast %cst_78 : f32 to vector<8x64xf32>
    %157 = arith.maximumf %155, %156 : vector<8x64xf32>
    %158 = arith.truncf %157 : vector<8x64xf32> to vector<8x64xbf16>
    %c0_79 = arith.constant 0 : index
    %c0_80 = arith.constant 0 : index
    %159 = vector.load %arg16[%c0_79, %c0_80] : memref<64x32xbf16, #tpu.memory_space<vmem>>, vector<64x32xbf16>
    %cst_81 = arith.constant dense<0.000000e+00> : vector<8x32xf32>
    %160 = tpu.matmul %158, %159, %cst_81 {dimension_numbers = #tpu.dot_dimension_numbers<[1], [0], [0], [1], [0, 0, 1, 1], [], []>} : vector<8x64xbf16>, vector<64x32xbf16>, vector<8x32xf32> -> vector<8x32xf32>
    %c0_82 = arith.constant 0 : index
    %c0_83 = arith.constant 0 : index
    %161 = vector.load %arg17[%c0_82, %c0_83] : memref<1x32xf32, #tpu.memory_space<vmem>>, vector<1x32xf32>
    %162 = vector.broadcast %161 : vector<1x32xf32> to vector<8x32xf32>
    %163 = arith.addf %160, %162 : vector<8x32xf32>
    %164 = arith.addf %149, %163 : vector<8x32xf32>
    %c0_84 = arith.constant 0 : index
    %c0_85 = arith.constant 0 : index
    %165 = vector.load %arg12[%c0_84, %c0_85] : memref<1x32xf32, #tpu.memory_space<vmem>>, vector<1x32xf32>
    %c0_86 = arith.constant 0 : index
    %c0_87 = arith.constant 0 : index
    %166 = vector.load %arg13[%c0_86, %c0_87] : memref<1x32xf32, #tpu.memory_space<vmem>>, vector<1x32xf32>
    %cst_88 = arith.constant dense<0.000000e+00> : vector<8xf32>
    %167 = vector.multi_reduction <add>, %164, %cst_88 [1] : vector<8x32xf32> to vector<8xf32>
    %168 = vector.shape_cast %167 : vector<8xf32> to vector<8x1xf32>
    %cst_89 = arith.constant 3.200000e+01 : f32
    %169 = vector.broadcast %cst_89 : f32 to vector<8x1xf32>
    %170 = arith.divf %168, %169 : vector<8x1xf32>
    %171 = vector.broadcast %170 : vector<8x1xf32> to vector<8x32xf32>
    %172 = arith.subf %164, %171 : vector<8x32xf32>
    %173 = arith.mulf %172, %172 : vector<8x32xf32>
    %cst_90 = arith.constant dense<0.000000e+00> : vector<8xf32>
    %174 = vector.multi_reduction <add>, %173, %cst_90 [1] : vector<8x32xf32> to vector<8xf32>
    %175 = vector.shape_cast %174 : vector<8xf32> to vector<8x1xf32>
    %cst_91 = arith.constant 3.200000e+01 : f32
    %176 = vector.broadcast %cst_91 : f32 to vector<8x1xf32>
    %177 = arith.divf %175, %176 : vector<8x1xf32>
    %178 = vector.broadcast %170 : vector<8x1xf32> to vector<8x32xf32>
    %179 = arith.subf %164, %178 : vector<8x32xf32>
    %cst_92 = arith.constant 9.99999974E-6 : f32
    %180 = vector.broadcast %cst_92 : f32 to vector<8x1xf32>
    %181 = arith.addf %177, %180 : vector<8x1xf32>
    %182 = math.rsqrt %181 : vector<8x1xf32>
    %183 = vector.broadcast %182 : vector<8x1xf32> to vector<8x32xf32>
    %184 = arith.mulf %179, %183 : vector<8x32xf32>
    %185 = vector.broadcast %165 : vector<1x32xf32> to vector<8x32xf32>
    %186 = arith.mulf %184, %185 : vector<8x32xf32>
    %187 = vector.broadcast %166 : vector<1x32xf32> to vector<8x32xf32>
    %188 = arith.addf %186, %187 : vector<8x32xf32>
    %189 = vector.shape_cast %188 : vector<8x32xf32> to vector<1x8x32xf32>
    %c0_93 = arith.constant 0 : index
    %c0_94 = arith.constant 0 : index
    %190 = vector.load %arg18[%c0_93, %c0_94] : memref<8x32xf32, #tpu.memory_space<vmem>>, vector<8x32xf32>
    %191 = vector.shape_cast %190 : vector<8x32xf32> to vector<1x8x32xf32>
    %192 = arith.mulf %189, %191 : vector<1x8x32xf32>
    %cst_95 = arith.constant dense<0.000000e+00> : vector<1x8xf32>
    %193 = vector.multi_reduction <add>, %192, %cst_95 [2] : vector<1x8x32xf32> to vector<1x8xf32>
    %c0_96 = arith.constant 0 : index
    %c0_97 = arith.constant 0 : index
    %194 = vector.load %arg19[%c0_96, %c0_97] : memref<1x8xf32, #tpu.memory_space<vmem>>, vector<1x8xf32>
    %195 = arith.addf %193, %194 : vector<1x8xf32>
    %c0_98 = arith.constant 0 : index
    %c0_99 = arith.constant 0 : index
    %c0_100 = arith.constant 0 : index
    %196 = vector.load %arg20[%c0_98, %c0_99, %c0_100] : memref<1x1x8xf32, #tpu.memory_space<vmem>>, vector<1x1x8xf32>
    %197 = vector.shape_cast %196 : vector<1x1x8xf32> to vector<1x8xf32>
    %198 = vector.shape_cast %195 : vector<1x8xf32> to vector<1x1x8xf32>
    tpu.vector_store %arg20[%c0_98, %c0_99, %c0_100], %198 {strides = array<i32>} : memref<1x1x8xf32, #tpu.memory_space<vmem>>, vector<1x1x8xf32>,
    return
  }
  func.func @transform_0(%arg0: i32) -> (i32, i32, i32) {
    %c0_i32 = arith.constant 0 : i32
    %c0_i32_0 = arith.constant 0 : i32
    %c0_i32_1 = arith.constant 0 : i32
    return %arg0, %c0_i32, %c0_i32_0 : i32, i32, i32
  }
  func.func @transform_1(%arg0: i32) -> (i32, i32, i32) {
    %c0_i32 = arith.constant 0 : i32
    %c0_i32_0 = arith.constant 0 : i32
    %c0_i32_1 = arith.constant 0 : i32
    %c0_i32_2 = arith.constant 0 : i32
    return %c0_i32, %c0_i32_0, %c0_i32_1 : i32, i32, i32
  }
  func.func @transform_2(%arg0: i32) -> (i32, i32) {
    %c0_i32 = arith.constant 0 : i32
    %c0_i32_0 = arith.constant 0 : i32
    %c0_i32_1 = arith.constant 0 : i32
    return %c0_i32, %c0_i32_0 : i32, i32
  }
  func.func @transform_3(%arg0: i32) -> (i32, i32) {
    %c0_i32 = arith.constant 0 : i32
    %c0_i32_0 = arith.constant 0 : i32
    %c0_i32_1 = arith.constant 0 : i32
    return %c0_i32, %c0_i32_0 : i32, i32
  }
  func.func @transform_4(%arg0: i32) -> (i32, i32) {
    %c0_i32 = arith.constant 0 : i32
    %c0_i32_0 = arith.constant 0 : i32
    %c0_i32_1 = arith.constant 0 : i32
    return %c0_i32, %c0_i32_0 : i32, i32
  }
  func.func @transform_5(%arg0: i32) -> (i32, i32) {
    %c0_i32 = arith.constant 0 : i32
    %c0_i32_0 = arith.constant 0 : i32
    %c0_i32_1 = arith.constant 0 : i32
    return %c0_i32, %c0_i32_0 : i32, i32
  }
  func.func @transform_6(%arg0: i32) -> (i32, i32) {
    %c0_i32 = arith.constant 0 : i32
    %c0_i32_0 = arith.constant 0 : i32
    %c0_i32_1 = arith.constant 0 : i32
    return %c0_i32, %c0_i32_0 : i32, i32
  }
  func.func @transform_7(%arg0: i32) -> (i32, i32, i32) {
    %c0_i32 = arith.constant 0 : i32
    %c0_i32_0 = arith.constant 0 : i32
    %c0_i32_1 = arith.constant 0 : i32
    %c0_i32_2 = arith.constant 0 : i32
    return %c0_i32, %c0_i32_0, %c0_i32_1 : i32, i32, i32
  }
  func.func @transform_8(%arg0: i32) -> (i32, i32) {
    %c0_i32 = arith.constant 0 : i32
    %c0_i32_0 = arith.constant 0 : i32
    %c0_i32_1 = arith.constant 0 : i32
    return %c0_i32, %c0_i32_0 : i32, i32
  }
  func.func @transform_9(%arg0: i32) -> (i32, i32) {
    %c0_i32 = arith.constant 0 : i32
    %c0_i32_0 = arith.constant 0 : i32
    %c0_i32_1 = arith.constant 0 : i32
    return %c0_i32, %c0_i32_0 : i32, i32
  }
  func.func @transform_10(%arg0: i32) -> (i32, i32) {
    %c0_i32 = arith.constant 0 : i32
    %c0_i32_0 = arith.constant 0 : i32
    %c0_i32_1 = arith.constant 0 : i32
    return %c0_i32, %c0_i32_0 : i32, i32
  }
  func.func @transform_11(%arg0: i32) -> (i32, i32) {
    %c0_i32 = arith.constant 0 : i32
    %c0_i32_0 = arith.constant 0 : i32
    %c0_i32_1 = arith.constant 0 : i32
    return %c0_i32, %c0_i32_0 : i32, i32
  }
  func.func @transform_12(%arg0: i32) -> (i32, i32) {
    %c0_i32 = arith.constant 0 : i32
    %c0_i32_0 = arith.constant 0 : i32
    %c0_i32_1 = arith.constant 0 : i32
    return %c0_i32, %c0_i32_0 : i32, i32
  }
  func.func @transform_13(%arg0: i32) -> (i32, i32) {
    %c0_i32 = arith.constant 0 : i32
    %c0_i32_0 = arith.constant 0 : i32
    %c0_i32_1 = arith.constant 0 : i32
    return %c0_i32, %c0_i32_0 : i32, i32
  }
  func.func @transform_14(%arg0: i32) -> (i32, i32) {
    %c0_i32 = arith.constant 0 : i32
    %c0_i32_0 = arith.constant 0 : i32
    %c0_i32_1 = arith.constant 0 : i32
    return %c0_i32, %c0_i32_0 : i32, i32
  }
  func.func @transform_15(%arg0: i32) -> (i32, i32) {
    %c0_i32 = arith.constant 0 : i32
    %c0_i32_0 = arith.constant 0 : i32
    %c0_i32_1 = arith.constant 0 : i32
    return %c0_i32, %c0_i32_0 : i32, i32
  }
  func.func @transform_16(%arg0: i32) -> (i32, i32) {
    %c0_i32 = arith.constant 0 : i32
    %c0_i32_0 = arith.constant 0 : i32
    %c0_i32_1 = arith.constant 0 : i32
    return %c0_i32, %c0_i32_0 : i32, i32
  }
  func.func @transform_17(%arg0: i32) -> (i32, i32) {
    %c0_i32 = arith.constant 0 : i32
    %c0_i32_0 = arith.constant 0 : i32
    %c0_i32_1 = arith.constant 0 : i32
    return %c0_i32, %c0_i32_0 : i32, i32
  }
  func.func @transform_18(%arg0: i32) -> (i32, i32) {
    %c0_i32 = arith.constant 0 : i32
    %c0_i32_0 = arith.constant 0 : i32
    %c0_i32_1 = arith.constant 0 : i32
    return %c0_i32, %c0_i32_0 : i32, i32
  }
  func.func @transform_19(%arg0: i32) -> (i32, i32, i32) {
    %c0_i32 = arith.constant 0 : i32
    %c0_i32_0 = arith.constant 0 : i32
    %c0_i32_1 = arith.constant 0 : i32
    return %arg0, %c0_i32, %c0_i32_0 : i32, i32, i32
  }
}

module attributes {stable_mosaic.version = 11 : i64} {
  func.func @mldecoder_kernel(%arg0: i32, %arg1: memref<1x32x256xbf16, #tpu.memory_space<vmem>>, %arg2: memref<4x8x8xbf16, #tpu.memory_space<vmem>>, %arg3: memref<8x32xf32, #tpu.memory_space<vmem>>, %arg4: memref<32x32xbf16, #tpu.memory_space<vmem>>, %arg5: memref<32x1xf32, #tpu.memory_space<vmem>>, %arg6: memref<64x32xbf16, #tpu.memory_space<vmem>>, %arg7: memref<64x1xf32, #tpu.memory_space<vmem>>, %arg8: memref<4x8x32xbf16, #tpu.memory_space<vmem>>, %arg9: memref<1x32xf32, #tpu.memory_space<vmem>>, %arg10: memref<1x32xf32, #tpu.memory_space<vmem>>, %arg11: memref<1x32xf32, #tpu.memory_space<vmem>>, %arg12: memref<1x32xf32, #tpu.memory_space<vmem>>, %arg13: memref<1x32xf32, #tpu.memory_space<vmem>>, %arg14: memref<32x64xbf16, #tpu.memory_space<vmem>>, %arg15: memref<1x64xf32, #tpu.memory_space<vmem>>, %arg16: memref<64x32xbf16, #tpu.memory_space<vmem>>, %arg17: memref<1x32xf32, #tpu.memory_space<vmem>>, %arg18: memref<8x32xf32, #tpu.memory_space<vmem>>, %arg19: memref<1x8xf32, #tpu.memory_space<vmem>>, %arg20: memref<1x1x8xf32, #tpu.memory_space<vmem>>, %arg21: memref<64x256xbf16, #tpu.memory_space<vmem>>, %arg22: memref<8x32xf32, #tpu.memory_space<vmem>>) attributes {dimension_semantics = [#tpu.dimension_semantics<parallel>], iteration_bounds = array<i64: 2>, scalar_prefetch = 0 : i64, scratch_operands = 2 : i64, tpu.core_type = #tpu.core_type<tc>, window_params = [{transform_indices = @transform_0, window_bounds = array<i64: 1, 32, 256>}, {pipeline_mode = #tpu.pipeline_mode<synchronous>, transform_indices = @transform_1, window_bounds = array<i64: 4, 8, 8>}, {pipeline_mode = #tpu.pipeline_mode<synchronous>, transform_indices = @transform_2, window_bounds = array<i64: 8, 32>}, {pipeline_mode = #tpu.pipeline_mode<synchronous>, transform_indices = @transform_3, window_bounds = array<i64: 32, 32>}, {pipeline_mode = #tpu.pipeline_mode<synchronous>, transform_indices = @transform_4, window_bounds = array<i64: 32, 1>}, {pipeline_mode = #tpu.pipeline_mode<synchronous>, transform_indices = @transform_5, window_bounds = array<i64: 64, 32>}, {pipeline_mode = #tpu.pipeline_mode<synchronous>, transform_indices = @transform_6, window_bounds = array<i64: 64, 1>}, {pipeline_mode = #tpu.pipeline_mode<synchronous>, transform_indices = @transform_7, window_bounds = array<i64: 4, 8, 32>}, {pipeline_mode = #tpu.pipeline_mode<synchronous>, transform_indices = @transform_8, window_bounds = array<i64: 1, 32>}, {pipeline_mode = #tpu.pipeline_mode<synchronous>, transform_indices = @transform_9, window_bounds = array<i64: 1, 32>}, {pipeline_mode = #tpu.pipeline_mode<synchronous>, transform_indices = @transform_10, window_bounds = array<i64: 1, 32>}, {pipeline_mode = #tpu.pipeline_mode<synchronous>, transform_indices = @transform_11, window_bounds = array<i64: 1, 32>}, {pipeline_mode = #tpu.pipeline_mode<synchronous>, transform_indices = @transform_12, window_bounds = array<i64: 1, 32>}, {pipeline_mode = #tpu.pipeline_mode<synchronous>, transform_indices = @transform_13, window_bounds = array<i64: 32, 64>}, {pipeline_mode = #tpu.pipeline_mode<synchronous>, transform_indices = @transform_14, window_bounds = array<i64: 1, 64>}, {pipeline_mode = #tpu.pipeline_mode<synchronous>, transform_indices = @transform_15, window_bounds = array<i64: 64, 32>}, {pipeline_mode = #tpu.pipeline_mode<synchronous>, transform_indices = @transform_16, window_bounds = array<i64: 1, 32>}, {pipeline_mode = #tpu.pipeline_mode<synchronous>, transform_indices = @transform_17, window_bounds = array<i64: 8, 32>}, {pipeline_mode = #tpu.pipeline_mode<synchronous>, transform_indices = @transform_18, window_bounds = array<i64: 1, 8>}, {transform_indices = @transform_19, window_bounds = array<i64: 1, 1, 8>}]} {
    %c0 = arith.constant 0 : index
    %c0_0 = arith.constant 0 : index
    %c0_1 = arith.constant 0 : index
    %0 = vector.load %arg1[%c0, %c0_0, %c0_1] : memref<1x32x256xbf16, #tpu.memory_space<vmem>>, vector<1x32x256xbf16>
    %1 = vector.shape_cast %0 : vector<1x32x256xbf16> to vector<32x256xbf16>
    %c0_2 = arith.constant 0 : index
    %c0_3 = arith.constant 0 : index
    %2 = vector.load %arg4[%c0_2, %c0_3] : memref<32x32xbf16, #tpu.memory_space<vmem>>, vector<32x32xbf16>
    %cst = arith.constant dense<0.000000e+00> : vector<32x256xf32>
    %3 = tpu.matmul %2, %1, %cst {dimension_numbers = #tpu.dot_dimension_numbers<[1], [0], [0], [1], [0, 0, 1, 1], [], []>} : vector<32x32xbf16>, vector<32x256xbf16>, vector<32x256xf32> -> vector<32x256xf32>
    %c0_4 = arith.constant 0 : index
    %c0_5 = arith.constant 0 : index
    %4 = vector.load %arg5[%c0_4, %c0_5] : memref<32x1xf32, #tpu.memory_space<vmem>>, vector<32x1xf32>
    %5 = vector.broadcast %4 : vector<32x1xf32> to vector<32x256xf32>
    %6 = arith.addf %3, %5 : vector<32x256xf32>
    %cst_6 = arith.constant 0.000000e+00 : f32
    %7 = vector.broadcast %cst_6 : f32 to vector<32x256xf32>
    %8 = arith.maximumf %6, %7 : vector<32x256xf32>
    %9 = arith.truncf %8 : vector<32x256xf32> to vector<32x256xbf16>
    %c0_7 = arith.constant 0 : index
    %c0_8 = arith.constant 0 : index
    %10 = vector.load %arg6[%c0_7, %c0_8] : memref<64x32xbf16, #tpu.memory_space<vmem>>, vector<64x32xbf16>
    %cst_9 = arith.constant dense<0.000000e+00> : vector<64x256xf32>
    %11 = tpu.matmul %10, %9, %cst_9 {dimension_numbers = #tpu.dot_dimension_numbers<[1], [0], [0], [1], [0, 0, 1, 1], [], []>} : vector<64x32xbf16>, vector<32x256xbf16>, vector<64x256xf32> -> vector<64x256xf32>
    %c0_10 = arith.constant 0 : index
    %c0_11 = arith.constant 0 : index
    %12 = vector.load %arg7[%c0_10, %c0_11] : memref<64x1xf32, #tpu.memory_space<vmem>>, vector<64x1xf32>
    %13 = vector.broadcast %12 : vector<64x1xf32> to vector<64x256xf32>
    %14 = arith.addf %11, %13 : vector<64x256xf32>
    %15 = arith.truncf %14 : vector<64x256xf32> to vector<64x256xbf16>
    %c0_12 = arith.constant 0 : index
    %c0_13 = arith.constant 0 : index
    %16 = vector.load %arg21[%c0_12, %c0_13] : memref<64x256xbf16, #tpu.memory_space<vmem>>, vector<64x256xbf16>
    tpu.vector_store %arg21[%c0_12, %c0_13], %15 {strides = array<i32>} : memref<64x256xbf16, #tpu.memory_space<vmem>>, vector<64x256xbf16>,
    %c0_i32 = arith.constant 0 : i32
    %c256_i32 = arith.constant 256 : i32
    %17 = arith.muli %c0_i32, %c256_i32 : i32
    %18 = tpu.assume_multiple %17, 256 : i32
    %cst_14 = arith.constant 0.000000e+00 : f32
    %19 = vector.broadcast %cst_14 : f32 to vector<8x32xf32>
    %c0_15 = arith.constant 0 : index
    %20 = arith.index_cast %18 : i32 to index
    %21 = vector.load %arg21[%c0_15, %20] : memref<64x256xbf16, #tpu.memory_space<vmem>>, vector<8x256xbf16>
    %c32 = arith.constant 32 : index
    %22 = arith.index_cast %18 : i32 to index
    %23 = vector.load %arg21[%c32, %22] : memref<64x256xbf16, #tpu.memory_space<vmem>>, vector<8x256xbf16>
    %c0_16 = arith.constant 0 : index
    %c0_17 = arith.constant 0 : index
    %c0_18 = arith.constant 0 : index
    %24 = vector.load %arg2[%c0_16, %c0_17, %c0_18] : memref<4x8x8xbf16, #tpu.memory_space<vmem>>, vector<1x8x8xbf16>
    %25 = vector.shape_cast %24 : vector<1x8x8xbf16> to vector<8x8xbf16>
    %cst_19 = arith.constant dense<0.000000e+00> : vector<8x256xf32>
    %26 = tpu.matmul %25, %21, %cst_19 {dimension_numbers = #tpu.dot_dimension_numbers<[1], [0], [0], [1], [0, 0, 1, 1], [], []>} : vector<8x8xbf16>, vector<8x256xbf16>, vector<8x256xf32> -> vector<8x256xf32>
    %cst_20 = arith.constant dense<0xFF800000> : vector<8xf32>
    %27 = vector.multi_reduction <maximumf>, %26, %cst_20 [1] : vector<8x256xf32> to vector<8xf32>
    %28 = vector.shape_cast %27 : vector<8xf32> to vector<8x1xf32>
    %29 = vector.broadcast %28 : vector<8x1xf32> to vector<8x256xf32>
    %30 = arith.subf %26, %29 : vector<8x256xf32>
    %31 = math.exp %30 : vector<8x256xf32>
    %cst_21 = arith.constant dense<0.000000e+00> : vector<8xf32>
    %32 = vector.multi_reduction <add>, %31, %cst_21 [1] : vector<8x256xf32> to vector<8xf32>
    %33 = vector.shape_cast %32 : vector<8xf32> to vector<8x1xf32>
    %34 = tpu.reciprocal %33 {approx = true} : vector<8x1xf32> -> vector<8x1xf32>
    %35 = vector.broadcast %34 : vector<8x1xf32> to vector<8x256xf32>
    %36 = arith.mulf %31, %35 : vector<8x256xf32>
    %37 = arith.truncf %36 : vector<8x256xf32> to vector<8x256xbf16>
    %cst_22 = arith.constant dense<0.000000e+00> : vector<8x8xf32>
    %38 = tpu.matmul %37, %23, %cst_22 {dimension_numbers = #tpu.dot_dimension_numbers<[1], [1], [0], [0], [0, 0, 1, 0], [], []>} : vector<8x256xbf16>, vector<8x256xbf16>, vector<8x8xf32> -> vector<8x8xf32>
    %39 = arith.truncf %38 : vector<8x8xf32> to vector<8x8xbf16>
    %c0_23 = arith.constant 0 : index
    %c0_24 = arith.constant 0 : index
    %c0_25 = arith.constant 0 : index
    %40 = vector.load %arg8[%c0_23, %c0_24, %c0_25] : memref<4x8x32xbf16, #tpu.memory_space<vmem>>, vector<1x8x32xbf16>
    %41 = vector.shape_cast %40 : vector<1x8x32xbf16> to vector<8x32xbf16>
    %cst_26 = arith.constant dense<0.000000e+00> : vector<8x32xf32>
    %42 = tpu.matmul %39, %41, %cst_26 {dimension_numbers = #tpu.dot_dimension_numbers<[1], [0], [0], [1], [0, 0, 1, 1], [], []>} : vector<8x8xbf16>, vector<8x32xbf16>, vector<8x32xf32> -> vector<8x32xf32>
    %43 = arith.addf %19, %42 : vector<8x32xf32>
    %c8 = arith.constant 8 : index
    %44 = arith.index_cast %18 : i32 to index
    %45 = vector.load %arg21[%c8, %44] : memref<64x256xbf16, #tpu.memory_space<vmem>>, vector<8x256xbf16>
    %c40 = arith.constant 40 : index
    %46 = arith.index_cast %18 : i32 to index
    %47 = vector.load %arg21[%c40, %46] : memref<64x256xbf16, #tpu.memory_space<vmem>>, vector<8x256xbf16>
    %c1 = arith.constant 1 : index
    %c0_27 = arith.constant 0 : index
    %c0_28 = arith.constant 0 : index
    %48 = vector.load %arg2[%c1, %c0_27, %c0_28] : memref<4x8x8xbf16, #tpu.memory_space<vmem>>, vector<1x8x8xbf16>
    %49 = vector.shape_cast %48 : vector<1x8x8xbf16> to vector<8x8xbf16>
    %cst_29 = arith.constant dense<0.000000e+00> : vector<8x256xf32>
    %50 = tpu.matmul %49, %45, %cst_29 {dimension_numbers = #tpu.dot_dimension_numbers<[1], [0], [0], [1], [0, 0, 1, 1], [], []>} : vector<8x8xbf16>, vector<8x256xbf16>, vector<8x256xf32> -> vector<8x256xf32>
    %cst_30 = arith.constant dense<0xFF800000> : vector<8xf32>
    %51 = vector.multi_reduction <maximumf>, %50, %cst_30 [1] : vector<8x256xf32> to vector<8xf32>
    %52 = vector.shape_cast %51 : vector<8xf32> to vector<8x1xf32>
    %53 = vector.broadcast %52 : vector<8x1xf32> to vector<8x256xf32>
    %54 = arith.subf %50, %53 : vector<8x256xf32>
    %55 = math.exp %54 : vector<8x256xf32>
    %cst_31 = arith.constant dense<0.000000e+00> : vector<8xf32>
    %56 = vector.multi_reduction <add>, %55, %cst_31 [1] : vector<8x256xf32> to vector<8xf32>
    %57 = vector.shape_cast %56 : vector<8xf32> to vector<8x1xf32>
    %58 = tpu.reciprocal %57 {approx = true} : vector<8x1xf32> -> vector<8x1xf32>
    %59 = vector.broadcast %58 : vector<8x1xf32> to vector<8x256xf32>
    %60 = arith.mulf %55, %59 : vector<8x256xf32>
    %61 = arith.truncf %60 : vector<8x256xf32> to vector<8x256xbf16>
    %cst_32 = arith.constant dense<0.000000e+00> : vector<8x8xf32>
    %62 = tpu.matmul %61, %47, %cst_32 {dimension_numbers = #tpu.dot_dimension_numbers<[1], [1], [0], [0], [0, 0, 1, 0], [], []>} : vector<8x256xbf16>, vector<8x256xbf16>, vector<8x8xf32> -> vector<8x8xf32>
    %63 = arith.truncf %62 : vector<8x8xf32> to vector<8x8xbf16>
    %c1_33 = arith.constant 1 : index
    %c0_34 = arith.constant 0 : index
    %c0_35 = arith.constant 0 : index
    %64 = vector.load %arg8[%c1_33, %c0_34, %c0_35] : memref<4x8x32xbf16, #tpu.memory_space<vmem>>, vector<1x8x32xbf16>
    %65 = vector.shape_cast %64 : vector<1x8x32xbf16> to vector<8x32xbf16>
    %cst_36 = arith.constant dense<0.000000e+00> : vector<8x32xf32>
    %66 = tpu.matmul %63, %65, %cst_36 {dimension_numbers = #tpu.dot_dimension_numbers<[1], [0], [0], [1], [0, 0, 1, 1], [], []>} : vector<8x8xbf16>, vector<8x32xbf16>, vector<8x32xf32> -> vector<8x32xf32>
    %67 = arith.addf %43, %66 : vector<8x32xf32>
    %c16 = arith.constant 16 : index
    %68 = arith.index_cast %18 : i32 to index
    %69 = vector.load %arg21[%c16, %68] : memref<64x256xbf16, #tpu.memory_space<vmem>>, vector<8x256xbf16>
    %c48 = arith.constant 48 : index
    %70 = arith.index_cast %18 : i32 to index
    %71 = vector.load %arg21[%c48, %70] : memref<64x256xbf16, #tpu.memory_space<vmem>>, vector<8x256xbf16>
    %c2 = arith.constant 2 : index
    %c0_37 = arith.constant 0 : index
    %c0_38 = arith.constant 0 : index
    %72 = vector.load %arg2[%c2, %c0_37, %c0_38] : memref<4x8x8xbf16, #tpu.memory_space<vmem>>, vector<1x8x8xbf16>
    %73 = vector.shape_cast %72 : vector<1x8x8xbf16> to vector<8x8xbf16>
    %cst_39 = arith.constant dense<0.000000e+00> : vector<8x256xf32>
    %74 = tpu.matmul %73, %69, %cst_39 {dimension_numbers = #tpu.dot_dimension_numbers<[1], [0], [0], [1], [0, 0, 1, 1], [], []>} : vector<8x8xbf16>, vector<8x256xbf16>, vector<8x256xf32> -> vector<8x256xf32>
    %cst_40 = arith.constant dense<0xFF800000> : vector<8xf32>
    %75 = vector.multi_reduction <maximumf>, %74, %cst_40 [1] : vector<8x256xf32> to vector<8xf32>
    %76 = vector.shape_cast %75 : vector<8xf32> to vector<8x1xf32>
    %77 = vector.broadcast %76 : vector<8x1xf32> to vector<8x256xf32>
    %78 = arith.subf %74, %77 : vector<8x256xf32>
    %79 = math.exp %78 : vector<8x256xf32>
    %cst_41 = arith.constant dense<0.000000e+00> : vector<8xf32>
    %80 = vector.multi_reduction <add>, %79, %cst_41 [1] : vector<8x256xf32> to vector<8xf32>
    %81 = vector.shape_cast %80 : vector<8xf32> to vector<8x1xf32>
    %82 = tpu.reciprocal %81 {approx = true} : vector<8x1xf32> -> vector<8x1xf32>
    %83 = vector.broadcast %82 : vector<8x1xf32> to vector<8x256xf32>
    %84 = arith.mulf %79, %83 : vector<8x256xf32>
    %85 = arith.truncf %84 : vector<8x256xf32> to vector<8x256xbf16>
    %cst_42 = arith.constant dense<0.000000e+00> : vector<8x8xf32>
    %86 = tpu.matmul %85, %71, %cst_42 {dimension_numbers = #tpu.dot_dimension_numbers<[1], [1], [0], [0], [0, 0, 1, 0], [], []>} : vector<8x256xbf16>, vector<8x256xbf16>, vector<8x8xf32> -> vector<8x8xf32>
    %87 = arith.truncf %86 : vector<8x8xf32> to vector<8x8xbf16>
    %c2_43 = arith.constant 2 : index
    %c0_44 = arith.constant 0 : index
    %c0_45 = arith.constant 0 : index
    %88 = vector.load %arg8[%c2_43, %c0_44, %c0_45] : memref<4x8x32xbf16, #tpu.memory_space<vmem>>, vector<1x8x32xbf16>
    %89 = vector.shape_cast %88 : vector<1x8x32xbf16> to vector<8x32xbf16>
    %cst_46 = arith.constant dense<0.000000e+00> : vector<8x32xf32>
    %90 = tpu.matmul %87, %89, %cst_46 {dimension_numbers = #tpu.dot_dimension_numbers<[1], [0], [0], [1], [0, 0, 1, 1], [], []>} : vector<8x8xbf16>, vector<8x32xbf16>, vector<8x32xf32> -> vector<8x32xf32>
    %91 = arith.addf %67, %90 : vector<8x32xf32>
    %c24 = arith.constant 24 : index
    %92 = arith.index_cast %18 : i32 to index
    %93 = vector.load %arg21[%c24, %92] : memref<64x256xbf16, #tpu.memory_space<vmem>>, vector<8x256xbf16>
    %c56 = arith.constant 56 : index
    %94 = arith.index_cast %18 : i32 to index
    %95 = vector.load %arg21[%c56, %94] : memref<64x256xbf16, #tpu.memory_space<vmem>>, vector<8x256xbf16>
    %c3 = arith.constant 3 : index
    %c0_47 = arith.constant 0 : index
    %c0_48 = arith.constant 0 : index
    %96 = vector.load %arg2[%c3, %c0_47, %c0_48] : memref<4x8x8xbf16, #tpu.memory_space<vmem>>, vector<1x8x8xbf16>
    %97 = vector.shape_cast %96 : vector<1x8x8xbf16> to vector<8x8xbf16>
    %cst_49 = arith.constant dense<0.000000e+00> : vector<8x256xf32>
    %98 = tpu.matmul %97, %93, %cst_49 {dimension_numbers = #tpu.dot_dimension_numbers<[1], [0], [0], [1], [0, 0, 1, 1], [], []>} : vector<8x8xbf16>, vector<8x256xbf16>, vector<8x256xf32> -> vector<8x256xf32>
    %cst_50 = arith.constant dense<0xFF800000> : vector<8xf32>
    %99 = vector.multi_reduction <maximumf>, %98, %cst_50 [1] : vector<8x256xf32> to vector<8xf32>
    %100 = vector.shape_cast %99 : vector<8xf32> to vector<8x1xf32>
    %101 = vector.broadcast %100 : vector<8x1xf32> to vector<8x256xf32>
    %102 = arith.subf %98, %101 : vector<8x256xf32>
    %103 = math.exp %102 : vector<8x256xf32>
    %cst_51 = arith.constant dense<0.000000e+00> : vector<8xf32>
    %104 = vector.multi_reduction <add>, %103, %cst_51 [1] : vector<8x256xf32> to vector<8xf32>
    %105 = vector.shape_cast %104 : vector<8xf32> to vector<8x1xf32>
    %106 = tpu.reciprocal %105 {approx = true} : vector<8x1xf32> -> vector<8x1xf32>
    %107 = vector.broadcast %106 : vector<8x1xf32> to vector<8x256xf32>
    %108 = arith.mulf %103, %107 : vector<8x256xf32>
    %109 = arith.truncf %108 : vector<8x256xf32> to vector<8x256xbf16>
    %cst_52 = arith.constant dense<0.000000e+00> : vector<8x8xf32>
    %110 = tpu.matmul %109, %95, %cst_52 {dimension_numbers = #tpu.dot_dimension_numbers<[1], [1], [0], [0], [0, 0, 1, 0], [], []>} : vector<8x256xbf16>, vector<8x256xbf16>, vector<8x8xf32> -> vector<8x8xf32>
    %111 = arith.truncf %110 : vector<8x8xf32> to vector<8x8xbf16>
    %c3_53 = arith.constant 3 : index
    %c0_54 = arith.constant 0 : index
    %c0_55 = arith.constant 0 : index
    %112 = vector.load %arg8[%c3_53, %c0_54, %c0_55] : memref<4x8x32xbf16, #tpu.memory_space<vmem>>, vector<1x8x32xbf16>
    %113 = vector.shape_cast %112 : vector<1x8x32xbf16> to vector<8x32xbf16>
    %cst_56 = arith.constant dense<0.000000e+00> : vector<8x32xf32>
    %114 = tpu.matmul %111, %113, %cst_56 {dimension_numbers = #tpu.dot_dimension_numbers<[1], [0], [0], [1], [0, 0, 1, 1], [], []>} : vector<8x8xbf16>, vector<8x32xbf16>, vector<8x32xf32> -> vector<8x32xf32>
    %115 = arith.addf %91, %114 : vector<8x32xf32>
    %c0_57 = arith.constant 0 : index
    %c0_58 = arith.constant 0 : index
    %116 = vector.load %arg3[%c0_57, %c0_58] : memref<8x32xf32, #tpu.memory_space<vmem>>, vector<8x32xf32>
    %117 = arith.addf %116, %115 : vector<8x32xf32>
    %c0_59 = arith.constant 0 : index
    %c0_60 = arith.constant 0 : index
    %118 = vector.load %arg9[%c0_59, %c0_60] : memref<1x32xf32, #tpu.memory_space<vmem>>, vector<1x32xf32>
    %119 = vector.broadcast %118 : vector<1x32xf32> to vector<8x32xf32>
    %120 = arith.addf %117, %119 : vector<8x32xf32>
    %c0_61 = arith.constant 0 : index
    %c0_62 = arith.constant 0 : index
    %121 = vector.load %arg10[%c0_61, %c0_62] : memref<1x32xf32, #tpu.memory_space<vmem>>, vector<1x32xf32>
    %c0_63 = arith.constant 0 : index
    %c0_64 = arith.constant 0 : index
    %122 = vector.load %arg11[%c0_63, %c0_64] : memref<1x32xf32, #tpu.memory_space<vmem>>, vector<1x32xf32>
    %cst_65 = arith.constant dense<0.000000e+00> : vector<8xf32>
    %123 = vector.multi_reduction <add>, %120, %cst_65 [1] : vector<8x32xf32> to vector<8xf32>
    %124 = vector.shape_cast %123 : vector<8xf32> to vector<8x1xf32>
    %cst_66 = arith.constant 3.200000e+01 : f32
    %125 = vector.broadcast %cst_66 : f32 to vector<8x1xf32>
    %126 = arith.divf %124, %125 : vector<8x1xf32>
    %127 = vector.broadcast %126 : vector<8x1xf32> to vector<8x32xf32>
    %128 = arith.subf %120, %127 : vector<8x32xf32>
    %129 = arith.mulf %128, %128 : vector<8x32xf32>
    %cst_67 = arith.constant dense<0.000000e+00> : vector<8xf32>
    %130 = vector.multi_reduction <add>, %129, %cst_67 [1] : vector<8x32xf32> to vector<8xf32>
    %131 = vector.shape_cast %130 : vector<8xf32> to vector<8x1xf32>
    %cst_68 = arith.constant 3.200000e+01 : f32
    %132 = vector.broadcast %cst_68 : f32 to vector<8x1xf32>
    %133 = arith.divf %131, %132 : vector<8x1xf32>
    %134 = vector.broadcast %126 : vector<8x1xf32> to vector<8x32xf32>
    %135 = arith.subf %120, %134 : vector<8x32xf32>
    %cst_69 = arith.constant 9.99999974E-6 : f32
    %136 = vector.broadcast %cst_69 : f32 to vector<8x1xf32>
    %137 = arith.addf %133, %136 : vector<8x1xf32>
    %138 = math.rsqrt %137 : vector<8x1xf32>
    %139 = vector.broadcast %138 : vector<8x1xf32> to vector<8x32xf32>
    %140 = arith.mulf %135, %139 : vector<8x32xf32>
    %141 = vector.broadcast %121 : vector<1x32xf32> to vector<8x32xf32>
    %142 = arith.mulf %140, %141 : vector<8x32xf32>
    %143 = vector.broadcast %122 : vector<1x32xf32> to vector<8x32xf32>
    %144 = arith.addf %142, %143 : vector<8x32xf32>
    %c8_i32 = arith.constant 8 : i32
    %145 = arith.muli %c0_i32, %c8_i32 : i32
    %146 = tpu.assume_multiple %145, 8 : i32
    %147 = arith.index_cast %146 : i32 to index
    %c0_70 = arith.constant 0 : index
    %148 = vector.load %arg22[%147, %c0_70] : memref<8x32xf32, #tpu.memory_space<vmem>>, vector<8x32xf32>
    tpu.vector_store %arg22[%147, %c0_70], %144 {strides = array<i32>} : memref<8x32xf32, #tpu.memory_space<vmem>>, vector<8x32xf32>,
    %c1_i32 = arith.constant 1 : i32
    %c0_71 = arith.constant 0 : index
    %c0_72 = arith.constant 0 : index
    %149 = vector.load %arg22[%c0_71, %c0_72] : memref<8x32xf32, #tpu.memory_space<vmem>>, vector<8x32xf32>
    %150 = arith.truncf %149 : vector<8x32xf32> to vector<8x32xbf16>
    %c0_73 = arith.constant 0 : index
    %c0_74 = arith.constant 0 : index
    %151 = vector.load %arg14[%c0_73, %c0_74] : memref<32x64xbf16, #tpu.memory_space<vmem>>, vector<32x64xbf16>
    %cst_75 = arith.constant dense<0.000000e+00> : vector<8x64xf32>
    %152 = tpu.matmul %150, %151, %cst_75 {dimension_numbers = #tpu.dot_dimension_numbers<[1], [0], [0], [1], [0, 0, 1, 1], [], []>} : vector<8x32xbf16>, vector<32x64xbf16>, vector<8x64xf32> -> vector<8x64xf32>
    %c0_76 = arith.constant 0 : index
    %c0_77 = arith.constant 0 : index
    %153 = vector.load %arg15[%c0_76, %c0_77] : memref<1x64xf32, #tpu.memory_space<vmem>>, vector<1x64xf32>
    %154 = vector.broadcast %153 : vector<1x64xf32> to vector<8x64xf32>
    %155 = arith.addf %152, %154 : vector<8x64xf32>
    %cst_78 = arith.constant 0.000000e+00 : f32
    %156 = vector.broadcast %cst_78 : f32 to vector<8x64xf32>
    %157 = arith.maximumf %155, %156 : vector<8x64xf32>
    %158 = arith.truncf %157 : vector<8x64xf32> to vector<8x64xbf16>
    %c0_79 = arith.constant 0 : index
    %c0_80 = arith.constant 0 : index
    %159 = vector.load %arg16[%c0_79, %c0_80] : memref<64x32xbf16, #tpu.memory_space<vmem>>, vector<64x32xbf16>
    %cst_81 = arith.constant dense<0.000000e+00> : vector<8x32xf32>
    %160 = tpu.matmul %158, %159, %cst_81 {dimension_numbers = #tpu.dot_dimension_numbers<[1], [0], [0], [1], [0, 0, 1, 1], [], []>} : vector<8x64xbf16>, vector<64x32xbf16>, vector<8x32xf32> -> vector<8x32xf32>
    %c0_82 = arith.constant 0 : index
    %c0_83 = arith.constant 0 : index
    %161 = vector.load %arg17[%c0_82, %c0_83] : memref<1x32xf32, #tpu.memory_space<vmem>>, vector<1x32xf32>
    %162 = vector.broadcast %161 : vector<1x32xf32> to vector<8x32xf32>
    %163 = arith.addf %160, %162 : vector<8x32xf32>
    %164 = arith.addf %149, %163 : vector<8x32xf32>
    %c0_84 = arith.constant 0 : index
    %c0_85 = arith.constant 0 : index
    %165 = vector.load %arg12[%c0_84, %c0_85] : memref<1x32xf32, #tpu.memory_space<vmem>>, vector<1x32xf32>
    %c0_86 = arith.constant 0 : index
    %c0_87 = arith.constant 0 : index
    %166 = vector.load %arg13[%c0_86, %c0_87] : memref<1x32xf32, #tpu.memory_space<vmem>>, vector<1x32xf32>
    %cst_88 = arith.constant dense<0.000000e+00> : vector<8xf32>
    %167 = vector.multi_reduction <add>, %164, %cst_88 [1] : vector<8x32xf32> to vector<8xf32>
    %168 = vector.shape_cast %167 : vector<8xf32> to vector<8x1xf32>
    %cst_89 = arith.constant 3.200000e+01 : f32
    %169 = vector.broadcast %cst_89 : f32 to vector<8x1xf32>
    %170 = arith.divf %168, %169 : vector<8x1xf32>
    %171 = vector.broadcast %170 : vector<8x1xf32> to vector<8x32xf32>
    %172 = arith.subf %164, %171 : vector<8x32xf32>
    %173 = arith.mulf %172, %172 : vector<8x32xf32>
    %cst_90 = arith.constant dense<0.000000e+00> : vector<8xf32>
    %174 = vector.multi_reduction <add>, %173, %cst_90 [1] : vector<8x32xf32> to vector<8xf32>
    %175 = vector.shape_cast %174 : vector<8xf32> to vector<8x1xf32>
    %cst_91 = arith.constant 3.200000e+01 : f32
    %176 = vector.broadcast %cst_91 : f32 to vector<8x1xf32>
    %177 = arith.divf %175, %176 : vector<8x1xf32>
    %178 = vector.broadcast %170 : vector<8x1xf32> to vector<8x32xf32>
    %179 = arith.subf %164, %178 : vector<8x32xf32>
    %cst_92 = arith.constant 9.99999974E-6 : f32
    %180 = vector.broadcast %cst_92 : f32 to vector<8x1xf32>
    %181 = arith.addf %177, %180 : vector<8x1xf32>
    %182 = math.rsqrt %181 : vector<8x1xf32>
    %183 = vector.broadcast %182 : vector<8x1xf32> to vector<8x32xf32>
    %184 = arith.mulf %179, %183 : vector<8x32xf32>
    %185 = vector.broadcast %165 : vector<1x32xf32> to vector<8x32xf32>
    %186 = arith.mulf %184, %185 : vector<8x32xf32>
    %187 = vector.broadcast %166 : vector<1x32xf32> to vector<8x32xf32>
    %188 = arith.addf %186, %187 : vector<8x32xf32>
    %189 = vector.shape_cast %188 : vector<8x32xf32> to vector<1x8x32xf32>
    %c0_93 = arith.constant 0 : index
    %c0_94 = arith.constant 0 : index
    %190 = vector.load %arg18[%c0_93, %c0_94] : memref<8x32xf32, #tpu.memory_space<vmem>>, vector<8x32xf32>
    %191 = vector.shape_cast %190 : vector<8x32xf32> to vector<1x8x32xf32>
    %192 = arith.mulf %189, %191 : vector<1x8x32xf32>
    %cst_95 = arith.constant dense<0.000000e+00> : vector<1x8xf32>
    %193 = vector.multi_reduction <add>, %192, %cst_95 [2] : vector<1x8x32xf32> to vector<1x8xf32>
    %c0_96 = arith.constant 0 : index
    %c0_97 = arith.constant 0 : index
    %194 = vector.load %arg19[%c0_96, %c0_97] : memref<1x8xf32, #tpu.memory_space<vmem>>, vector<1x8xf32>
    %195 = arith.addf %193, %194 : vector<1x8xf32>
    %c0_98 = arith.constant 0 : index
    %c0_99 = arith.constant 0 : index
    %c0_100 = arith.constant 0 : index
    %196 = vector.load %arg20[%c0_98, %c0_99, %c0_100] : memref<1x1x8xf32, #tpu.memory_space<vmem>>, vector<1x1x8xf32>
    %197 = vector.shape_cast %196 : vector<1x1x8xf32> to vector<1x8xf32>
    %198 = vector.shape_cast %195 : vector<1x8xf32> to vector<1x1x8xf32>
    tpu.vector_store %arg20[%c0_98, %c0_99, %c0_100], %198 {strides = array<i32>} : memref<1x1x8xf32, #tpu.memory_space<vmem>>, vector<1x1x8xf32>,
    return
  }
  func.func @transform_0(%arg0: i32) -> (i32, i32, i32) {
    %c0_i32 = arith.constant 0 : i32
    %c0_i32_0 = arith.constant 0 : i32
    %c0_i32_1 = arith.constant 0 : i32
    return %arg0, %c0_i32, %c0_i32_0 : i32, i32, i32
  }
  func.func @transform_1(%arg0: i32) -> (i32, i32, i32) {
    %c0_i32 = arith.constant 0 : i32
    %c0_i32_0 = arith.constant 0 : i32
    %c0_i32_1 = arith.constant 0 : i32
    %c0_i32_2 = arith.constant 0 : i32
    return %c0_i32, %c0_i32_0, %c0_i32_1 : i32, i32, i32
  }
  func.func @transform_2(%arg0: i32) -> (i32, i32) {
    %c0_i32 = arith.constant 0 : i32
    %c0_i32_0 = arith.constant 0 : i32
    %c0_i32_1 = arith.constant 0 : i32
    return %c0_i32, %c0_i32_0 : i32, i32
  }
  func.func @transform_3(%arg0: i32) -> (i32, i32) {
    %c0_i32 = arith.constant 0 : i32
    %c0_i32_0 = arith.constant 0 : i32
    %c0_i32_1 = arith.constant 0 : i32
    return %c0_i32, %c0_i32_0 : i32, i32
  }
  func.func @transform_4(%arg0: i32) -> (i32, i32) {
    %c0_i32 = arith.constant 0 : i32
    %c0_i32_0 = arith.constant 0 : i32
    %c0_i32_1 = arith.constant 0 : i32
    return %c0_i32, %c0_i32_0 : i32, i32
  }
  func.func @transform_5(%arg0: i32) -> (i32, i32) {
    %c0_i32 = arith.constant 0 : i32
    %c0_i32_0 = arith.constant 0 : i32
    %c0_i32_1 = arith.constant 0 : i32
    return %c0_i32, %c0_i32_0 : i32, i32
  }
  func.func @transform_6(%arg0: i32) -> (i32, i32) {
    %c0_i32 = arith.constant 0 : i32
    %c0_i32_0 = arith.constant 0 : i32
    %c0_i32_1 = arith.constant 0 : i32
    return %c0_i32, %c0_i32_0 : i32, i32
  }
  func.func @transform_7(%arg0: i32) -> (i32, i32, i32) {
    %c0_i32 = arith.constant 0 : i32
    %c0_i32_0 = arith.constant 0 : i32
    %c0_i32_1 = arith.constant 0 : i32
    %c0_i32_2 = arith.constant 0 : i32
    return %c0_i32, %c0_i32_0, %c0_i32_1 : i32, i32, i32
  }
  func.func @transform_8(%arg0: i32) -> (i32, i32) {
    %c0_i32 = arith.constant 0 : i32
    %c0_i32_0 = arith.constant 0 : i32
    %c0_i32_1 = arith.constant 0 : i32
    return %c0_i32, %c0_i32_0 : i32, i32
  }
  func.func @transform_9(%arg0: i32) -> (i32, i32) {
    %c0_i32 = arith.constant 0 : i32
    %c0_i32_0 = arith.constant 0 : i32
    %c0_i32_1 = arith.constant 0 : i32
    return %c0_i32, %c0_i32_0 : i32, i32
  }
  func.func @transform_10(%arg0: i32) -> (i32, i32) {
    %c0_i32 = arith.constant 0 : i32
    %c0_i32_0 = arith.constant 0 : i32
    %c0_i32_1 = arith.constant 0 : i32
    return %c0_i32, %c0_i32_0 : i32, i32
  }
  func.func @transform_11(%arg0: i32) -> (i32, i32) {
    %c0_i32 = arith.constant 0 : i32
    %c0_i32_0 = arith.constant 0 : i32
    %c0_i32_1 = arith.constant 0 : i32
    return %c0_i32, %c0_i32_0 : i32, i32
  }
  func.func @transform_12(%arg0: i32) -> (i32, i32) {
    %c0_i32 = arith.constant 0 : i32
    %c0_i32_0 = arith.constant 0 : i32
    %c0_i32_1 = arith.constant 0 : i32
    return %c0_i32, %c0_i32_0 : i32, i32
  }
  func.func @transform_13(%arg0: i32) -> (i32, i32) {
    %c0_i32 = arith.constant 0 : i32
    %c0_i32_0 = arith.constant 0 : i32
    %c0_i32_1 = arith.constant 0 : i32
    return %c0_i32, %c0_i32_0 : i32, i32
  }
  func.func @transform_14(%arg0: i32) -> (i32, i32) {
    %c0_i32 = arith.constant 0 : i32
    %c0_i32_0 = arith.constant 0 : i32
    %c0_i32_1 = arith.constant 0 : i32
    return %c0_i32, %c0_i32_0 : i32, i32
  }
  func.func @transform_15(%arg0: i32) -> (i32, i32) {
    %c0_i32 = arith.constant 0 : i32
    %c0_i32_0 = arith.constant 0 : i32
    %c0_i32_1 = arith.constant 0 : i32
    return %c0_i32, %c0_i32_0 : i32, i32
  }
  func.func @transform_16(%arg0: i32) -> (i32, i32) {
    %c0_i32 = arith.constant 0 : i32
    %c0_i32_0 = arith.constant 0 : i32
    %c0_i32_1 = arith.constant 0 : i32
    return %c0_i32, %c0_i32_0 : i32, i32
  }
  func.func @transform_17(%arg0: i32) -> (i32, i32) {
    %c0_i32 = arith.constant 0 : i32
    %c0_i32_0 = arith.constant 0 : i32
    %c0_i32_1 = arith.constant 0 : i32
    return %c0_i32, %c0_i32_0 : i32, i32
  }
  func.func @transform_18(%arg0: i32) -> (i32, i32) {
    %c0_i32 = arith.constant 0 : i32
    %c0_i32_0 = arith.constant 0 : i32
    %c0_i32_1 = arith.constant 0 : i32
    return %c0_i32, %c0_i32_0 : i32, i32
  }
  func.func @transform_19(%arg0: i32) -> (i32, i32, i32) {
    %c0_i32 = arith.constant 0 : i32
    %c0_i32_0 = arith.constant 0 : i32
    %c0_i32_1 = arith.constant 0 : i32
    return %arg0, %c0_i32, %c0_i32_0 : i32, i32, i32
  }
}

</mosaic_0001>

<llo_original>
// kernel: tpu_custom_call.1
$region0: #{tpu_custom_call.1}
  #allocation0 [shape = 'u32[]', space=smem, size = 0x4, offset = 0x4, fixed_abs, tag = 'smem constant byte address 0x4 - core index']
  #allocation1 [shape = 'u32[72,128]{1,0:T(1,128)}', space=vmem, size = 0x9000, scoped, tag = 'internal scratch']
  #allocation2 [shape = 'bf16[64,256]{1,0:T(8,128)(2,1)}', space=vmem, size = 0x8000, scoped, tag = 'scratch operand']
  #allocation3 [shape = 'f32[8,32]{1,0:T(8,128)}', space=vmem, size = 0x1000, scoped, tag = 'scratch operand']
  %s0 = inlined_call_operand.vmem [shape: bf16[2,32,256], index: 0, kind: input, shape index: {}]
  %s1 = inlined_call_operand.vmem [shape: bf16[4,8,8], index: 1, kind: input, shape index: {}]
  %s2 = inlined_call_operand.vmem [shape: f32[8,32], index: 2, kind: input, shape index: {}]
  %s3 = inlined_call_operand.vmem [shape: bf16[32,32], index: 3, kind: input, shape index: {}]
  %s4 = inlined_call_operand.vmem [shape: f32[32,1], index: 4, kind: input, shape index: {}]
  %s5 = inlined_call_operand.vmem [shape: bf16[64,32], index: 5, kind: input, shape index: {}]
  %s6 = inlined_call_operand.vmem [shape: f32[64,1], index: 6, kind: input, shape index: {}]
  %s7 = inlined_call_operand.vmem [shape: bf16[4,8,32], index: 7, kind: input, shape index: {}]
  %s8 = inlined_call_operand.vmem [shape: f32[1,32], index: 8, kind: input, shape index: {}]
  %s9 = inlined_call_operand.vmem [shape: f32[1,32], index: 9, kind: input, shape index: {}]
  %s10 = inlined_call_operand.vmem [shape: f32[1,32], index: 10, kind: input, shape index: {}]
  %s11 = inlined_call_operand.vmem [shape: f32[1,32], index: 11, kind: input, shape index: {}]
  %s12 = inlined_call_operand.vmem [shape: f32[1,32], index: 12, kind: input, shape index: {}]
  %s13 = inlined_call_operand.vmem [shape: bf16[32,64], index: 13, kind: input, shape index: {}]
  %s14 = inlined_call_operand.vmem [shape: f32[1,64], index: 14, kind: input, shape index: {}]
  %s15 = inlined_call_operand.vmem [shape: bf16[64,32], index: 15, kind: input, shape index: {}]
  %s16 = inlined_call_operand.vmem [shape: f32[1,32], index: 16, kind: input, shape index: {}]
  %s17 = inlined_call_operand.vmem [shape: f32[8,32], index: 17, kind: input, shape index: {}]
  %s18 = inlined_call_operand.vmem [shape: f32[1,8], index: 18, kind: input, shape index: {}]
  %s19 = inlined_call_operand.hbm [shape: f32[2,1,8], index: 19, kind: output, shape index: {}]
  %s20 = sld [smem:[#allocation0]]
  $region109: #{tpu_custom_call.1} parent=0
    _
  %s22 = ssub.s32 1, %s20
  %s23 = scalar_select 0, %s22, %s20
  $region1: #{tpu_custom_call.1} parent=0
    #allocation4 [shape = 'u8[1024]{0}', space=vmem, size = 0x400, scoped, tag = 'output window, operand 0']
    #allocation5 [shape = 's32[2]{0}', space=sflag, size = 0x8, scoped, tag = 'scoped memory for tpu_custom_call.1']
    %24 = vsyncpa [#allocation5], 0
    %s25 = scalar_lea.sflag [#allocation5], 1
    %26 = vsyncpa %s25, 0
    loop: start=0, step=1, limit=4
    $region2: #{tpu_custom_call.1} parent=1 // loop_pre_header
      _
    $region3: #{tpu_custom_call.1} parent=1 // loop_header
      %s28 = sphi 0, %s32
      %p29 = scmp.ge.s32.totalorder %s28, 4
      %s38 = sphi 0, %s40
      %s41 = sphi 0, %s38
      %s42 = sphi 0, %s41
      %s58 = sphi 0, %s42
      %s62 = sphi 0, %s62
      %s64 = sphi 0, %s62
      %s65 = sphi 0, %s64
      %s79 = sphi 0, %s65
      %s83 = sphi 0, %s83
      %s85 = sphi 0, %s83
      %s86 = sphi 0, %s85
      %s100 = sphi 0, %s86
      %s104 = sphi 0, %s104
      %s106 = sphi 0, %s104
      %s107 = sphi 0, %s106
      %s121 = sphi 0, %s107
      %s125 = sphi 0, %s125
      %s127 = sphi 0, %s125
      %s128 = sphi 0, %s127
      %s142 = sphi 0, %s128
      %s146 = sphi 0, %s146
      %s148 = sphi 0, %s146
      %s149 = sphi 0, %s148
      %s163 = sphi 0, %s149
      %s167 = sphi 0, %s167
      %s169 = sphi 0, %s167
      %s170 = sphi 0, %s169
      %s184 = sphi 0, %s170
      %s188 = sphi 0, %s188
      %s190 = sphi 0, %s188
      %s191 = sphi 0, %s190
      %s205 = sphi 0, %s191
      %s209 = sphi 0, %s209
      %s211 = sphi 0, %s209
      %s212 = sphi 0, %s211
      %s226 = sphi 0, %s212
      %s230 = sphi 0, %s230
      %s232 = sphi 0, %s230
      %s233 = sphi 0, %s232
      %s247 = sphi 0, %s233
      %s251 = sphi 0, %s251
      %s253 = sphi 0, %s251
      %s254 = sphi 0, %s253
      %s268 = sphi 0, %s254
      %s272 = sphi 0, %s272
      %s274 = sphi 0, %s272
      %s275 = sphi 0, %s274
      %s289 = sphi 0, %s275
      %s293 = sphi 0, %s293
      %s295 = sphi 0, %s293
      %s296 = sphi 0, %s295
      %s310 = sphi 0, %s296
      %s314 = sphi 0, %s314
      %s316 = sphi 0, %s314
      %s317 = sphi 0, %s316
      %s331 = sphi 0, %s317
      %s335 = sphi 0, %s335
      %s337 = sphi 0, %s335
      %s338 = sphi 0, %s337
      %s352 = sphi 0, %s338
      %s356 = sphi 0, %s356
      %s358 = sphi 0, %s356
      %s359 = sphi 0, %s358
      %s373 = sphi 0, %s359
      %s377 = sphi 0, %s377
      %s379 = sphi 0, %s377
      %s380 = sphi 0, %s379
      %s394 = sphi 0, %s380
      %s398 = sphi 0, %s398
      %s400 = sphi 0, %s398
      %s401 = sphi 0, %s400
      %s415 = sphi 0, %s401
      %s419 = sphi 0, %s419
      %s421 = sphi 0, %s419
      %s422 = sphi 0, %s421
      %s436 = sphi 0, %s422
      %s442 = sphi 0, %s444
      %s445 = sphi 0, %s442
      %s446 = sphi 0, %s445
      %s462 = sphi 0, %s446
    $region4: #{tpu_custom_call.1} parent=1 // loop_header_branch
      %31 = sbr.rel (%p29) target = $region8
    $region5: #{tpu_custom_call.1} parent=1 // loop_body
      %s33 = ssub.s32 %s28, 1
      %s34 = ssub.s32 %s28, 2
      %s35 = sadd.s32 %s28, 1
      %s36 = ssub.s32 %s28, %s35
      %p37 = scmp.eq.s32.totalorder %s36, 0
      %s39 = sadd.s32 %s38, 1
      %s40 = scalar_select %p37, %s38, %s39
      %p43 = pneg %p37
      %p44 = scmp.eq.s32.totalorder %s28, 1
      %p45 = por %p43, %p44
      %p46 = scmp.ne.s32.totalorder %s38, %s41
      %p47 = scmp.eq.s32.totalorder %s28, 0
      %p48 = por %p46, %p47
      %p49 = scmp.ne.s32.totalorder %s38, %s41
      %p50 = scmp.eq.s32.totalorder %s33, 1
      %p51 = por %p49, %p50
      %p52 = scmp.ne.s32.totalorder %s41, %s42
      %p53 = scmp.eq.s32.totalorder %s33, 0
      %p54 = por %p52, %p53
      %p55 = scmp.ne.s32.totalorder %s41, %s42
      %p56 = scmp.eq.s32.totalorder %s34, 1
      %p57 = por %p55, %p56
      %p59 = scmp.ne.s32.totalorder %s42, %s58
      %p60 = scmp.eq.s32.totalorder %s34, 0
      %p61 = por %p59, %p60
      %s63 = sadd.s32 %s62, 1
      %p66 = scmp.eq.s32.totalorder %s28, 1
      %p67 = scmp.ne.s32.totalorder %s62, %s64
      %p68 = scmp.eq.s32.totalorder %s28, 0
      %p69 = por %p67, %p68
      %p70 = scmp.ne.s32.totalorder %s62, %s64
      %p71 = scmp.eq.s32.totalorder %s33, 1
      %p72 = por %p70, %p71
      %p73 = scmp.ne.s32.totalorder %s64, %s65
      %p74 = scmp.eq.s32.totalorder %s33, 0
      %p75 = por %p73, %p74
      %p76 = scmp.ne.s32.totalorder %s64, %s65
      %p77 = scmp.eq.s32.totalorder %s34, 1
      %p78 = por %p76, %p77
      %p80 = scmp.ne.s32.totalorder %s65, %s79
      %p81 = scmp.eq.s32.totalorder %s34, 0
      %p82 = por %p80, %p81
      %s84 = sadd.s32 %s83, 1
      %p87 = scmp.eq.s32.totalorder %s28, 1
      %p88 = scmp.ne.s32.totalorder %s83, %s85
      %p89 = scmp.eq.s32.totalorder %s28, 0
      %p90 = por %p88, %p89
      %p91 = scmp.ne.s32.totalorder %s83, %s85
      %p92 = scmp.eq.s32.totalorder %s33, 1
      %p93 = por %p91, %p92
      %p94 = scmp.ne.s32.totalorder %s85, %s86
      %p95 = scmp.eq.s32.totalorder %s33, 0
      %p96 = por %p94, %p95
      %p97 = scmp.ne.s32.totalorder %s85, %s86
      %p98 = scmp.eq.s32.totalorder %s34, 1
      %p99 = por %p97, %p98
      %p101 = scmp.ne.s32.totalorder %s86, %s100
      %p102 = scmp.eq.s32.totalorder %s34, 0
      %p103 = por %p101, %p102
      %s105 = sadd.s32 %s104, 1
      %p108 = scmp.eq.s32.totalorder %s28, 1
      %p109 = scmp.ne.s32.totalorder %s104, %s106
      %p110 = scmp.eq.s32.totalorder %s28, 0
      %p111 = por %p109, %p110
      %p112 = scmp.ne.s32.totalorder %s104, %s106
      %p113 = scmp.eq.s32.totalorder %s33, 1
      %p114 = por %p112, %p113
      %p115 = scmp.ne.s32.totalorder %s106, %s107
      %p116 = scmp.eq.s32.totalorder %s33, 0
      %p117 = por %p115, %p116
      %p118 = scmp.ne.s32.totalorder %s106, %s107
      %p119 = scmp.eq.s32.totalorder %s34, 1
      %p120 = por %p118, %p119
      %p122 = scmp.ne.s32.totalorder %s107, %s121
      %p123 = scmp.eq.s32.totalorder %s34, 0
      %p124 = por %p122, %p123
      %s126 = sadd.s32 %s125, 1
      %p129 = scmp.eq.s32.totalorder %s28, 1
      %p130 = scmp.ne.s32.totalorder %s125, %s127
      %p131 = scmp.eq.s32.totalorder %s28, 0
      %p132 = por %p130, %p131
      %p133 = scmp.ne.s32.totalorder %s125, %s127
      %p134 = scmp.eq.s32.totalorder %s33, 1
      %p135 = por %p133, %p134
      %p136 = scmp.ne.s32.totalorder %s127, %s128
      %p137 = scmp.eq.s32.totalorder %s33, 0
      %p138 = por %p136, %p137
      %p139 = scmp.ne.s32.totalorder %s127, %s128
      %p140 = scmp.eq.s32.totalorder %s34, 1
      %p141 = por %p139, %p140
      %p143 = scmp.ne.s32.totalorder %s128, %s142
      %p144 = scmp.eq.s32.totalorder %s34, 0
      %p145 = por %p143, %p144
      %s147 = sadd.s32 %s146, 1
      %p150 = scmp.eq.s32.totalorder %s28, 1
      %p151 = scmp.ne.s32.totalorder %s146, %s148
      %p152 = scmp.eq.s32.totalorder %s28, 0
      %p153 = por %p151, %p152
      %p154 = scmp.ne.s32.totalorder %s146, %s148
      %p155 = scmp.eq.s32.totalorder %s33, 1
      %p156 = por %p154, %p155
      %p157 = scmp.ne.s32.totalorder %s148, %s149
      %p158 = scmp.eq.s32.totalorder %s33, 0
      %p159 = por %p157, %p158
      %p160 = scmp.ne.s32.totalorder %s148, %s149
      %p161 = scmp.eq.s32.totalorder %s34, 1
      %p162 = por %p160, %p161
      %p164 = scmp.ne.s32.totalorder %s149, %s163
      %p165 = scmp.eq.s32.totalorder %s34, 0
      %p166 = por %p164, %p165
      %s168 = sadd.s32 %s167, 1
      %p171 = scmp.eq.s32.totalorder %s28, 1
      %p172 = scmp.ne.s32.totalorder %s167, %s169
      %p173 = scmp.eq.s32.totalorder %s28, 0
      %p174 = por %p172, %p173
      %p175 = scmp.ne.s32.totalorder %s167, %s169
      %p176 = scmp.eq.s32.totalorder %s33, 1
      %p177 = por %p175, %p176
      %p178 = scmp.ne.s32.totalorder %s169, %s170
      %p179 = scmp.eq.s32.totalorder %s33, 0
      %p180 = por %p178, %p179
      %p181 = scmp.ne.s32.totalorder %s169, %s170
      %p182 = scmp.eq.s32.totalorder %s34, 1
      %p183 = por %p181, %p182
      %p185 = scmp.ne.s32.totalorder %s170, %s184
      %p186 = scmp.eq.s32.totalorder %s34, 0
      %p187 = por %p185, %p186
      %s189 = sadd.s32 %s188, 1
      %p192 = scmp.eq.s32.totalorder %s28, 1
      %p193 = scmp.ne.s32.totalorder %s188, %s190
      %p194 = scmp.eq.s32.totalorder %s28, 0
      %p195 = por %p193, %p194
      %p196 = scmp.ne.s32.totalorder %s188, %s190
      %p197 = scmp.eq.s32.totalorder %s33, 1
      %p198 = por %p196, %p197
      %p199 = scmp.ne.s32.totalorder %s190, %s191
      %p200 = scmp.eq.s32.totalorder %s33, 0
      %p201 = por %p199, %p200
      %p202 = scmp.ne.s32.totalorder %s190, %s191
      %p203 = scmp.eq.s32.totalorder %s34, 1
      %p204 = por %p202, %p203
      %p206 = scmp.ne.s32.totalorder %s191, %s205
      %p207 = scmp.eq.s32.totalorder %s34, 0
      %p208 = por %p206, %p207
      %s210 = sadd.s32 %s209, 1
      %p213 = scmp.eq.s32.totalorder %s28, 1
      %p214 = scmp.ne.s32.totalorder %s209, %s211
      %p215 = scmp.eq.s32.totalorder %s28, 0
      %p216 = por %p214, %p215
      %p217 = scmp.ne.s32.totalorder %s209, %s211
      %p218 = scmp.eq.s32.totalorder %s33, 1
      %p219 = por %p217, %p218
      %p220 = scmp.ne.s32.totalorder %s211, %s212
      %p221 = scmp.eq.s32.totalorder %s33, 0
      %p222 = por %p220, %p221
      %p223 = scmp.ne.s32.totalorder %s211, %s212
      %p224 = scmp.eq.s32.totalorder %s34, 1
      %p225 = por %p223, %p224
      %p227 = scmp.ne.s32.totalorder %s212, %s226
      %p228 = scmp.eq.s32.totalorder %s34, 0
      %p229 = por %p227, %p228
      %s231 = sadd.s32 %s230, 1
      %p234 = scmp.eq.s32.totalorder %s28, 1
      %p235 = scmp.ne.s32.totalorder %s230, %s232
      %p236 = scmp.eq.s32.totalorder %s28, 0
      %p237 = por %p235, %p236
      %p238 = scmp.ne.s32.totalorder %s230, %s232
      %p239 = scmp.eq.s32.totalorder %s33, 1
      %p240 = por %p238, %p239
      %p241 = scmp.ne.s32.totalorder %s232, %s233
      %p242 = scmp.eq.s32.totalorder %s33, 0
      %p243 = por %p241, %p242
      %p244 = scmp.ne.s32.totalorder %s232, %s233
      %p245 = scmp.eq.s32.totalorder %s34, 1
      %p246 = por %p244, %p245
      %p248 = scmp.ne.s32.totalorder %s233, %s247
      %p249 = scmp.eq.s32.totalorder %s34, 0
      %p250 = por %p248, %p249
      %s252 = sadd.s32 %s251, 1
      %p255 = scmp.eq.s32.totalorder %s28, 1
      %p256 = scmp.ne.s32.totalorder %s251, %s253
      %p257 = scmp.eq.s32.totalorder %s28, 0
      %p258 = por %p256, %p257
      %p259 = scmp.ne.s32.totalorder %s251, %s253
      %p260 = scmp.eq.s32.totalorder %s33, 1
      %p261 = por %p259, %p260
      %p262 = scmp.ne.s32.totalorder %s253, %s254
      %p263 = scmp.eq.s32.totalorder %s33, 0
      %p264 = por %p262, %p263
      %p265 = scmp.ne.s32.totalorder %s253, %s254
      %p266 = scmp.eq.s32.totalorder %s34, 1
      %p267 = por %p265, %p266
      %p269 = scmp.ne.s32.totalorder %s254, %s268
      %p270 = scmp.eq.s32.totalorder %s34, 0
      %p271 = por %p269, %p270
      %s273 = sadd.s32 %s272, 1
      %p276 = scmp.eq.s32.totalorder %s28, 1
      %p277 = scmp.ne.s32.totalorder %s272, %s274
      %p278 = scmp.eq.s32.totalorder %s28, 0
      %p279 = por %p277, %p278
      %p280 = scmp.ne.s32.totalorder %s272, %s274
      %p281 = scmp.eq.s32.totalorder %s33, 1
      %p282 = por %p280, %p281
      %p283 = scmp.ne.s32.totalorder %s274, %s275
      %p284 = scmp.eq.s32.totalorder %s33, 0
      %p285 = por %p283, %p284
      %p286 = scmp.ne.s32.totalorder %s274, %s275
      %p287 = scmp.eq.s32.totalorder %s34, 1
      %p288 = por %p286, %p287
      %p290 = scmp.ne.s32.totalorder %s275, %s289
      %p291 = scmp.eq.s32.totalorder %s34, 0
      %p292 = por %p290, %p291
      %s294 = sadd.s32 %s293, 1
      %p297 = scmp.eq.s32.totalorder %s28, 1
      %p298 = scmp.ne.s32.totalorder %s293, %s295
      %p299 = scmp.eq.s32.totalorder %s28, 0
      %p300 = por %p298, %p299
      %p301 = scmp.ne.s32.totalorder %s293, %s295
      %p302 = scmp.eq.s32.totalorder %s33, 1
      %p303 = por %p301, %p302
      %p304 = scmp.ne.s32.totalorder %s295, %s296
      %p305 = scmp.eq.s32.totalorder %s33, 0
      %p306 = por %p304, %p305
      %p307 = scmp.ne.s32.totalorder %s295, %s296
      %p308 = scmp.eq.s32.totalorder %s34, 1
      %p309 = por %p307, %p308
      %p311 = scmp.ne.s32.totalorder %s296, %s310
      %p312 = scmp.eq.s32.totalorder %s34, 0
      %p313 = por %p311, %p312
      %s315 = sadd.s32 %s314, 1
      %p318 = scmp.eq.s32.totalorder %s28, 1
      %p319 = scmp.ne.s32.totalorder %s314, %s316
      %p320 = scmp.eq.s32.totalorder %s28, 0
      %p321 = por %p319, %p320
      %p322 = scmp.ne.s32.totalorder %s314, %s316
      %p323 = scmp.eq.s32.totalorder %s33, 1
      %p324 = por %p322, %p323
      %p325 = scmp.ne.s32.totalorder %s316, %s317
      %p326 = scmp.eq.s32.totalorder %s33, 0
      %p327 = por %p325, %p326
      %p328 = scmp.ne.s32.totalorder %s316, %s317
      %p329 = scmp.eq.s32.totalorder %s34, 1
      %p330 = por %p328, %p329
      %p332 = scmp.ne.s32.totalorder %s317, %s331
      %p333 = scmp.eq.s32.totalorder %s34, 0
      %p334 = por %p332, %p333
      %s336 = sadd.s32 %s335, 1
      %p339 = scmp.eq.s32.totalorder %s28, 1
      %p340 = scmp.ne.s32.totalorder %s335, %s337
      %p341 = scmp.eq.s32.totalorder %s28, 0
      %p342 = por %p340, %p341
      %p343 = scmp.ne.s32.totalorder %s335, %s337
      %p344 = scmp.eq.s32.totalorder %s33, 1
      %p345 = por %p343, %p344
      %p346 = scmp.ne.s32.totalorder %s337, %s338
      %p347 = scmp.eq.s32.totalorder %s33, 0
      %p348 = por %p346, %p347
      %p349 = scmp.ne.s32.totalorder %s337, %s338
      %p350 = scmp.eq.s32.totalorder %s34, 1
      %p351 = por %p349, %p350
      %p353 = scmp.ne.s32.totalorder %s338, %s352
      %p354 = scmp.eq.s32.totalorder %s34, 0
      %p355 = por %p353, %p354
      %s357 = sadd.s32 %s356, 1
      %p360 = scmp.eq.s32.totalorder %s28, 1
      %p361 = scmp.ne.s32.totalorder %s356, %s358
      %p362 = scmp.eq.s32.totalorder %s28, 0
      %p363 = por %p361, %p362
      %p364 = scmp.ne.s32.totalorder %s356, %s358
      %p365 = scmp.eq.s32.totalorder %s33, 1
      %p366 = por %p364, %p365
      %p367 = scmp.ne.s32.totalorder %s358, %s359
      %p368 = scmp.eq.s32.totalorder %s33, 0
      %p369 = por %p367, %p368
      %p370 = scmp.ne.s32.totalorder %s358, %s359
      %p371 = scmp.eq.s32.totalorder %s34, 1
      %p372 = por %p370, %p371
      %p374 = scmp.ne.s32.totalorder %s359, %s373
      %p375 = scmp.eq.s32.totalorder %s34, 0
      %p376 = por %p374, %p375
      %s378 = sadd.s32 %s377, 1
      %p381 = scmp.eq.s32.totalorder %s28, 1
      %p382 = scmp.ne.s32.totalorder %s377, %s379
      %p383 = scmp.eq.s32.totalorder %s28, 0
      %p384 = por %p382, %p383
      %p385 = scmp.ne.s32.totalorder %s377, %s379
      %p386 = scmp.eq.s32.totalorder %s33, 1
      %p387 = por %p385, %p386
      %p388 = scmp.ne.s32.totalorder %s379, %s380
      %p389 = scmp.eq.s32.totalorder %s33, 0
      %p390 = por %p388, %p389
      %p391 = scmp.ne.s32.totalorder %s379, %s380
      %p392 = scmp.eq.s32.totalorder %s34, 1
      %p393 = por %p391, %p392
      %p395 = scmp.ne.s32.totalorder %s380, %s394
      %p396 = scmp.eq.s32.totalorder %s34, 0
      %p397 = por %p395, %p396
      %s399 = sadd.s32 %s398, 1
      %p402 = scmp.eq.s32.totalorder %s28, 1
      %p403 = scmp.ne.s32.totalorder %s398, %s400
      %p404 = scmp.eq.s32.totalorder %s28, 0
      %p405 = por %p403, %p404
      %p406 = scmp.ne.s32.totalorder %s398, %s400
      %p407 = scmp.eq.s32.totalorder %s33, 1
      %p408 = por %p406, %p407
      %p409 = scmp.ne.s32.totalorder %s400, %s401
      %p410 = scmp.eq.s32.totalorder %s33, 0
      %p411 = por %p409, %p410
      %p412 = scmp.ne.s32.totalorder %s400, %s401
      %p413 = scmp.eq.s32.totalorder %s34, 1
      %p414 = por %p412, %p413
      %p416 = scmp.ne.s32.totalorder %s401, %s415
      %p417 = scmp.eq.s32.totalorder %s34, 0
      %p418 = por %p416, %p417
      %s420 = sadd.s32 %s419, 1
      %p423 = scmp.eq.s32.totalorder %s28, 1
      %p424 = scmp.ne.s32.totalorder %s419, %s421
      %p425 = scmp.eq.s32.totalorder %s28, 0
      %p426 = por %p424, %p425
      %p427 = scmp.ne.s32.totalorder %s419, %s421
      %p428 = scmp.eq.s32.totalorder %s33, 1
      %p429 = por %p427, %p428
      %p430 = scmp.ne.s32.totalorder %s421, %s422
      %p431 = scmp.eq.s32.totalorder %s33, 0
      %p432 = por %p430, %p431
      %p433 = scmp.ne.s32.totalorder %s421, %s422
      %p434 = scmp.eq.s32.totalorder %s34, 1
      %p435 = por %p433, %p434
      %p437 = scmp.ne.s32.totalorder %s422, %s436
      %p438 = scmp.eq.s32.totalorder %s34, 0
      %p439 = por %p437, %p438
      %s440 = ssub.s32 %s28, %s35
      %p441 = scmp.eq.s32.totalorder %s440, 0
      %s443 = sadd.s32 %s442, 1
      %s444 = scalar_select %p441, %s442, %s443
      %p447 = pneg %p441
      %p448 = scmp.eq.s32.totalorder %s28, 1
      %p449 = por %p447, %p448
      %p450 = scmp.ne.s32.totalorder %s442, %s445
      %p451 = scmp.eq.s32.totalorder %s28, 0
      %p452 = por %p450, %p451
      %p453 = scmp.ne.s32.totalorder %s442, %s445
      %p454 = scmp.eq.s32.totalorder %s33, 1
      %p455 = por %p453, %p454
      %p456 = scmp.ne.s32.totalorder %s445, %s446
      %p457 = scmp.eq.s32.totalorder %s33, 0
      %p458 = por %p456, %p457
      %p459 = scmp.ne.s32.totalorder %s445, %s446
      %p460 = scmp.eq.s32.totalorder %s34, 1
      %p461 = por %p459, %p460
      %p463 = scmp.ne.s32.totalorder %s446, %s462
      %p464 = scmp.eq.s32.totalorder %s34, 0
      %p465 = por %p463, %p464
      %p466 = scmp.le.s32.totalorder 1, %s28
      %p467 = scmp.lt.s32.totalorder %s28, 3
      %p468 = pnand %p466, %p467
      %p469 = pneg %p468
      // Predicated region
      $region9: #{tpu_custom_call.1} parent=5 // pred_check
        _
      $region10: #{tpu_custom_call.1} parent=5 // pred_check_branch
        %471 = sbr.rel (%p468) target = $region12
      $region11: #{tpu_custom_call.1} parent=5 // pred_region
        %s472 = ssub.s32 %s28, 1
        // Predicated region
        $region13: #{tpu_custom_call.1} parent=11 // pred_check
          %p473 = pneg %p75
        $region14: #{tpu_custom_call.1} parent=11 // pred_check_branch
          %475 = sbr.rel (%p473) target = $region16
        $region15: #{tpu_custom_call.1} parent=11 // pred_region
          _
        $region16: #{tpu_custom_call.1} parent=11 // pred_fallthru
          _
        // Predicated region
        $region17: #{tpu_custom_call.1} parent=11 // pred_check
          %p476 = pneg %p96
        $region18: #{tpu_custom_call.1} parent=11 // pred_check_branch
          %478 = sbr.rel (%p476) target = $region20
        $region19: #{tpu_custom_call.1} parent=11 // pred_region
          _
        $region20: #{tpu_custom_call.1} parent=11 // pred_fallthru
          _
        // Predicated region
        $region21: #{tpu_custom_call.1} parent=11 // pred_check
          %p479 = pneg %p117
        $region22: #{tpu_custom_call.1} parent=11 // pred_check_branch
          %481 = sbr.rel (%p479) target = $region24
        $region23: #{tpu_custom_call.1} parent=11 // pred_region
          _
        $region24: #{tpu_custom_call.1} parent=11 // pred_fallthru
          _
        // Predicated region
        $region25: #{tpu_custom_call.1} parent=11 // pred_check
          %p482 = pneg %p138
        $region26: #{tpu_custom_call.1} parent=11 // pred_check_branch
          %484 = sbr.rel (%p482) target = $region28
        $region27: #{tpu_custom_call.1} parent=11 // pred_region
          _
        $region28: #{tpu_custom_call.1} parent=11 // pred_fallthru
          _
        // Predicated region
        $region29: #{tpu_custom_call.1} parent=11 // pred_check
          %p485 = pneg %p159
        $region30: #{tpu_custom_call.1} parent=11 // pred_check_branch
          %487 = sbr.rel (%p485) target = $region32
        $region31: #{tpu_custom_call.1} parent=11 // pred_region
          _
        $region32: #{tpu_custom_call.1} parent=11 // pred_fallthru
          _
        // Predicated region
        $region33: #{tpu_custom_call.1} parent=11 // pred_check
          %p488 = pneg %p180
        $region34: #{tpu_custom_call.1} parent=11 // pred_check_branch
          %490 = sbr.rel (%p488) target = $region36
        $region35: #{tpu_custom_call.1} parent=11 // pred_region
          _
        $region36: #{tpu_custom_call.1} parent=11 // pred_fallthru
          _
        // Predicated region
        $region37: #{tpu_custom_call.1} parent=11 // pred_check
          %p491 = pneg %p201
        $region38: #{tpu_custom_call.1} parent=11 // pred_check_branch
          %493 = sbr.rel (%p491) target = $region40
        $region39: #{tpu_custom_call.1} parent=11 // pred_region
          _
        $region40: #{tpu_custom_call.1} parent=11 // pred_fallthru
          _
        // Predicated region
        $region41: #{tpu_custom_call.1} parent=11 // pred_check
          %p494 = pneg %p222
        $region42: #{tpu_custom_call.1} parent=11 // pred_check_branch
          %496 = sbr.rel (%p494) target = $region44
        $region43: #{tpu_custom_call.1} parent=11 // pred_region
          _
        $region44: #{tpu_custom_call.1} parent=11 // pred_fallthru
          _
        // Predicated region
        $region45: #{tpu_custom_call.1} parent=11 // pred_check
          %p497 = pneg %p243
        $region46: #{tpu_custom_call.1} parent=11 // pred_check_branch
          %499 = sbr.rel (%p497) target = $region48
        $region47: #{tpu_custom_call.1} parent=11 // pred_region
          _
        $region48: #{tpu_custom_call.1} parent=11 // pred_fallthru
          _
        // Predicated region
        $region49: #{tpu_custom_call.1} parent=11 // pred_check
          %p500 = pneg %p264
        $region50: #{tpu_custom_call.1} parent=11 // pred_check_branch
          %502 = sbr.rel (%p500) target = $region52
        $region51: #{tpu_custom_call.1} parent=11 // pred_region
          _
        $region52: #{tpu_custom_call.1} parent=11 // pred_fallthru
          _
        // Predicated region
        $region53: #{tpu_custom_call.1} parent=11 // pred_check
          %p503 = pneg %p285
        $region54: #{tpu_custom_call.1} parent=11 // pred_check_branch
          %505 = sbr.rel (%p503) target = $region56
        $region55: #{tpu_custom_call.1} parent=11 // pred_region
          _
        $region56: #{tpu_custom_call.1} parent=11 // pred_fallthru
          _
        // Predicated region
        $region57: #{tpu_custom_call.1} parent=11 // pred_check
          %p506 = pneg %p306
        $region58: #{tpu_custom_call.1} parent=11 // pred_check_branch
          %508 = sbr.rel (%p506) target = $region60
        $region59: #{tpu_custom_call.1} parent=11 // pred_region
          _
        $region60: #{tpu_custom_call.1} parent=11 // pred_fallthru
          _
        // Predicated region
        $region61: #{tpu_custom_call.1} parent=11 // pred_check
          %p509 = pneg %p327
        $region62: #{tpu_custom_call.1} parent=11 // pred_check_branch
          %511 = sbr.rel (%p509) target = $region64
        $region63: #{tpu_custom_call.1} parent=11 // pred_region
          _
        $region64: #{tpu_custom_call.1} parent=11 // pred_fallthru
          _
        // Predicated region
        $region65: #{tpu_custom_call.1} parent=11 // pred_check
          %p512 = pneg %p348
        $region66: #{tpu_custom_call.1} parent=11 // pred_check_branch
          %514 = sbr.rel (%p512) target = $region68
        $region67: #{tpu_custom_call.1} parent=11 // pred_region
          _
        $region68: #{tpu_custom_call.1} parent=11 // pred_fallthru
          _
        // Predicated region
        $region69: #{tpu_custom_call.1} parent=11 // pred_check
          %p515 = pneg %p369
        $region70: #{tpu_custom_call.1} parent=11 // pred_check_branch
          %517 = sbr.rel (%p515) target = $region72
        $region71: #{tpu_custom_call.1} parent=11 // pred_region
          _
        $region72: #{tpu_custom_call.1} parent=11 // pred_fallthru
          _
        // Predicated region
        $region73: #{tpu_custom_call.1} parent=11 // pred_check
          %p518 = pneg %p390
        $region74: #{tpu_custom_call.1} parent=11 // pred_check_branch
          %520 = sbr.rel (%p518) target = $region76
        $region75: #{tpu_custom_call.1} parent=11 // pred_region
          _
        $region76: #{tpu_custom_call.1} parent=11 // pred_fallthru
          _
        // Predicated region
        $region77: #{tpu_custom_call.1} parent=11 // pred_check
          %p521 = pneg %p411
        $region78: #{tpu_custom_call.1} parent=11 // pred_check_branch
          %523 = sbr.rel (%p521) target = $region80
        $region79: #{tpu_custom_call.1} parent=11 // pred_region
          _
        $region80: #{tpu_custom_call.1} parent=11 // pred_fallthru
          _
        // Predicated region
        $region81: #{tpu_custom_call.1} parent=11 // pred_check
          %p524 = pneg %p432
        $region82: #{tpu_custom_call.1} parent=11 // pred_check_branch
          %526 = sbr.rel (%p524) target = $region84
        $region83: #{tpu_custom_call.1} parent=11 // pred_region
          _
        $region84: #{tpu_custom_call.1} parent=11 // pred_fallthru
          _
      $region12: #{tpu_custom_call.1} parent=5 // pred_fallthru
        _
      %p527 = scmp.lt.s32.totalorder %s28, 2
      // Predicated region
      $region85: #{tpu_custom_call.1} parent=5 // pred_check
        %p528 = pneg %p527
      $region86: #{tpu_custom_call.1} parent=5 // pred_check_branch
        %530 = sbr.rel (%p528) target = $region88
      $region87: #{tpu_custom_call.1} parent=5 // pred_region
        // Predicated region
        $region89: #{tpu_custom_call.1} parent=87 // pred_check
          %p531 = pneg %p48
        $region90: #{tpu_custom_call.1} parent=87 // pred_check_branch
          %533 = sbr.rel (%p531) target = $region92
        $region91: #{tpu_custom_call.1} parent=87 // pred_region
          %p534 = scmp.lt.s32.totalorder %s28, 1
          %s535 = scalar_select %p534, %s28, 1
          %s536 = smul.addr %s535, 8
          %s537 = smul.addr %s536, 4
          %s538 = scalar_lea.vmem %s0, %s537
        $region92: #{tpu_custom_call.1} parent=87 // pred_fallthru
          _
      $region88: #{tpu_custom_call.1} parent=5 // pred_fallthru
        _
      %p539 = scmp.le.s32.totalorder 1, %s28
      %p540 = scmp.lt.s32.totalorder %s28, 3
      %p541 = pnand %p539, %p540
      %p542 = pneg %p541
      // Predicated region
      $region93: #{tpu_custom_call.1} parent=5 // pred_check
        _
      $region94: #{tpu_custom_call.1} parent=5 // pred_check_branch
        %544 = sbr.rel (%p541) target = $region96
      $region95: #{tpu_custom_call.1} parent=5 // pred_region
        %s545 = ssub.s32 %s28, 1
        %p546 = scmp.lt.s32.totalorder %s33, 1
        %s547 = scalar_select %p546, %s33, 1
        %s548 = smul.addr %s547, 8
        %s549 = smul.addr %s548, 4
        %s550 = scalar_lea.vmem %s0, %s549
        %p551 = pneg %p54
        %p552 = pneg %p51
        %p553 = pneg %p75
        %p554 = pneg %p72
        %p555 = pneg %p96
        %p556 = pneg %p93
        %p557 = pneg %p117
        %p558 = pneg %p114
        %p559 = pneg %p138
        %p560 = pneg %p135
        %p561 = pneg %p159
        %p562 = pneg %p156
        %p563 = pneg %p180
        %p564 = pneg %p177
        %p565 = pneg %p201
        %p566 = pneg %p198
        %p567 = pneg %p222
        %p568 = pneg %p219
        %p569 = pneg %p243
        %p570 = pneg %p240
        %p571 = pneg %p264
        %p572 = pneg %p261
        %p573 = pneg %p285
        %p574 = pneg %p282
        %p575 = pneg %p306
        %p576 = pneg %p303
        %p577 = pneg %p327
        %p578 = pneg %p324
        %p579 = pneg %p348
        %p580 = pneg %p345
        %p581 = pneg %p369
        %p582 = pneg %p366
        %p583 = pneg %p390
        %p584 = pneg %p387
        %p585 = pneg %p411
        %p586 = pneg %p408
        %p587 = pneg %p432
        %p588 = pneg %p429
        %p589 = pneg %p458
        %p590 = pneg %p455
        %s591 = sand.u32 %s445, 1
        %s592 = scalar_lea.sflag [#allocation5], %s591
        %s593 = sand.u32 %s445, 1
        %s594 = scalar_lea.vmem [#allocation4], %s593
        %p595 = scmp.lt.s32.totalorder %s33, 1
        %s596 = scalar_select %p595, %s33, 1
        %s597 = smul.addr %s596, 8
        %s598 = smul.addr %s597, 4
        %s599 = scalar_lea.vmem %s0, %s598
        %v601 = vld [vmem:[%s599] sm:$0xff]
        %v602 = vld [vmem:[%s599 + $0x8] sm:$0xff]
        %v603 = vld [vmem:[%s599 + $0x10] sm:$0xff]
        %v604 = vld [vmem:[%s599 + $0x18] sm:$0xff]
        %v605 = vld [vmem:[%s3] sm:$0xf]
        %v606 = vld [vmem:[%s3 + $0x4] sm:$0xf]
        %v607 = vld [vmem:[%s3 + $0x8] sm:$0xf]
        %v608 = vld [vmem:[%s3 + $0xc] sm:$0xf]
        %v609 = vld [vmem:[%s4] sm:$0xff]
        %v610 = vld [vmem:[%s4 + $0x8] sm:$0xff]
        %v611 = vld [vmem:[%s4 + $0x10] sm:$0xff]
        %v612 = vld [vmem:[%s4 + $0x18] sm:$0xff]
        %614 = vset.pattern.permute.xlu0 0
        %615 = vperm.xlu0 %614, %v609
        %v616 = vpop.permute.xlu0 %615
        %619 = vset.pattern.permute.xlu0 0
        %620 = vperm.xlu0 %619, %v610
        %v621 = vpop.permute.xlu0 %620
        %624 = vset.pattern.permute.xlu0 0
        %625 = vperm.xlu0 %624, %v611
        %v626 = vpop.permute.xlu0 %625
        %629 = vset.pattern.permute.xlu0 0
        %630 = vperm.xlu0 %629, %v612
        %v631 = vpop.permute.xlu0 %630
        %v637 = vunpack.c.l.b16 %v605
        %v638 = vunpack.c.l.b16 %v606
        %v639 = vunpack.c.l.b16 %v607
        %v640 = vunpack.c.l.b16 %v608
        %v641 = vpack.c.b16 %v638, %v637
        %v642 = vpack.c.b16 %v640, %v639
        %v647 = vunpack.c.l.b16 %v601
        %v648 = vunpack.c.h.b16 %v601
        %v649 = vunpack.c.l.b16 %v602
        %v650 = vunpack.c.h.b16 %v602
        %v651 = vunpack.c.l.b16 %v603
        %v652 = vunpack.c.h.b16 %v603
        %v653 = vunpack.c.l.b16 %v604
        %v654 = vunpack.c.h.b16 %v604
        %v655 = vpack.c.b16 %v649, %v647
        %v656 = vpack.c.b16 %v650, %v648
        %v657 = vpack.c.b16 %v653, %v651
        %v658 = vpack.c.b16 %v654, %v652
        %vm663 = vcmask 261120
        %v665 = vsel %vm663, %v641, 0
        %v668 = vsel %vm663, %v642, 0
        %670 = vmatpush.bf16.msra.mxu0 0
        %671 = vmatpush.bf16.msra.mxu0 0
        %672 = vmatpush.bf16.msra.mxu0 0
        %673 = vmatpush.bf16.msra.mxu0 0
        %674 = vmatpush.bf16.msra.mxu0 0
        %675 = vmatpush.bf16.msra.mxu0 0
        %676 = vmatpush.bf16.msra.mxu0 %v657
        %677 = vmatpush.bf16.msra.mxu0 %v655
        %678 = vmatmul.bf16.gmra.mxu0 %v665
        %v679 = vpop.f32.mrf.mxu0
        %v680 = vadd.f32 %v616, %v679
        %v681 = vpop.f32.mrf.mxu0
        %v682 = vadd.f32 %v621, %v681
        %683 = vmatmul.bf16.gmra.mxu0 %v668
        %v684 = vpop.f32.mrf.mxu0
        %v685 = vadd.f32 %v626, %v684
        %v686 = vpop.f32.mrf.mxu0
        %v687 = vadd.f32 %v631, %v686
        %688 = vdwg.mxu0
        %689 = vmatpush.bf16.msra.mxu0 0
        %690 = vmatpush.bf16.msra.mxu0 0
        %691 = vmatpush.bf16.msra.mxu0 0
        %692 = vmatpush.bf16.msra.mxu0 0
        %693 = vmatpush.bf16.msra.mxu0 0
        %694 = vmatpush.bf16.msra.mxu0 0
        %695 = vmatpush.bf16.msra.mxu0 %v658
        %696 = vmatpush.bf16.msra.mxu0 %v656
        %697 = vmatmul.bf16.gmra.mxu0 %v665
        %v698 = vpop.f32.mrf.mxu0
        %v699 = vadd.f32 %v616, %v698
        %v700 = vpop.f32.mrf.mxu0
        %v701 = vadd.f32 %v621, %v700
        %702 = vmatmul.bf16.gmra.mxu0 %v668
        %v703 = vpop.f32.mrf.mxu0
        %v704 = vadd.f32 %v626, %v703
        %v705 = vpop.f32.mrf.mxu0
        %v706 = vadd.f32 %v631, %v705
        %707 = vdwg.mxu0
        %v708 = vmax.f32 %v680, 0.0
        %v709 = vmax.f32 %v699, 0.0
        %v710 = vmax.f32 %v682, 0.0
        %v711 = vmax.f32 %v701, 0.0
        %v712 = vmax.f32 %v685, 0.0
        %v713 = vmax.f32 %v704, 0.0
        %v714 = vmax.f32 %v687, 0.0
        %v715 = vmax.f32 %v706, 0.0
        %v716 = vpack.c.bf16 %v710, %v708
        %v717 = vpack.c.bf16 %v711, %v709
        %v718 = vpack.c.bf16 %v714, %v712
        %v719 = vpack.c.bf16 %v715, %v713
        %v720 = vld [vmem:[%s5] sm:$0xf]
        %v721 = vld [vmem:[%s5 + $0x4] sm:$0xf]
        %v722 = vld [vmem:[%s5 + $0x8] sm:$0xf]
        %v723 = vld [vmem:[%s5 + $0xc] sm:$0xf]
        %v724 = vld [vmem:[%s5 + $0x10] sm:$0xf]
        %v725 = vld [vmem:[%s5 + $0x14] sm:$0xf]
        %v726 = vld [vmem:[%s5 + $0x18] sm:$0xf]
        %v727 = vld [vmem:[%s5 + $0x1c] sm:$0xf]
        %v728 = vld [vmem:[%s6] sm:$0xff]
        %v729 = vld [vmem:[%s6 + $0x8] sm:$0xff]
        %v730 = vld [vmem:[%s6 + $0x10] sm:$0xff]
        %v731 = vld [vmem:[%s6 + $0x18] sm:$0xff]
        %v732 = vld [vmem:[%s6 + $0x20] sm:$0xff]
        %v733 = vld [vmem:[%s6 + $0x28] sm:$0xff]
        %v734 = vld [vmem:[%s6 + $0x30] sm:$0xff]
        %v735 = vld [vmem:[%s6 + $0x38] sm:$0xff]
        %737 = vset.pattern.permute.xlu0 0
        %738 = vperm.xlu0 %737, %v728
        %v739 = vpop.permute.xlu0 %738
        %742 = vset.pattern.permute.xlu0 0
        %743 = vperm.xlu0 %742, %v729
        %v744 = vpop.permute.xlu0 %743
        %747 = vset.pattern.permute.xlu0 0
        %748 = vperm.xlu0 %747, %v730
        %v749 = vpop.permute.xlu0 %748
        %752 = vset.pattern.permute.xlu0 0
        %753 = vperm.xlu0 %752, %v731
        %v754 = vpop.permute.xlu0 %753
        %757 = vset.pattern.permute.xlu0 0
        %758 = vperm.xlu0 %757, %v732
        %v759 = vpop.permute.xlu0 %758
        %762 = vset.pattern.permute.xlu0 0
        %763 = vperm.xlu0 %762, %v733
        %v764 = vpop.permute.xlu0 %763
        %767 = vset.pattern.permute.xlu0 0
        %768 = vperm.xlu0 %767, %v734
        %v769 = vpop.permute.xlu0 %768
        %772 = vset.pattern.permute.xlu0 0
        %773 = vperm.xlu0 %772, %v735
        %v774 = vpop.permute.xlu0 %773
        %v784 = vunpack.c.l.b16 %v720
        %v785 = vunpack.c.l.b16 %v721
        %v786 = vunpack.c.l.b16 %v722
        %v787 = vunpack.c.l.b16 %v723
        %v788 = vunpack.c.l.b16 %v724
        %v789 = vunpack.c.l.b16 %v725
        %v790 = vunpack.c.l.b16 %v726
        %v791 = vunpack.c.l.b16 %v727
        %v792 = vpack.c.b16 %v785, %v784
        %v793 = vpack.c.b16 %v787, %v786
        %v794 = vpack.c.b16 %v789, %v788
        %v795 = vpack.c.b16 %v791, %v790
        %v797 = vsel %vm663, %v792, 0
        %v800 = vsel %vm663, %v793, 0
        %v803 = vsel %vm663, %v794, 0
        %v806 = vsel %vm663, %v795, 0
        %808 = vmatpush.bf16.msra.mxu0 0
        %809 = vmatpush.bf16.msra.mxu0 0
        %810 = vmatpush.bf16.msra.mxu0 0
        %811 = vmatpush.bf16.msra.mxu0 0
        %812 = vmatpush.bf16.msra.mxu0 0
        %813 = vmatpush.bf16.msra.mxu0 0
        %814 = vmatpush.bf16.msra.mxu0 %v718
        %815 = vmatpush.bf16.msra.mxu0 %v716
        %816 = vmatmul.bf16.gmra.mxu0 %v797
        %v817 = vpop.f32.mrf.mxu0
        %v818 = vadd.f32 %v739, %v817
        %v819 = vpop.f32.mrf.mxu0
        %v820 = vadd.f32 %v744, %v819
        %821 = vmatmul.bf16.gmra.mxu0 %v800
        %v822 = vpop.f32.mrf.mxu0
        %v823 = vadd.f32 %v749, %v822
        %v824 = vpop.f32.mrf.mxu0
        %v825 = vadd.f32 %v754, %v824
        %826 = vmatmul.bf16.gmra.mxu0 %v803
        %v827 = vpop.f32.mrf.mxu0
        %v828 = vadd.f32 %v759, %v827
        %v829 = vpop.f32.mrf.mxu0
        %v830 = vadd.f32 %v764, %v829
        %831 = vmatmul.bf16.gmra.mxu0 %v806
        %v832 = vpop.f32.mrf.mxu0
        %v833 = vadd.f32 %v769, %v832
        %v834 = vpop.f32.mrf.mxu0
        %v835 = vadd.f32 %v774, %v834
        %836 = vdwg.mxu0
        %837 = vmatpush.bf16.msra.mxu0 0
        %838 = vmatpush.bf16.msra.mxu0 0
        %839 = vmatpush.bf16.msra.mxu0 0
        %840 = vmatpush.bf16.msra.mxu0 0
        %841 = vmatpush.bf16.msra.mxu0 0
        %842 = vmatpush.bf16.msra.mxu0 0
        %843 = vmatpush.bf16.msra.mxu0 %v719
        %844 = vmatpush.bf16.msra.mxu0 %v717
        %845 = vmatmul.bf16.gmra.mxu0 %v797
        %v846 = vpop.f32.mrf.mxu0
        %v847 = vadd.f32 %v739, %v846
        %v848 = vpop.f32.mrf.mxu0
        %v849 = vadd.f32 %v744, %v848
        %850 = vmatmul.bf16.gmra.mxu0 %v800
        %v851 = vpop.f32.mrf.mxu0
        %v852 = vadd.f32 %v749, %v851
        %v853 = vpop.f32.mrf.mxu0
        %v854 = vadd.f32 %v754, %v853
        %855 = vmatmul.bf16.gmra.mxu0 %v803
        %v856 = vpop.f32.mrf.mxu0
        %v857 = vadd.f32 %v759, %v856
        %v858 = vpop.f32.mrf.mxu0
        %v859 = vadd.f32 %v764, %v858
        %860 = vmatmul.bf16.gmra.mxu0 %v806
        %v861 = vpop.f32.mrf.mxu0
        %v862 = vadd.f32 %v769, %v861
        %v863 = vpop.f32.mrf.mxu0
        %v864 = vadd.f32 %v774, %v863
        %865 = vdwg.mxu0
        %v866 = vpack.c.bf16 %v847, %v818
        %v867 = vpack.c.bf16 %v849, %v820
        %v868 = vpack.c.bf16 %v852, %v823
        %v869 = vpack.c.bf16 %v854, %v825
        %v870 = vpack.c.bf16 %v857, %v828
        %v871 = vpack.c.bf16 %v859, %v830
        %v872 = vpack.c.bf16 %v862, %v833
        %v873 = vpack.c.bf16 %v864, %v835
        %874 = vst [vmem:[#allocation2] sm:$0xff] %v866
        %875 = vst [vmem:[#allocation2 + $0x8] sm:$0xff] %v867
        %876 = vst [vmem:[#allocation2 + $0x10] sm:$0xff] %v868
        %877 = vst [vmem:[#allocation2 + $0x18] sm:$0xff] %v869
        %878 = vst [vmem:[#allocation2 + $0x20] sm:$0xff] %v870
        %879 = vst [vmem:[#allocation2 + $0x28] sm:$0xff] %v871
        %880 = vst [vmem:[#allocation2 + $0x30] sm:$0xff] %v872
        %881 = vst [vmem:[#allocation2 + $0x38] sm:$0xff] %v873
        %v882 = vld [vmem:[#allocation2] sm:$0xff]
        %v883 = vld [vmem:[#allocation2 + $0x20] sm:$0xff]
        %v884 = vld [vmem:[%s1] sm:$0xf]
        %v886 = vunpack.c.l.b16 %v882
        %v887 = vunpack.c.h.b16 %v882
        %v888 = vpack.c.b16 %v886, %v886
        %v889 = vpack.c.b16 %v887, %v887
        %vm890 = vcmask 64512
        %v892 = vsel %vm890, %v884, 0
        %vm894 = vcmask 1043456
        %v896 = vsel %vm894, %v888, 0
        %v899 = vsel %vm894, %v889, 0
        %901 = vmatpush.bf16.msra.mxu0 0
        %902 = vmatpush.bf16.msra.mxu0 0
        %903 = vmatpush.bf16.msra.mxu0 0
        %904 = vmatpush.bf16.msra.mxu0 0
        %905 = vmatpush.bf16.msra.mxu0 0
        %906 = vmatpush.bf16.msra.mxu0 0
        %907 = vmatpush.bf16.msra.mxu0 0
        %908 = vmatpush.bf16.msra.mxu0 %v896
        %909 = vmatmul.bf16.gmra.mxu0 %v892
        %v910 = vpop.f32.mrf.mxu0
        %v911 = vadd.f32 0.0, %v910
        %v912 = vpop.f32.mrf.mxu0
        %913 = vdwg.mxu0
        %914 = vmatpush.bf16.msra.mxu0 0
        %915 = vmatpush.bf16.msra.mxu0 0
        %916 = vmatpush.bf16.msra.mxu0 0
        %917 = vmatpush.bf16.msra.mxu0 0
        %918 = vmatpush.bf16.msra.mxu0 0
        %919 = vmatpush.bf16.msra.mxu0 0
        %920 = vmatpush.bf16.msra.mxu0 0
        %921 = vmatpush.bf16.msra.mxu0 %v899
        %922 = vmatmul.bf16.gmra.mxu0 %v892
        %v923 = vpop.f32.mrf.mxu0
        %v924 = vadd.f32 0.0, %v923
        %v925 = vpop.f32.mrf.mxu0
        %926 = vdwg.mxu0
        %v927 = vmax.f32 %v911, %v924
        %928 = vmax.xlane.f32.xlu0 %v927
        %v929 = vpop.xlane.xlu0 %928
        %v930 = vsub.f32 %v911, %v929
        %v931 = vsub.f32 %v924, %v929
        %v932 = vmul.f32 %v930, 1.442695
        %v933 = vpow.pop %v932
        %v934 = vmul.f32 %v931, 1.442695
        %v935 = vpow.pop %v934
        %v936 = vadd.f32 %v933, %v935
        %937 = vadd.xlane.f32.xlu0 %v936
        %v938 = vpop.xlane.xlu0 %937
        %v939 = vrcp.pop %v938
        %v940 = vmul.f32 %v933, %v939
        %v941 = vmul.f32 %v935, %v939
        %v942 = vpack.c.bf16 %v940, %v940
        %v943 = vpack.c.bf16 %v941, %v941
        %v945 = vunpack.c.l.b16 %v883
        %v946 = vunpack.c.h.b16 %v883
        %v947 = vpack.c.b16 %v945, %v945
        %v948 = vpack.c.b16 %v946, %v946
        %951 = vmatpush.bf16.xpose.msra.mxu0 0
        %952 = vmatpush.bf16.xpose.msra.mxu0 0
        %953 = vmatpush.bf16.xpose.msra.mxu0 0
        %954 = vmatpush.bf16.xpose.msra.mxu0 0
        %955 = vmatpush.bf16.xpose.msra.mxu0 0
        %956 = vmatpush.bf16.xpose.msra.mxu0 0
        %957 = vmatpush.bf16.xpose.msra.mxu0 0
        %958 = vmatpush.bf16.xpose.msra.mxu0 %v947
        %959 = vmatmul.bf16.gmra.mxu0 %v942
        %v960 = vpop.f32.mrf.mxu0
        %v961 = vadd.f32 0.0, %v960
        %v962 = vpop.f32.mrf.mxu0
        %963 = vdwg.mxu0
        %964 = vmatpush.bf16.xpose.msra.mxu0 0
        %965 = vmatpush.bf16.xpose.msra.mxu0 0
        %966 = vmatpush.bf16.xpose.msra.mxu0 0
        %967 = vmatpush.bf16.xpose.msra.mxu0 0
        %968 = vmatpush.bf16.xpose.msra.mxu0 0
        %969 = vmatpush.bf16.xpose.msra.mxu0 0
        %970 = vmatpush.bf16.xpose.msra.mxu0 0
        %971 = vmatpush.bf16.xpose.msra.mxu0 %v948
        %972 = vmatmul.bf16.gmra.mxu0 %v943
        %v973 = vpop.f32.mrf.mxu0
        %v974 = vadd.f32 %v961, %v973
        %v975 = vpop.f32.mrf.mxu0
        %976 = vdwg.mxu0
        %v977 = vpack.c.bf16 %v974, %v974
        %v978 = vld [vmem:[%s7] sm:$0xf]
        %v979 = vld [vmem:[#allocation2 + $0x8] sm:$0xff]
        %v980 = vld [vmem:[#allocation2 + $0x28] sm:$0xff]
        %s981 = scalar_lea.vmem %s1, 4
        %v982 = vld [vmem:[%s981] sm:$0xf]
        %v984 = vunpack.c.l.b16 %v979
        %v985 = vunpack.c.h.b16 %v979
        %v986 = vpack.c.b16 %v984, %v984
        %v987 = vpack.c.b16 %v985, %v985
        %v989 = vsel %vm890, %v982, 0
        %v992 = vsel %vm894, %v986, 0
        %v995 = vsel %vm894, %v987, 0
        %997 = vmatpush.bf16.msra.mxu0 0
        %998 = vmatpush.bf16.msra.mxu0 0
        %999 = vmatpush.bf16.msra.mxu0 0
        %1000 = vmatpush.bf16.msra.mxu0 0
        %1001 = vmatpush.bf16.msra.mxu0 0
        %1002 = vmatpush.bf16.msra.mxu0 0
        %1003 = vmatpush.bf16.msra.mxu0 0
        %1004 = vmatpush.bf16.msra.mxu0 %v992
        %1005 = vmatmul.bf16.gmra.mxu0 %v989
        %v1006 = vpop.f32.mrf.mxu0
        %v1007 = vadd.f32 0.0, %v1006
        %v1008 = vpop.f32.mrf.mxu0
        %1009 = vdwg.mxu0
        %1010 = vmatpush.bf16.msra.mxu0 0
        %1011 = vmatpush.bf16.msra.mxu0 0
        %1012 = vmatpush.bf16.msra.mxu0 0
        %1013 = vmatpush.bf16.msra.mxu0 0
        %1014 = vmatpush.bf16.msra.mxu0 0
        %1015 = vmatpush.bf16.msra.mxu0 0
        %1016 = vmatpush.bf16.msra.mxu0 0
        %1017 = vmatpush.bf16.msra.mxu0 %v995
        %1018 = vmatmul.bf16.gmra.mxu0 %v989
        %v1019 = vpop.f32.mrf.mxu0
        %v1020 = vadd.f32 0.0, %v1019
        %v1021 = vpop.f32.mrf.mxu0
        %1022 = vdwg.mxu0
        %v1023 = vmax.f32 %v1007, %v1020
        %1024 = vmax.xlane.f32.xlu0 %v1023
        %v1025 = vpop.xlane.xlu0 %1024
        %v1026 = vsub.f32 %v1007, %v1025
        %v1027 = vsub.f32 %v1020, %v1025
        %v1028 = vmul.f32 %v1026, 1.442695
        %v1029 = vpow.pop %v1028
        %v1030 = vmul.f32 %v1027, 1.442695
        %v1031 = vpow.pop %v1030
        %v1032 = vadd.f32 %v1029, %v1031
        %1033 = vadd.xlane.f32.xlu0 %v1032
        %v1034 = vpop.xlane.xlu0 %1033
        %v1035 = vrcp.pop %v1034
        %v1036 = vmul.f32 %v1029, %v1035
        %v1037 = vmul.f32 %v1031, %v1035
        %v1038 = vpack.c.bf16 %v1036, %v1036
        %v1039 = vpack.c.bf16 %v1037, %v1037
        %v1041 = vunpack.c.l.b16 %v980
        %v1042 = vunpack.c.h.b16 %v980
        %v1043 = vpack.c.b16 %v1041, %v1041
        %v1044 = vpack.c.b16 %v1042, %v1042
        %1047 = vmatpush.bf16.xpose.msra.mxu0 0
        %1048 = vmatpush.bf16.xpose.msra.mxu0 0
        %1049 = vmatpush.bf16.xpose.msra.mxu0 0
        %1050 = vmatpush.bf16.xpose.msra.mxu0 0
        %1051 = vmatpush.bf16.xpose.msra.mxu0 0
        %1052 = vmatpush.bf16.xpose.msra.mxu0 0
        %1053 = vmatpush.bf16.xpose.msra.mxu0 0
        %1054 = vmatpush.bf16.xpose.msra.mxu0 %v1043
        %1055 = vmatmul.bf16.gmra.mxu0 %v1038
        %v1056 = vpop.f32.mrf.mxu0
        %v1057 = vadd.f32 0.0, %v1056
        %v1058 = vpop.f32.mrf.mxu0
        %1059 = vdwg.mxu0
        %1060 = vmatpush.bf16.xpose.msra.mxu0 0
        %1061 = vmatpush.bf16.xpose.msra.mxu0 0
        %1062 = vmatpush.bf16.xpose.msra.mxu0 0
        %1063 = vmatpush.bf16.xpose.msra.mxu0 0
        %1064 = vmatpush.bf16.xpose.msra.mxu0 0
        %1065 = vmatpush.bf16.xpose.msra.mxu0 0
        %1066 = vmatpush.bf16.xpose.msra.mxu0 0
        %1067 = vmatpush.bf16.xpose.msra.mxu0 %v1044
        %1068 = vmatmul.bf16.gmra.mxu0 %v1039
        %v1069 = vpop.f32.mrf.mxu0
        %v1070 = vadd.f32 %v1057, %v1069
        %v1071 = vpop.f32.mrf.mxu0
        %1072 = vdwg.mxu0
        %v1073 = vpack.c.bf16 %v1070, %v1070
        %s1074 = scalar_lea.vmem %s7, 4
        %v1075 = vld [vmem:[%s1074] sm:$0xf]
        %v1077 = vsel %vm890, %v1073, 0
        %v1080 = vsel %vm894, %v1075, 0
        %1082 = vmatpush.bf16.msra.mxu0 0
        %1083 = vmatpush.bf16.msra.mxu0 0
        %1084 = vmatpush.bf16.msra.mxu0 0
        %1085 = vmatpush.bf16.msra.mxu0 0
        %1086 = vmatpush.bf16.msra.mxu0 0
        %1087 = vmatpush.bf16.msra.mxu0 0
        %1088 = vmatpush.bf16.msra.mxu0 0
        %1089 = vmatpush.bf16.msra.mxu0 %v1080
        %1090 = vmatmul.bf16.gmra.mxu0 %v1077
        %v1091 = vpop.f32.mrf.mxu0
        %v1092 = vadd.f32 0.0, %v1091
        %v1093 = vpop.f32.mrf.mxu0
        %1094 = vdwg.mxu0
        %v1096 = vsel %vm890, %v977, 0
        %v1099 = vsel %vm894, %v978, 0
        %1101 = vmatpush.bf16.msra.mxu0 0
        %1102 = vmatpush.bf16.msra.mxu0 0
        %1103 = vmatpush.bf16.msra.mxu0 0
        %1104 = vmatpush.bf16.msra.mxu0 0
        %1105 = vmatpush.bf16.msra.mxu0 0
        %1106 = vmatpush.bf16.msra.mxu0 0
        %1107 = vmatpush.bf16.msra.mxu0 0
        %1108 = vmatpush.bf16.msra.mxu0 %v1099
        %1109 = vmatmul.bf16.gmra.mxu0 %v1096
        %v1110 = vpop.f32.mrf.mxu0
        %v1111 = vadd.f32 %v1092, %v1110
        %v1112 = vpop.f32.mrf.mxu0
        %1113 = vdwg.mxu0
        %v1114 = vld [vmem:[#allocation2 + $0x10] sm:$0xff]
        %v1115 = vld [vmem:[#allocation2 + $0x30] sm:$0xff]
        %s1116 = scalar_lea.vmem %s1, 8
        %v1117 = vld [vmem:[%s1116] sm:$0xf]
        %v1119 = vunpack.c.l.b16 %v1114
        %v1120 = vunpack.c.h.b16 %v1114
        %v1121 = vpack.c.b16 %v1119, %v1119
        %v1122 = vpack.c.b16 %v1120, %v1120
        %v1124 = vsel %vm890, %v1117, 0
        %v1127 = vsel %vm894, %v1121, 0
        %v1130 = vsel %vm894, %v1122, 0
        %1132 = vmatpush.bf16.msra.mxu0 0
        %1133 = vmatpush.bf16.msra.mxu0 0
        %1134 = vmatpush.bf16.msra.mxu0 0
        %1135 = vmatpush.bf16.msra.mxu0 0
        %1136 = vmatpush.bf16.msra.mxu0 0
        %1137 = vmatpush.bf16.msra.mxu0 0
        %1138 = vmatpush.bf16.msra.mxu0 0
        %1139 = vmatpush.bf16.msra.mxu0 %v1127
        %1140 = vmatmul.bf16.gmra.mxu0 %v1124
        %v1141 = vpop.f32.mrf.mxu0
        %v1142 = vadd.f32 0.0, %v1141
        %v1143 = vpop.f32.mrf.mxu0
        %1144 = vdwg.mxu0
        %1145 = vmatpush.bf16.msra.mxu0 0
        %1146 = vmatpush.bf16.msra.mxu0 0
        %1147 = vmatpush.bf16.msra.mxu0 0
        %1148 = vmatpush.bf16.msra.mxu0 0
        %1149 = vmatpush.bf16.msra.mxu0 0
        %1150 = vmatpush.bf16.msra.mxu0 0
        %1151 = vmatpush.bf16.msra.mxu0 0
        %1152 = vmatpush.bf16.msra.mxu0 %v1130
        %1153 = vmatmul.bf16.gmra.mxu0 %v1124
        %v1154 = vpop.f32.mrf.mxu0
        %v1155 = vadd.f32 0.0, %v1154
        %v1156 = vpop.f32.mrf.mxu0
        %1157 = vdwg.mxu0
        %v1158 = vmax.f32 %v1142, %v1155
        %1159 = vmax.xlane.f32.xlu0 %v1158
        %v1160 = vpop.xlane.xlu0 %1159
        %v1161 = vsub.f32 %v1142, %v1160
        %v1162 = vsub.f32 %v1155, %v1160
        %v1163 = vmul.f32 %v1161, 1.442695
        %v1164 = vpow.pop %v1163
        %v1165 = vmul.f32 %v1162, 1.442695
        %v1166 = vpow.pop %v1165
        %v1167 = vadd.f32 %v1164, %v1166
        %1168 = vadd.xlane.f32.xlu0 %v1167
        %v1169 = vpop.xlane.xlu0 %1168
        %v1170 = vrcp.pop %v1169
        %v1171 = vmul.f32 %v1164, %v1170
        %v1172 = vmul.f32 %v1166, %v1170
        %v1173 = vpack.c.bf16 %v1171, %v1171
        %v1174 = vpack.c.bf16 %v1172, %v1172
        %v1176 = vunpack.c.l.b16 %v1115
        %v1177 = vunpack.c.h.b16 %v1115
        %v1178 = vpack.c.b16 %v1176, %v1176
        %v1179 = vpack.c.b16 %v1177, %v1177
        %1182 = vmatpush.bf16.xpose.msra.mxu0 0
        %1183 = vmatpush.bf16.xpose.msra.mxu0 0
        %1184 = vmatpush.bf16.xpose.msra.mxu0 0
        %1185 = vmatpush.bf16.xpose.msra.mxu0 0
        %1186 = vmatpush.bf16.xpose.msra.mxu0 0
        %1187 = vmatpush.bf16.xpose.msra.mxu0 0
        %1188 = vmatpush.bf16.xpose.msra.mxu0 0
        %1189 = vmatpush.bf16.xpose.msra.mxu0 %v1178
        %1190 = vmatmul.bf16.gmra.mxu0 %v1173
        %v1191 = vpop.f32.mrf.mxu0
        %v1192 = vadd.f32 0.0, %v1191
        %v1193 = vpop.f32.mrf.mxu0
        %1194 = vdwg.mxu0
        %1195 = vmatpush.bf16.xpose.msra.mxu0 0
        %1196 = vmatpush.bf16.xpose.msra.mxu0 0
        %1197 = vmatpush.bf16.xpose.msra.mxu0 0
        %1198 = vmatpush.bf16.xpose.msra.mxu0 0
        %1199 = vmatpush.bf16.xpose.msra.mxu0 0
        %1200 = vmatpush.bf16.xpose.msra.mxu0 0
        %1201 = vmatpush.bf16.xpose.msra.mxu0 0
        %1202 = vmatpush.bf16.xpose.msra.mxu0 %v1179
        %1203 = vmatmul.bf16.gmra.mxu0 %v1174
        %v1204 = vpop.f32.mrf.mxu0
        %v1205 = vadd.f32 %v1192, %v1204
        %v1206 = vpop.f32.mrf.mxu0
        %1207 = vdwg.mxu0
        %v1208 = vpack.c.bf16 %v1205, %v1205
        %s1209 = scalar_lea.vmem %s7, 8
        %v1210 = vld [vmem:[%s1209] sm:$0xf]
        %v1212 = vsel %vm890, %v1208, 0
        %v1215 = vsel %vm894, %v1210, 0
        %1217 = vmatpush.bf16.msra.mxu0 0
        %1218 = vmatpush.bf16.msra.mxu0 0
        %1219 = vmatpush.bf16.msra.mxu0 0
        %1220 = vmatpush.bf16.msra.mxu0 0
        %1221 = vmatpush.bf16.msra.mxu0 0
        %1222 = vmatpush.bf16.msra.mxu0 0
        %1223 = vmatpush.bf16.msra.mxu0 0
        %1224 = vmatpush.bf16.msra.mxu0 %v1215
        %1225 = vmatmul.bf16.gmra.mxu0 %v1212
        %v1226 = vpop.f32.mrf.mxu0
        %v1227 = vadd.f32 0.0, %v1226
        %v1228 = vpop.f32.mrf.mxu0
        %1229 = vdwg.mxu0
        %v1230 = vadd.f32 %v1111, %v1227
        %v1231 = vld [vmem:[#allocation2 + $0x18] sm:$0xff]
        %v1232 = vld [vmem:[#allocation2 + $0x38] sm:$0xff]
        %s1233 = scalar_lea.vmem %s1, 12
        %v1234 = vld [vmem:[%s1233] sm:$0xf]
        %v1236 = vunpack.c.l.b16 %v1231
        %v1237 = vunpack.c.h.b16 %v1231
        %v1238 = vpack.c.b16 %v1236, %v1236
        %v1239 = vpack.c.b16 %v1237, %v1237
        %v1241 = vsel %vm890, %v1234, 0
        %v1244 = vsel %vm894, %v1238, 0
        %v1247 = vsel %vm894, %v1239, 0
        %1249 = vmatpush.bf16.msra.mxu0 0
        %1250 = vmatpush.bf16.msra.mxu0 0
        %1251 = vmatpush.bf16.msra.mxu0 0
        %1252 = vmatpush.bf16.msra.mxu0 0
        %1253 = vmatpush.bf16.msra.mxu0 0
        %1254 = vmatpush.bf16.msra.mxu0 0
        %1255 = vmatpush.bf16.msra.mxu0 0
        %1256 = vmatpush.bf16.msra.mxu0 %v1244
        %1257 = vmatmul.bf16.gmra.mxu0 %v1241
        %v1258 = vpop.f32.mrf.mxu0
        %v1259 = vadd.f32 0.0, %v1258
        %v1260 = vpop.f32.mrf.mxu0
        %1261 = vdwg.mxu0
        %1262 = vmatpush.bf16.msra.mxu0 0
        %1263 = vmatpush.bf16.msra.mxu0 0
        %1264 = vmatpush.bf16.msra.mxu0 0
        %1265 = vmatpush.bf16.msra.mxu0 0
        %1266 = vmatpush.bf16.msra.mxu0 0
        %1267 = vmatpush.bf16.msra.mxu0 0
        %1268 = vmatpush.bf16.msra.mxu0 0
        %1269 = vmatpush.bf16.msra.mxu0 %v1247
        %1270 = vmatmul.bf16.gmra.mxu0 %v1241
        %v1271 = vpop.f32.mrf.mxu0
        %v1272 = vadd.f32 0.0, %v1271
        %v1273 = vpop.f32.mrf.mxu0
        %1274 = vdwg.mxu0
        %v1275 = vmax.f32 %v1259, %v1272
        %1276 = vmax.xlane.f32.xlu0 %v1275
        %v1277 = vpop.xlane.xlu0 %1276
        %v1278 = vsub.f32 %v1259, %v1277
        %v1279 = vsub.f32 %v1272, %v1277
        %v1280 = vmul.f32 %v1278, 1.442695
        %v1281 = vpow.pop %v1280
        %v1282 = vmul.f32 %v1279, 1.442695
        %v1283 = vpow.pop %v1282
        %v1284 = vadd.f32 %v1281, %v1283
        %1285 = vadd.xlane.f32.xlu0 %v1284
        %v1286 = vpop.xlane.xlu0 %1285
        %v1287 = vrcp.pop %v1286
        %v1288 = vmul.f32 %v1281, %v1287
        %v1289 = vmul.f32 %v1283, %v1287
        %v1290 = vpack.c.bf16 %v1288, %v1288
        %v1291 = vpack.c.bf16 %v1289, %v1289
        %v1293 = vunpack.c.l.b16 %v1232
        %v1294 = vunpack.c.h.b16 %v1232
        %v1295 = vpack.c.b16 %v1293, %v1293
        %v1296 = vpack.c.b16 %v1294, %v1294
        %1299 = vmatpush.bf16.xpose.msra.mxu0 0
        %1300 = vmatpush.bf16.xpose.msra.mxu0 0
        %1301 = vmatpush.bf16.xpose.msra.mxu0 0
        %1302 = vmatpush.bf16.xpose.msra.mxu0 0
        %1303 = vmatpush.bf16.xpose.msra.mxu0 0
        %1304 = vmatpush.bf16.xpose.msra.mxu0 0
        %1305 = vmatpush.bf16.xpose.msra.mxu0 0
        %1306 = vmatpush.bf16.xpose.msra.mxu0 %v1295
        %1307 = vmatmul.bf16.gmra.mxu0 %v1290
        %v1308 = vpop.f32.mrf.mxu0
        %v1309 = vadd.f32 0.0, %v1308
        %v1310 = vpop.f32.mrf.mxu0
        %1311 = vdwg.mxu0
        %1312 = vmatpush.bf16.xpose.msra.mxu0 0
        %1313 = vmatpush.bf16.xpose.msra.mxu0 0
        %1314 = vmatpush.bf16.xpose.msra.mxu0 0
        %1315 = vmatpush.bf16.xpose.msra.mxu0 0
        %1316 = vmatpush.bf16.xpose.msra.mxu0 0
        %1317 = vmatpush.bf16.xpose.msra.mxu0 0
        %1318 = vmatpush.bf16.xpose.msra.mxu0 0
        %1319 = vmatpush.bf16.xpose.msra.mxu0 %v1296
        %1320 = vmatmul.bf16.gmra.mxu0 %v1291
        %v1321 = vpop.f32.mrf.mxu0
        %v1322 = vadd.f32 %v1309, %v1321
        %v1323 = vpop.f32.mrf.mxu0
        %1324 = vdwg.mxu0
        %v1325 = vpack.c.bf16 %v1322, %v1322
        %s1326 = scalar_lea.vmem %s7, 12
        %v1327 = vld [vmem:[%s1326] sm:$0xf]
        %v1329 = vsel %vm890, %v1325, 0
        %v1332 = vsel %vm894, %v1327, 0
        %1334 = vmatpush.bf16.msra.mxu0 0
        %1335 = vmatpush.bf16.msra.mxu0 0
        %1336 = vmatpush.bf16.msra.mxu0 0
        %1337 = vmatpush.bf16.msra.mxu0 0
        %1338 = vmatpush.bf16.msra.mxu0 0
        %1339 = vmatpush.bf16.msra.mxu0 0
        %1340 = vmatpush.bf16.msra.mxu0 0
        %1341 = vmatpush.bf16.msra.mxu0 %v1332
        %1342 = vmatmul.bf16.gmra.mxu0 %v1329
        %v1343 = vpop.f32.mrf.mxu0
        %v1344 = vadd.f32 0.0, %v1343
        %v1345 = vpop.f32.mrf.mxu0
        %1346 = vdwg.mxu0
        %v1347 = vadd.f32 %v1230, %v1344
        %v1348 = vld [vmem:[%s2] sm:$0xff]
        %v1349 = vadd.f32 %v1348, %v1347
        %v1350 = vld [vmem:[%s8] sm:$0x1]
        %v1352 = vperm.slane %v1350, 0
        %v1354 = vadd.f32 %v1349, %v1352
        %v1355 = vld [vmem:[%s9] sm:$0x1]
        %v1356 = vld [vmem:[%s10] sm:$0x1]
        %v1357 = vsel %vm663, %v1354, 0.0
        %1358 = vadd.xlane.f32.xlu0 %v1357
        %v1359 = vpop.xlane.xlu0 %1358
        %v1360 = vrcp.pop 32.0
        %v1361 = vmul.f32 32.0, %v1360
        %v1362 = vsub.f32 1.0, %v1361
        %v1363 = vmul.f32 %v1360, %v1362
        %v1364 = vadd.f32 %v1360, %v1363
        %vm1365 = vweird.f32 %v1360
        %v1366 = vsel %vm1365, %v1360, %v1364
        %v1367 = vmul.f32 %v1359, %v1366
        %v1368 = vsub.f32 %v1354, %v1367
        %v1369 = vmul.f32 %v1368, %v1368
        %v1370 = vsel %vm663, %v1369, 0.0
        %1371 = vadd.xlane.f32.xlu0 %v1370
        %v1372 = vpop.xlane.xlu0 %1371
        %v1373 = vmul.f32 %v1372, %v1366
        %v1374 = vadd.f32 %v1373, 1e-05
        %v1375 = vrsqrt.pop %v1374
        %v1376 = vmul.f32 %v1375, %v1374
        %v1377 = vmul.f32 %v1376, %v1375
        %v1378 = vmul.f32 0.5, %v1377
        %v1379 = vsub.f32 1.5, %v1378
        %v1380 = vmul.f32 %v1375, %v1379
        %vm1381 = vweird.f32 %v1374
        %vm1382 = vweird.f32 %v1375
        %vm1383 = vmor %vm1381, %vm1382
        %v1384 = vsel %vm1383, %v1375, %v1380
        %v1385 = vmul.f32 %v1368, %v1384
        %v1387 = vperm.slane %v1355, 0
        %v1389 = vmul.f32 %v1385, %v1387
        %v1391 = vperm.slane %v1356, 0
        %v1393 = vadd.f32 %v1389, %v1391
        %1394 = vst.msk [vmem:[#allocation3] sm:$0xff] %vm663, %v1393
        %v1395 = vld [vmem:[#allocation3] sm:$0xff]
        %v1396 = vpack.c.bf16 %v1395, %v1395
        %v1397 = vld [vmem:[%s13] sm:$0xf]
        %v1398 = vld [vmem:[%s13 + $0x4] sm:$0xf]
        %v1399 = vld [vmem:[%s13 + $0x8] sm:$0xf]
        %v1400 = vld [vmem:[%s13 + $0xc] sm:$0xf]
        %v1401 = vld [vmem:[%s14] sm:$0x1]
        %v1403 = vperm.slane %v1401, 0
        %v1409 = vunpack.c.l.b16 %v1397
        %v1410 = vunpack.c.l.b16 %v1398
        %v1411 = vunpack.c.l.b16 %v1399
        %v1412 = vunpack.c.l.b16 %v1400
        %v1413 = vpack.c.b16 %v1410, %v1409
        %v1414 = vpack.c.b16 %v1412, %v1411
        %v1418 = vsel %vm663, %v1396, 0
        %1420 = vmatpush.bf16.msra.mxu0 0
        %1421 = vmatpush.bf16.msra.mxu0 0
        %1422 = vmatpush.bf16.msra.mxu0 0
        %1423 = vmatpush.bf16.msra.mxu0 0
        %1424 = vmatpush.bf16.msra.mxu0 0
        %1425 = vmatpush.bf16.msra.mxu0 0
        %1426 = vmatpush.bf16.msra.mxu0 %v1414
        %1427 = vmatpush.bf16.msra.mxu0 %v1413
        %1428 = vmatmul.bf16.gmra.mxu0 %v1418
        %v1429 = vpop.f32.mrf.mxu0
        %v1430 = vadd.f32 %v1403, %v1429
        %v1431 = vpop.f32.mrf.mxu0
        %1432 = vdwg.mxu0
        %v1433 = vmax.f32 %v1430, 0.0
        %v1434 = vpack.c.bf16 %v1433, %v1433
        %v1435 = vld [vmem:[%s15] sm:$0xf]
        %v1436 = vld [vmem:[%s15 + $0x4] sm:$0xf]
        %v1437 = vld [vmem:[%s15 + $0x8] sm:$0xf]
        %v1438 = vld [vmem:[%s15 + $0xc] sm:$0xf]
        %v1439 = vld [vmem:[%s15 + $0x10] sm:$0xf]
        %v1440 = vld [vmem:[%s15 + $0x14] sm:$0xf]
        %v1441 = vld [vmem:[%s15 + $0x18] sm:$0xf]
        %v1442 = vld [vmem:[%s15 + $0x1c] sm:$0xf]
        %v1443 = vld [vmem:[%s16] sm:$0x1]
        %v1445 = vperm.slane %v1443, 0
        %v1455 = vunpack.c.l.b16 %v1435
        %v1456 = vunpack.c.l.b16 %v1436
        %v1457 = vunpack.c.l.b16 %v1437
        %v1458 = vunpack.c.l.b16 %v1438
        %v1459 = vunpack.c.l.b16 %v1439
        %v1460 = vunpack.c.l.b16 %v1440
        %v1461 = vunpack.c.l.b16 %v1441
        %v1462 = vunpack.c.l.b16 %v1442
        %v1463 = vpack.c.b16 %v1456, %v1455
        %v1464 = vpack.c.b16 %v1458, %v1457
        %v1465 = vpack.c.b16 %v1460, %v1459
        %v1466 = vpack.c.b16 %v1462, %v1461
        %vm1471 = vcmask 523264
        %v1473 = vsel %vm1471, %v1434, 0
        %1475 = vmatpush.bf16.msra.mxu0 0
        %1476 = vmatpush.bf16.msra.mxu0 0
        %1477 = vmatpush.bf16.msra.mxu0 0
        %1478 = vmatpush.bf16.msra.mxu0 0
        %1479 = vmatpush.bf16.msra.mxu0 %v1466
        %1480 = vmatpush.bf16.msra.mxu0 %v1465
        %1481 = vmatpush.bf16.msra.mxu0 %v1464
        %1482 = vmatpush.bf16.msra.mxu0 %v1463
        %1483 = vmatmul.bf16.gmra.mxu0 %v1473
        %v1484 = vpop.f32.mrf.mxu0
        %v1485 = vadd.f32 %v1445, %v1484
        %v1486 = vpop.f32.mrf.mxu0
        %1487 = vdwg.mxu0
        %v1488 = vadd.f32 %v1395, %v1485
        %v1489 = vld [vmem:[%s11] sm:$0x1]
        %v1490 = vld [vmem:[%s12] sm:$0x1]
        %v1491 = vsel %vm663, %v1488, 0.0
        %1492 = vadd.xlane.f32.xlu0 %v1491
        %v1493 = vpop.xlane.xlu0 %1492
        %v1494 = vmul.f32 %v1493, %v1366
        %v1495 = vsub.f32 %v1488, %v1494
        %v1496 = vmul.f32 %v1495, %v1495
        %v1497 = vsel %vm663, %v1496, 0.0
        %1498 = vadd.xlane.f32.xlu0 %v1497
        %v1499 = vpop.xlane.xlu0 %1498
        %v1500 = vmul.f32 %v1499, %v1366
        %v1501 = vadd.f32 %v1500, 1e-05
        %v1502 = vrsqrt.pop %v1501
        %v1503 = vmul.f32 %v1502, %v1501
        %v1504 = vmul.f32 %v1503, %v1502
        %v1505 = vmul.f32 0.5, %v1504
        %v1506 = vsub.f32 1.5, %v1505
        %v1507 = vmul.f32 %v1502, %v1506
        %vm1508 = vweird.f32 %v1501
        %vm1509 = vweird.f32 %v1502
        %vm1510 = vmor %vm1508, %vm1509
        %v1511 = vsel %vm1510, %v1502, %v1507
        %v1512 = vmul.f32 %v1495, %v1511
        %v1514 = vperm.slane %v1489, 0
        %v1516 = vmul.f32 %v1512, %v1514
        %v1518 = vperm.slane %v1490, 0
        %v1520 = vadd.f32 %v1516, %v1518
        %v1521 = vld [vmem:[%s17] sm:$0xff]
        %v1522 = vmul.f32 %v1520, %v1521
        %v1523 = vsel %vm663, %v1522, 0.0
        %1524 = vadd.xlane.f32.xlu0 %v1523
        %v1525 = vpop.xlane.xlu0 %1524
        %v1526 = vld [vmem:[%s18] sm:$0x1]
        %v1528 = vperm.slane %v1526, 0
        %v1529 = vlaneseq
        %v1530 = vshrl.u32 %v1529, 7
        %1532 = vset.pattern.permute.xlu0 %v1530
        %1533 = vperm.xlu0 %1532, %v1528
        %v1534 = vpop.permute.xlu0 %1533
        %v1536 = vadd.f32 %v1525, %v1534
        %1538 = vset.pattern.permute.xlu0 0
        %1539 = vperm.xlu0 %1538, %v1536
        %v1540 = vpop.permute.xlu0 %1539
        %v1541 = vlaneseq
        %v1542 = vand.u32 %v1541, 127
        %v1543 = vperm.slane %v1540, %v1542
        %vm1545 = vcmask 57344
        %1546 = vst.msk [vmem:[%s594] sm:$0x1] %vm1545, %v1543
        %s1547 = sand.u32 %s445, 1
        %s1548 = scalar_lea.sflag [#allocation5], %s1547
        %s1549 = sand.u32 %s445, 1
        %s1550 = scalar_lea.vmem [#allocation4], %s1549
        // Predicated region
        $region97: #{tpu_custom_call.1} parent=95 // pred_check
          %p1551 = pneg %p455
        $region98: #{tpu_custom_call.1} parent=95 // pred_check_branch
          %1553 = sbr.rel (%p1551) target = $region100
        $region99: #{tpu_custom_call.1} parent=95 // pred_region
          %1555 = vsyncadd %s1548, 0
          %s1556 = scalar_lea.hbm %s19, %s33
          %s1558 = sshll.u32 %s1550, 4
          %s1559 = int_to_ptr.vmem [resolvable:$true] %s1558
          %s1560 = sshll.u32 %s1556, 4
          %s1561 = int_to_ptr.hbm [resolvable:$true] %s1560
          %1563 = dma.vmem_to_hbm [thread:$0]  %s1559, 16, %s1561, %s1548
        $region100: #{tpu_custom_call.1} parent=95 // pred_fallthru
          _
      $region96: #{tpu_custom_call.1} parent=5 // pred_fallthru
        _
      %p1564 = scmp.le.s32.totalorder 2, %s28
      // Predicated region
      $region101: #{tpu_custom_call.1} parent=5 // pred_check
        %p1565 = pneg %p1564
      $region102: #{tpu_custom_call.1} parent=5 // pred_check_branch
        %1567 = sbr.rel (%p1565) target = $region104
      $region103: #{tpu_custom_call.1} parent=5 // pred_region
        %s1568 = ssub.s32 %s28, 2
        // Predicated region
        $region105: #{tpu_custom_call.1} parent=103 // pred_check
          %p1569 = pneg %p461
        $region106: #{tpu_custom_call.1} parent=103 // pred_check_branch
          %1571 = sbr.rel (%p1569) target = $region108
        $region107: #{tpu_custom_call.1} parent=103 // pred_region
          %s1572 = sand.u32 %s446, 1
          %s1573 = scalar_lea.sflag [#allocation5], %s1572
          %s1574 = sand.u32 %s446, 1
          %s1575 = scalar_lea.vmem [#allocation4], %s1574
          %1577 = dma.done %s1573, 16
        $region108: #{tpu_custom_call.1} parent=103 // pred_fallthru
          _
      $region104: #{tpu_custom_call.1} parent=5 // pred_fallthru
        _
    $region6: #{tpu_custom_call.1} parent=1 // loop_footer
      %s32 = sadd.s32 1, %s28
    $region7: #{tpu_custom_call.1} parent=1 // loop_footer_branch
      %27 = sbr.rel target = $region3
    $region8: #{tpu_custom_call.1} parent=1 // loop_exit
      _
    %1578 = vsyncpa [#allocation5], 1
    %s1579 = scalar_lea.sflag [#allocation5], 1
    %1580 = vsyncpa %s1579, 1

// kernel: tpu_custom_call.1
$region0: #{tpu_custom_call.1}
  #allocation0 [shape = 'u32[]', space=smem, size = 0x4, offset = 0x4, fixed_abs, tag = 'smem constant byte address 0x4 - core index']
  #allocation1 [shape = 'u32[72,128]{1,0:T(1,128)}', space=vmem, size = 0x9000, scoped, tag = 'internal scratch']
  #allocation2 [shape = 'bf16[64,256]{1,0:T(8,128)(2,1)}', space=vmem, size = 0x8000, scoped, tag = 'scratch operand']
  #allocation3 [shape = 'f32[8,32]{1,0:T(8,128)}', space=vmem, size = 0x1000, scoped, tag = 'scratch operand']
  %s0 = inlined_call_operand.vmem [shape: bf16[2,32,256], index: 0, kind: input, shape index: {}]
  %s1 = inlined_call_operand.vmem [shape: bf16[4,8,8], index: 1, kind: input, shape index: {}]
  %s2 = inlined_call_operand.vmem [shape: f32[8,32], index: 2, kind: input, shape index: {}]
  %s3 = inlined_call_operand.vmem [shape: bf16[32,32], index: 3, kind: input, shape index: {}]
  %s4 = inlined_call_operand.vmem [shape: f32[32,1], index: 4, kind: input, shape index: {}]
  %s5 = inlined_call_operand.vmem [shape: bf16[64,32], index: 5, kind: input, shape index: {}]
  %s6 = inlined_call_operand.vmem [shape: f32[64,1], index: 6, kind: input, shape index: {}]
  %s7 = inlined_call_operand.vmem [shape: bf16[4,8,32], index: 7, kind: input, shape index: {}]
  %s8 = inlined_call_operand.vmem [shape: f32[1,32], index: 8, kind: input, shape index: {}]
  %s9 = inlined_call_operand.vmem [shape: f32[1,32], index: 9, kind: input, shape index: {}]
  %s10 = inlined_call_operand.vmem [shape: f32[1,32], index: 10, kind: input, shape index: {}]
  %s11 = inlined_call_operand.vmem [shape: f32[1,32], index: 11, kind: input, shape index: {}]
  %s12 = inlined_call_operand.vmem [shape: f32[1,32], index: 12, kind: input, shape index: {}]
  %s13 = inlined_call_operand.vmem [shape: bf16[32,64], index: 13, kind: input, shape index: {}]
  %s14 = inlined_call_operand.vmem [shape: f32[1,64], index: 14, kind: input, shape index: {}]
  %s15 = inlined_call_operand.vmem [shape: bf16[64,32], index: 15, kind: input, shape index: {}]
  %s16 = inlined_call_operand.vmem [shape: f32[1,32], index: 16, kind: input, shape index: {}]
  %s17 = inlined_call_operand.vmem [shape: f32[8,32], index: 17, kind: input, shape index: {}]
  %s18 = inlined_call_operand.vmem [shape: f32[1,8], index: 18, kind: input, shape index: {}]
  %s19 = inlined_call_operand.hbm [shape: f32[2,1,8], index: 19, kind: output, shape index: {}]
  %s20 = sld [smem:[#allocation0]]
  $region109: #{tpu_custom_call.1} parent=0
    _
  %s22 = ssub.s32 1, %s20
  %s23 = scalar_select 0, %s22, %s20
  $region1: #{tpu_custom_call.1} parent=0
    #allocation4 [shape = 'u8[1024]{0}', space=vmem, size = 0x400, scoped, tag = 'output window, operand 0']
    #allocation5 [shape = 's32[2]{0}', space=sflag, size = 0x8, scoped, tag = 'scoped memory for tpu_custom_call.1']
    %24 = vsyncpa [#allocation5], 0
    %s25 = scalar_lea.sflag [#allocation5], 1
    %26 = vsyncpa %s25, 0
    loop: start=0, step=1, limit=4
    $region2: #{tpu_custom_call.1} parent=1 // loop_pre_header
      _
    $region3: #{tpu_custom_call.1} parent=1 // loop_header
      %s28 = sphi 0, %s32
      %p29 = scmp.ge.s32.totalorder %s28, 4
      %s38 = sphi 0, %s40
      %s41 = sphi 0, %s38
      %s42 = sphi 0, %s41
      %s58 = sphi 0, %s42
      %s62 = sphi 0, %s62
      %s64 = sphi 0, %s62
      %s65 = sphi 0, %s64
      %s79 = sphi 0, %s65
      %s83 = sphi 0, %s83
      %s85 = sphi 0, %s83
      %s86 = sphi 0, %s85
      %s100 = sphi 0, %s86
      %s104 = sphi 0, %s104
      %s106 = sphi 0, %s104
      %s107 = sphi 0, %s106
      %s121 = sphi 0, %s107
      %s125 = sphi 0, %s125
      %s127 = sphi 0, %s125
      %s128 = sphi 0, %s127
      %s142 = sphi 0, %s128
      %s146 = sphi 0, %s146
      %s148 = sphi 0, %s146
      %s149 = sphi 0, %s148
      %s163 = sphi 0, %s149
      %s167 = sphi 0, %s167
      %s169 = sphi 0, %s167
      %s170 = sphi 0, %s169
      %s184 = sphi 0, %s170
      %s188 = sphi 0, %s188
      %s190 = sphi 0, %s188
      %s191 = sphi 0, %s190
      %s205 = sphi 0, %s191
      %s209 = sphi 0, %s209
      %s211 = sphi 0, %s209
      %s212 = sphi 0, %s211
      %s226 = sphi 0, %s212
      %s230 = sphi 0, %s230
      %s232 = sphi 0, %s230
      %s233 = sphi 0, %s232
      %s247 = sphi 0, %s233
      %s251 = sphi 0, %s251
      %s253 = sphi 0, %s251
      %s254 = sphi 0, %s253
      %s268 = sphi 0, %s254
      %s272 = sphi 0, %s272
      %s274 = sphi 0, %s272
      %s275 = sphi 0, %s274
      %s289 = sphi 0, %s275
      %s293 = sphi 0, %s293
      %s295 = sphi 0, %s293
      %s296 = sphi 0, %s295
      %s310 = sphi 0, %s296
      %s314 = sphi 0, %s314
      %s316 = sphi 0, %s314
      %s317 = sphi 0, %s316
      %s331 = sphi 0, %s317
      %s335 = sphi 0, %s335
      %s337 = sphi 0, %s335
      %s338 = sphi 0, %s337
      %s352 = sphi 0, %s338
      %s356 = sphi 0, %s356
      %s358 = sphi 0, %s356
      %s359 = sphi 0, %s358
      %s373 = sphi 0, %s359
      %s377 = sphi 0, %s377
      %s379 = sphi 0, %s377
      %s380 = sphi 0, %s379
      %s394 = sphi 0, %s380
      %s398 = sphi 0, %s398
      %s400 = sphi 0, %s398
      %s401 = sphi 0, %s400
      %s415 = sphi 0, %s401
      %s419 = sphi 0, %s419
      %s421 = sphi 0, %s419
      %s422 = sphi 0, %s421
      %s436 = sphi 0, %s422
      %s442 = sphi 0, %s444
      %s445 = sphi 0, %s442
      %s446 = sphi 0, %s445
      %s462 = sphi 0, %s446
    $region4: #{tpu_custom_call.1} parent=1 // loop_header_branch
      %31 = sbr.rel (%p29) target = $region8
    $region5: #{tpu_custom_call.1} parent=1 // loop_body
      %s33 = ssub.s32 %s28, 1
      %s34 = ssub.s32 %s28, 2
      %s35 = sadd.s32 %s28, 1
      %s36 = ssub.s32 %s28, %s35
      %p37 = scmp.eq.s32.totalorder %s36, 0
      %s39 = sadd.s32 %s38, 1
      %s40 = scalar_select %p37, %s38, %s39
      %p43 = pneg %p37
      %p44 = scmp.eq.s32.totalorder %s28, 1
      %p45 = por %p43, %p44
      %p46 = scmp.ne.s32.totalorder %s38, %s41
      %p47 = scmp.eq.s32.totalorder %s28, 0
      %p48 = por %p46, %p47
      %p49 = scmp.ne.s32.totalorder %s38, %s41
      %p50 = scmp.eq.s32.totalorder %s33, 1
      %p51 = por %p49, %p50
      %p52 = scmp.ne.s32.totalorder %s41, %s42
      %p53 = scmp.eq.s32.totalorder %s33, 0
      %p54 = por %p52, %p53
      %p55 = scmp.ne.s32.totalorder %s41, %s42
      %p56 = scmp.eq.s32.totalorder %s34, 1
      %p57 = por %p55, %p56
      %p59 = scmp.ne.s32.totalorder %s42, %s58
      %p60 = scmp.eq.s32.totalorder %s34, 0
      %p61 = por %p59, %p60
      %s63 = sadd.s32 %s62, 1
      %p66 = scmp.eq.s32.totalorder %s28, 1
      %p67 = scmp.ne.s32.totalorder %s62, %s64
      %p68 = scmp.eq.s32.totalorder %s28, 0
      %p69 = por %p67, %p68
      %p70 = scmp.ne.s32.totalorder %s62, %s64
      %p71 = scmp.eq.s32.totalorder %s33, 1
      %p72 = por %p70, %p71
      %p73 = scmp.ne.s32.totalorder %s64, %s65
      %p74 = scmp.eq.s32.totalorder %s33, 0
      %p75 = por %p73, %p74
      %p76 = scmp.ne.s32.totalorder %s64, %s65
      %p77 = scmp.eq.s32.totalorder %s34, 1
      %p78 = por %p76, %p77
      %p80 = scmp.ne.s32.totalorder %s65, %s79
      %p81 = scmp.eq.s32.totalorder %s34, 0
      %p82 = por %p80, %p81
      %s84 = sadd.s32 %s83, 1
      %p87 = scmp.eq.s32.totalorder %s28, 1
      %p88 = scmp.ne.s32.totalorder %s83, %s85
      %p89 = scmp.eq.s32.totalorder %s28, 0
      %p90 = por %p88, %p89
      %p91 = scmp.ne.s32.totalorder %s83, %s85
      %p92 = scmp.eq.s32.totalorder %s33, 1
      %p93 = por %p91, %p92
      %p94 = scmp.ne.s32.totalorder %s85, %s86
      %p95 = scmp.eq.s32.totalorder %s33, 0
      %p96 = por %p94, %p95
      %p97 = scmp.ne.s32.totalorder %s85, %s86
      %p98 = scmp.eq.s32.totalorder %s34, 1
      %p99 = por %p97, %p98
      %p101 = scmp.ne.s32.totalorder %s86, %s100
      %p102 = scmp.eq.s32.totalorder %s34, 0
      %p103 = por %p101, %p102
      %s105 = sadd.s32 %s104, 1
      %p108 = scmp.eq.s32.totalorder %s28, 1
      %p109 = scmp.ne.s32.totalorder %s104, %s106
      %p110 = scmp.eq.s32.totalorder %s28, 0
      %p111 = por %p109, %p110
      %p112 = scmp.ne.s32.totalorder %s104, %s106
      %p113 = scmp.eq.s32.totalorder %s33, 1
      %p114 = por %p112, %p113
      %p115 = scmp.ne.s32.totalorder %s106, %s107
      %p116 = scmp.eq.s32.totalorder %s33, 0
      %p117 = por %p115, %p116
      %p118 = scmp.ne.s32.totalorder %s106, %s107
      %p119 = scmp.eq.s32.totalorder %s34, 1
      %p120 = por %p118, %p119
      %p122 = scmp.ne.s32.totalorder %s107, %s121
      %p123 = scmp.eq.s32.totalorder %s34, 0
      %p124 = por %p122, %p123
      %s126 = sadd.s32 %s125, 1
      %p129 = scmp.eq.s32.totalorder %s28, 1
      %p130 = scmp.ne.s32.totalorder %s125, %s127
      %p131 = scmp.eq.s32.totalorder %s28, 0
      %p132 = por %p130, %p131
      %p133 = scmp.ne.s32.totalorder %s125, %s127
      %p134 = scmp.eq.s32.totalorder %s33, 1
      %p135 = por %p133, %p134
      %p136 = scmp.ne.s32.totalorder %s127, %s128
      %p137 = scmp.eq.s32.totalorder %s33, 0
      %p138 = por %p136, %p137
      %p139 = scmp.ne.s32.totalorder %s127, %s128
      %p140 = scmp.eq.s32.totalorder %s34, 1
      %p141 = por %p139, %p140
      %p143 = scmp.ne.s32.totalorder %s128, %s142
      %p144 = scmp.eq.s32.totalorder %s34, 0
      %p145 = por %p143, %p144
      %s147 = sadd.s32 %s146, 1
      %p150 = scmp.eq.s32.totalorder %s28, 1
      %p151 = scmp.ne.s32.totalorder %s146, %s148
      %p152 = scmp.eq.s32.totalorder %s28, 0
      %p153 = por %p151, %p152
      %p154 = scmp.ne.s32.totalorder %s146, %s148
      %p155 = scmp.eq.s32.totalorder %s33, 1
      %p156 = por %p154, %p155
      %p157 = scmp.ne.s32.totalorder %s148, %s149
      %p158 = scmp.eq.s32.totalorder %s33, 0
      %p159 = por %p157, %p158
      %p160 = scmp.ne.s32.totalorder %s148, %s149
      %p161 = scmp.eq.s32.totalorder %s34, 1
      %p162 = por %p160, %p161
      %p164 = scmp.ne.s32.totalorder %s149, %s163
      %p165 = scmp.eq.s32.totalorder %s34, 0
      %p166 = por %p164, %p165
      %s168 = sadd.s32 %s167, 1
      %p171 = scmp.eq.s32.totalorder %s28, 1
      %p172 = scmp.ne.s32.totalorder %s167, %s169
      %p173 = scmp.eq.s32.totalorder %s28, 0
      %p174 = por %p172, %p173
      %p175 = scmp.ne.s32.totalorder %s167, %s169
      %p176 = scmp.eq.s32.totalorder %s33, 1
      %p177 = por %p175, %p176
      %p178 = scmp.ne.s32.totalorder %s169, %s170
      %p179 = scmp.eq.s32.totalorder %s33, 0
      %p180 = por %p178, %p179
      %p181 = scmp.ne.s32.totalorder %s169, %s170
      %p182 = scmp.eq.s32.totalorder %s34, 1
      %p183 = por %p181, %p182
      %p185 = scmp.ne.s32.totalorder %s170, %s184
      %p186 = scmp.eq.s32.totalorder %s34, 0
      %p187 = por %p185, %p186
      %s189 = sadd.s32 %s188, 1
      %p192 = scmp.eq.s32.totalorder %s28, 1
      %p193 = scmp.ne.s32.totalorder %s188, %s190
      %p194 = scmp.eq.s32.totalorder %s28, 0
      %p195 = por %p193, %p194
      %p196 = scmp.ne.s32.totalorder %s188, %s190
      %p197 = scmp.eq.s32.totalorder %s33, 1
      %p198 = por %p196, %p197
      %p199 = scmp.ne.s32.totalorder %s190, %s191
      %p200 = scmp.eq.s32.totalorder %s33, 0
      %p201 = por %p199, %p200
      %p202 = scmp.ne.s32.totalorder %s190, %s191
      %p203 = scmp.eq.s32.totalorder %s34, 1
      %p204 = por %p202, %p203
      %p206 = scmp.ne.s32.totalorder %s191, %s205
      %p207 = scmp.eq.s32.totalorder %s34, 0
      %p208 = por %p206, %p207
      %s210 = sadd.s32 %s209, 1
      %p213 = scmp.eq.s32.totalorder %s28, 1
      %p214 = scmp.ne.s32.totalorder %s209, %s211
      %p215 = scmp.eq.s32.totalorder %s28, 0
      %p216 = por %p214, %p215
      %p217 = scmp.ne.s32.totalorder %s209, %s211
      %p218 = scmp.eq.s32.totalorder %s33, 1
      %p219 = por %p217, %p218
      %p220 = scmp.ne.s32.totalorder %s211, %s212
      %p221 = scmp.eq.s32.totalorder %s33, 0
      %p222 = por %p220, %p221
      %p223 = scmp.ne.s32.totalorder %s211, %s212
      %p224 = scmp.eq.s32.totalorder %s34, 1
      %p225 = por %p223, %p224
      %p227 = scmp.ne.s32.totalorder %s212, %s226
      %p228 = scmp.eq.s32.totalorder %s34, 0
      %p229 = por %p227, %p228
      %s231 = sadd.s32 %s230, 1
      %p234 = scmp.eq.s32.totalorder %s28, 1
      %p235 = scmp.ne.s32.totalorder %s230, %s232
      %p236 = scmp.eq.s32.totalorder %s28, 0
      %p237 = por %p235, %p236
      %p238 = scmp.ne.s32.totalorder %s230, %s232
      %p239 = scmp.eq.s32.totalorder %s33, 1
      %p240 = por %p238, %p239
      %p241 = scmp.ne.s32.totalorder %s232, %s233
      %p242 = scmp.eq.s32.totalorder %s33, 0
      %p243 = por %p241, %p242
      %p244 = scmp.ne.s32.totalorder %s232, %s233
      %p245 = scmp.eq.s32.totalorder %s34, 1
      %p246 = por %p244, %p245
      %p248 = scmp.ne.s32.totalorder %s233, %s247
      %p249 = scmp.eq.s32.totalorder %s34, 0
      %p250 = por %p248, %p249
      %s252 = sadd.s32 %s251, 1
      %p255 = scmp.eq.s32.totalorder %s28, 1
      %p256 = scmp.ne.s32.totalorder %s251, %s253
      %p257 = scmp.eq.s32.totalorder %s28, 0
      %p258 = por %p256, %p257
      %p259 = scmp.ne.s32.totalorder %s251, %s253
      %p260 = scmp.eq.s32.totalorder %s33, 1
      %p261 = por %p259, %p260
      %p262 = scmp.ne.s32.totalorder %s253, %s254
      %p263 = scmp.eq.s32.totalorder %s33, 0
      %p264 = por %p262, %p263
      %p265 = scmp.ne.s32.totalorder %s253, %s254
      %p266 = scmp.eq.s32.totalorder %s34, 1
      %p267 = por %p265, %p266
      %p269 = scmp.ne.s32.totalorder %s254, %s268
      %p270 = scmp.eq.s32.totalorder %s34, 0
      %p271 = por %p269, %p270
      %s273 = sadd.s32 %s272, 1
      %p276 = scmp.eq.s32.totalorder %s28, 1
      %p277 = scmp.ne.s32.totalorder %s272, %s274
      %p278 = scmp.eq.s32.totalorder %s28, 0
      %p279 = por %p277, %p278
      %p280 = scmp.ne.s32.totalorder %s272, %s274
      %p281 = scmp.eq.s32.totalorder %s33, 1
      %p282 = por %p280, %p281
      %p283 = scmp.ne.s32.totalorder %s274, %s275
      %p284 = scmp.eq.s32.totalorder %s33, 0
      %p285 = por %p283, %p284
      %p286 = scmp.ne.s32.totalorder %s274, %s275
      %p287 = scmp.eq.s32.totalorder %s34, 1
      %p288 = por %p286, %p287
      %p290 = scmp.ne.s32.totalorder %s275, %s289
      %p291 = scmp.eq.s32.totalorder %s34, 0
      %p292 = por %p290, %p291
      %s294 = sadd.s32 %s293, 1
      %p297 = scmp.eq.s32.totalorder %s28, 1
      %p298 = scmp.ne.s32.totalorder %s293, %s295
      %p299 = scmp.eq.s32.totalorder %s28, 0
      %p300 = por %p298, %p299
      %p301 = scmp.ne.s32.totalorder %s293, %s295
      %p302 = scmp.eq.s32.totalorder %s33, 1
      %p303 = por %p301, %p302
      %p304 = scmp.ne.s32.totalorder %s295, %s296
      %p305 = scmp.eq.s32.totalorder %s33, 0
      %p306 = por %p304, %p305
      %p307 = scmp.ne.s32.totalorder %s295, %s296
      %p308 = scmp.eq.s32.totalorder %s34, 1
      %p309 = por %p307, %p308
      %p311 = scmp.ne.s32.totalorder %s296, %s310
      %p312 = scmp.eq.s32.totalorder %s34, 0
      %p313 = por %p311, %p312
      %s315 = sadd.s32 %s314, 1
      %p318 = scmp.eq.s32.totalorder %s28, 1
      %p319 = scmp.ne.s32.totalorder %s314, %s316
      %p320 = scmp.eq.s32.totalorder %s28, 0
      %p321 = por %p319, %p320
      %p322 = scmp.ne.s32.totalorder %s314, %s316
      %p323 = scmp.eq.s32.totalorder %s33, 1
      %p324 = por %p322, %p323
      %p325 = scmp.ne.s32.totalorder %s316, %s317
      %p326 = scmp.eq.s32.totalorder %s33, 0
      %p327 = por %p325, %p326
      %p328 = scmp.ne.s32.totalorder %s316, %s317
      %p329 = scmp.eq.s32.totalorder %s34, 1
      %p330 = por %p328, %p329
      %p332 = scmp.ne.s32.totalorder %s317, %s331
      %p333 = scmp.eq.s32.totalorder %s34, 0
      %p334 = por %p332, %p333
      %s336 = sadd.s32 %s335, 1
      %p339 = scmp.eq.s32.totalorder %s28, 1
      %p340 = scmp.ne.s32.totalorder %s335, %s337
      %p341 = scmp.eq.s32.totalorder %s28, 0
      %p342 = por %p340, %p341
      %p343 = scmp.ne.s32.totalorder %s335, %s337
      %p344 = scmp.eq.s32.totalorder %s33, 1
      %p345 = por %p343, %p344
      %p346 = scmp.ne.s32.totalorder %s337, %s338
      %p347 = scmp.eq.s32.totalorder %s33, 0
      %p348 = por %p346, %p347
      %p349 = scmp.ne.s32.totalorder %s337, %s338
      %p350 = scmp.eq.s32.totalorder %s34, 1
      %p351 = por %p349, %p350
      %p353 = scmp.ne.s32.totalorder %s338, %s352
      %p354 = scmp.eq.s32.totalorder %s34, 0
      %p355 = por %p353, %p354
      %s357 = sadd.s32 %s356, 1
      %p360 = scmp.eq.s32.totalorder %s28, 1
      %p361 = scmp.ne.s32.totalorder %s356, %s358
      %p362 = scmp.eq.s32.totalorder %s28, 0
      %p363 = por %p361, %p362
      %p364 = scmp.ne.s32.totalorder %s356, %s358
      %p365 = scmp.eq.s32.totalorder %s33, 1
      %p366 = por %p364, %p365
      %p367 = scmp.ne.s32.totalorder %s358, %s359
      %p368 = scmp.eq.s32.totalorder %s33, 0
      %p369 = por %p367, %p368
      %p370 = scmp.ne.s32.totalorder %s358, %s359
      %p371 = scmp.eq.s32.totalorder %s34, 1
      %p372 = por %p370, %p371
      %p374 = scmp.ne.s32.totalorder %s359, %s373
      %p375 = scmp.eq.s32.totalorder %s34, 0
      %p376 = por %p374, %p375
      %s378 = sadd.s32 %s377, 1
      %p381 = scmp.eq.s32.totalorder %s28, 1
      %p382 = scmp.ne.s32.totalorder %s377, %s379
      %p383 = scmp.eq.s32.totalorder %s28, 0
      %p384 = por %p382, %p383
      %p385 = scmp.ne.s32.totalorder %s377, %s379
      %p386 = scmp.eq.s32.totalorder %s33, 1
      %p387 = por %p385, %p386
      %p388 = scmp.ne.s32.totalorder %s379, %s380
      %p389 = scmp.eq.s32.totalorder %s33, 0
      %p390 = por %p388, %p389
      %p391 = scmp.ne.s32.totalorder %s379, %s380
      %p392 = scmp.eq.s32.totalorder %s34, 1
      %p393 = por %p391, %p392
      %p395 = scmp.ne.s32.totalorder %s380, %s394
      %p396 = scmp.eq.s32.totalorder %s34, 0
      %p397 = por %p395, %p396
      %s399 = sadd.s32 %s398, 1
      %p402 = scmp.eq.s32.totalorder %s28, 1
      %p403 = scmp.ne.s32.totalorder %s398, %s400
      %p404 = scmp.eq.s32.totalorder %s28, 0
      %p405 = por %p403, %p404
      %p406 = scmp.ne.s32.totalorder %s398, %s400
      %p407 = scmp.eq.s32.totalorder %s33, 1
      %p408 = por %p406, %p407
      %p409 = scmp.ne.s32.totalorder %s400, %s401
      %p410 = scmp.eq.s32.totalorder %s33, 0
      %p411 = por %p409, %p410
      %p412 = scmp.ne.s32.totalorder %s400, %s401
      %p413 = scmp.eq.s32.totalorder %s34, 1
      %p414 = por %p412, %p413
      %p416 = scmp.ne.s32.totalorder %s401, %s415
      %p417 = scmp.eq.s32.totalorder %s34, 0
      %p418 = por %p416, %p417
      %s420 = sadd.s32 %s419, 1
      %p423 = scmp.eq.s32.totalorder %s28, 1
      %p424 = scmp.ne.s32.totalorder %s419, %s421
      %p425 = scmp.eq.s32.totalorder %s28, 0
      %p426 = por %p424, %p425
      %p427 = scmp.ne.s32.totalorder %s419, %s421
      %p428 = scmp.eq.s32.totalorder %s33, 1
      %p429 = por %p427, %p428
      %p430 = scmp.ne.s32.totalorder %s421, %s422
      %p431 = scmp.eq.s32.totalorder %s33, 0
      %p432 = por %p430, %p431
      %p433 = scmp.ne.s32.totalorder %s421, %s422
      %p434 = scmp.eq.s32.totalorder %s34, 1
      %p435 = por %p433, %p434
      %p437 = scmp.ne.s32.totalorder %s422, %s436
      %p438 = scmp.eq.s32.totalorder %s34, 0
      %p439 = por %p437, %p438
      %s440 = ssub.s32 %s28, %s35
      %p441 = scmp.eq.s32.totalorder %s440, 0
      %s443 = sadd.s32 %s442, 1
      %s444 = scalar_select %p441, %s442, %s443
      %p447 = pneg %p441
      %p448 = scmp.eq.s32.totalorder %s28, 1
      %p449 = por %p447, %p448
      %p450 = scmp.ne.s32.totalorder %s442, %s445
      %p451 = scmp.eq.s32.totalorder %s28, 0
      %p452 = por %p450, %p451
      %p453 = scmp.ne.s32.totalorder %s442, %s445
      %p454 = scmp.eq.s32.totalorder %s33, 1
      %p455 = por %p453, %p454
      %p456 = scmp.ne.s32.totalorder %s445, %s446
      %p457 = scmp.eq.s32.totalorder %s33, 0
      %p458 = por %p456, %p457
      %p459 = scmp.ne.s32.totalorder %s445, %s446
      %p460 = scmp.eq.s32.totalorder %s34, 1
      %p461 = por %p459, %p460
      %p463 = scmp.ne.s32.totalorder %s446, %s462
      %p464 = scmp.eq.s32.totalorder %s34, 0
      %p465 = por %p463, %p464
      %p466 = scmp.le.s32.totalorder 1, %s28
      %p467 = scmp.lt.s32.totalorder %s28, 3
      %p468 = pnand %p466, %p467
      %p469 = pneg %p468
      // Predicated region
      $region9: #{tpu_custom_call.1} parent=5 // pred_check
        _
      $region10: #{tpu_custom_call.1} parent=5 // pred_check_branch
        %471 = sbr.rel (%p468) target = $region12
      $region11: #{tpu_custom_call.1} parent=5 // pred_region
        %s472 = ssub.s32 %s28, 1
        // Predicated region
        $region13: #{tpu_custom_call.1} parent=11 // pred_check
          %p473 = pneg %p75
        $region14: #{tpu_custom_call.1} parent=11 // pred_check_branch
          %475 = sbr.rel (%p473) target = $region16
        $region15: #{tpu_custom_call.1} parent=11 // pred_region
          _
        $region16: #{tpu_custom_call.1} parent=11 // pred_fallthru
          _
        // Predicated region
        $region17: #{tpu_custom_call.1} parent=11 // pred_check
          %p476 = pneg %p96
        $region18: #{tpu_custom_call.1} parent=11 // pred_check_branch
          %478 = sbr.rel (%p476) target = $region20
        $region19: #{tpu_custom_call.1} parent=11 // pred_region
          _
        $region20: #{tpu_custom_call.1} parent=11 // pred_fallthru
          _
        // Predicated region
        $region21: #{tpu_custom_call.1} parent=11 // pred_check
          %p479 = pneg %p117
        $region22: #{tpu_custom_call.1} parent=11 // pred_check_branch
          %481 = sbr.rel (%p479) target = $region24
        $region23: #{tpu_custom_call.1} parent=11 // pred_region
          _
        $region24: #{tpu_custom_call.1} parent=11 // pred_fallthru
          _
        // Predicated region
        $region25: #{tpu_custom_call.1} parent=11 // pred_check
          %p482 = pneg %p138
        $region26: #{tpu_custom_call.1} parent=11 // pred_check_branch
          %484 = sbr.rel (%p482) target = $region28
        $region27: #{tpu_custom_call.1} parent=11 // pred_region
          _
        $region28: #{tpu_custom_call.1} parent=11 // pred_fallthru
          _
        // Predicated region
        $region29: #{tpu_custom_call.1} parent=11 // pred_check
          %p485 = pneg %p159
        $region30: #{tpu_custom_call.1} parent=11 // pred_check_branch
          %487 = sbr.rel (%p485) target = $region32
        $region31: #{tpu_custom_call.1} parent=11 // pred_region
          _
        $region32: #{tpu_custom_call.1} parent=11 // pred_fallthru
          _
        // Predicated region
        $region33: #{tpu_custom_call.1} parent=11 // pred_check
          %p488 = pneg %p180
        $region34: #{tpu_custom_call.1} parent=11 // pred_check_branch
          %490 = sbr.rel (%p488) target = $region36
        $region35: #{tpu_custom_call.1} parent=11 // pred_region
          _
        $region36: #{tpu_custom_call.1} parent=11 // pred_fallthru
          _
        // Predicated region
        $region37: #{tpu_custom_call.1} parent=11 // pred_check
          %p491 = pneg %p201
        $region38: #{tpu_custom_call.1} parent=11 // pred_check_branch
          %493 = sbr.rel (%p491) target = $region40
        $region39: #{tpu_custom_call.1} parent=11 // pred_region
          _
        $region40: #{tpu_custom_call.1} parent=11 // pred_fallthru
          _
        // Predicated region
        $region41: #{tpu_custom_call.1} parent=11 // pred_check
          %p494 = pneg %p222
        $region42: #{tpu_custom_call.1} parent=11 // pred_check_branch
          %496 = sbr.rel (%p494) target = $region44
        $region43: #{tpu_custom_call.1} parent=11 // pred_region
          _
        $region44: #{tpu_custom_call.1} parent=11 // pred_fallthru
          _
        // Predicated region
        $region45: #{tpu_custom_call.1} parent=11 // pred_check
          %p497 = pneg %p243
        $region46: #{tpu_custom_call.1} parent=11 // pred_check_branch
          %499 = sbr.rel (%p497) target = $region48
        $region47: #{tpu_custom_call.1} parent=11 // pred_region
          _
        $region48: #{tpu_custom_call.1} parent=11 // pred_fallthru
          _
        // Predicated region
        $region49: #{tpu_custom_call.1} parent=11 // pred_check
          %p500 = pneg %p264
        $region50: #{tpu_custom_call.1} parent=11 // pred_check_branch
          %502 = sbr.rel (%p500) target = $region52
        $region51: #{tpu_custom_call.1} parent=11 // pred_region
          _
        $region52: #{tpu_custom_call.1} parent=11 // pred_fallthru
          _
        // Predicated region
        $region53: #{tpu_custom_call.1} parent=11 // pred_check
          %p503 = pneg %p285
        $region54: #{tpu_custom_call.1} parent=11 // pred_check_branch
          %505 = sbr.rel (%p503) target = $region56
        $region55: #{tpu_custom_call.1} parent=11 // pred_region
          _
        $region56: #{tpu_custom_call.1} parent=11 // pred_fallthru
          _
        // Predicated region
        $region57: #{tpu_custom_call.1} parent=11 // pred_check
          %p506 = pneg %p306
        $region58: #{tpu_custom_call.1} parent=11 // pred_check_branch
          %508 = sbr.rel (%p506) target = $region60
        $region59: #{tpu_custom_call.1} parent=11 // pred_region
          _
        $region60: #{tpu_custom_call.1} parent=11 // pred_fallthru
          _
        // Predicated region
        $region61: #{tpu_custom_call.1} parent=11 // pred_check
          %p509 = pneg %p327
        $region62: #{tpu_custom_call.1} parent=11 // pred_check_branch
          %511 = sbr.rel (%p509) target = $region64
        $region63: #{tpu_custom_call.1} parent=11 // pred_region
          _
        $region64: #{tpu_custom_call.1} parent=11 // pred_fallthru
          _
        // Predicated region
        $region65: #{tpu_custom_call.1} parent=11 // pred_check
          %p512 = pneg %p348
        $region66: #{tpu_custom_call.1} parent=11 // pred_check_branch
          %514 = sbr.rel (%p512) target = $region68
        $region67: #{tpu_custom_call.1} parent=11 // pred_region
          _
        $region68: #{tpu_custom_call.1} parent=11 // pred_fallthru
          _
        // Predicated region
        $region69: #{tpu_custom_call.1} parent=11 // pred_check
          %p515 = pneg %p369
        $region70: #{tpu_custom_call.1} parent=11 // pred_check_branch
          %517 = sbr.rel (%p515) target = $region72
        $region71: #{tpu_custom_call.1} parent=11 // pred_region
          _
        $region72: #{tpu_custom_call.1} parent=11 // pred_fallthru
          _
        // Predicated region
        $region73: #{tpu_custom_call.1} parent=11 // pred_check
          %p518 = pneg %p390
        $region74: #{tpu_custom_call.1} parent=11 // pred_check_branch
          %520 = sbr.rel (%p518) target = $region76
        $region75: #{tpu_custom_call.1} parent=11 // pred_region
          _
        $region76: #{tpu_custom_call.1} parent=11 // pred_fallthru
          _
        // Predicated region
        $region77: #{tpu_custom_call.1} parent=11 // pred_check
          %p521 = pneg %p411
        $region78: #{tpu_custom_call.1} parent=11 // pred_check_branch
          %523 = sbr.rel (%p521) target = $region80
        $region79: #{tpu_custom_call.1} parent=11 // pred_region
          _
        $region80: #{tpu_custom_call.1} parent=11 // pred_fallthru
          _
        // Predicated region
        $region81: #{tpu_custom_call.1} parent=11 // pred_check
          %p524 = pneg %p432
        $region82: #{tpu_custom_call.1} parent=11 // pred_check_branch
          %526 = sbr.rel (%p524) target = $region84
        $region83: #{tpu_custom_call.1} parent=11 // pred_region
          _
        $region84: #{tpu_custom_call.1} parent=11 // pred_fallthru
          _
      $region12: #{tpu_custom_call.1} parent=5 // pred_fallthru
        _
      %p527 = scmp.lt.s32.totalorder %s28, 2
      // Predicated region
      $region85: #{tpu_custom_call.1} parent=5 // pred_check
        %p528 = pneg %p527
      $region86: #{tpu_custom_call.1} parent=5 // pred_check_branch
        %530 = sbr.rel (%p528) target = $region88
      $region87: #{tpu_custom_call.1} parent=5 // pred_region
        // Predicated region
        $region89: #{tpu_custom_call.1} parent=87 // pred_check
          %p531 = pneg %p48
        $region90: #{tpu_custom_call.1} parent=87 // pred_check_branch
          %533 = sbr.rel (%p531) target = $region92
        $region91: #{tpu_custom_call.1} parent=87 // pred_region
          %p534 = scmp.lt.s32.totalorder %s28, 1
          %s535 = scalar_select %p534, %s28, 1
          %s536 = smul.addr %s535, 8
          %s537 = smul.addr %s536, 4
          %s538 = scalar_lea.vmem %s0, %s537
        $region92: #{tpu_custom_call.1} parent=87 // pred_fallthru
          _
      $region88: #{tpu_custom_call.1} parent=5 // pred_fallthru
        _
      %p539 = scmp.le.s32.totalorder 1, %s28
      %p540 = scmp.lt.s32.totalorder %s28, 3
      %p541 = pnand %p539, %p540
      %p542 = pneg %p541
      // Predicated region
      $region93: #{tpu_custom_call.1} parent=5 // pred_check
        _
      $region94: #{tpu_custom_call.1} parent=5 // pred_check_branch
        %544 = sbr.rel (%p541) target = $region96
      $region95: #{tpu_custom_call.1} parent=5 // pred_region
        %s545 = ssub.s32 %s28, 1
        %p546 = scmp.lt.s32.totalorder %s33, 1
        %s547 = scalar_select %p546, %s33, 1
        %s548 = smul.addr %s547, 8
        %s549 = smul.addr %s548, 4
        %s550 = scalar_lea.vmem %s0, %s549
        %p551 = pneg %p54
        %p552 = pneg %p51
        %p553 = pneg %p75
        %p554 = pneg %p72
        %p555 = pneg %p96
        %p556 = pneg %p93
        %p557 = pneg %p117
        %p558 = pneg %p114
        %p559 = pneg %p138
        %p560 = pneg %p135
        %p561 = pneg %p159
        %p562 = pneg %p156
        %p563 = pneg %p180
        %p564 = pneg %p177
        %p565 = pneg %p201
        %p566 = pneg %p198
        %p567 = pneg %p222
        %p568 = pneg %p219
        %p569 = pneg %p243
        %p570 = pneg %p240
        %p571 = pneg %p264
        %p572 = pneg %p261
        %p573 = pneg %p285
        %p574 = pneg %p282
        %p575 = pneg %p306
        %p576 = pneg %p303
        %p577 = pneg %p327
        %p578 = pneg %p324
        %p579 = pneg %p348
        %p580 = pneg %p345
        %p581 = pneg %p369
        %p582 = pneg %p366
        %p583 = pneg %p390
        %p584 = pneg %p387
        %p585 = pneg %p411
        %p586 = pneg %p408
        %p587 = pneg %p432
        %p588 = pneg %p429
        %p589 = pneg %p458
        %p590 = pneg %p455
        %s591 = sand.u32 %s445, 1
        %s592 = scalar_lea.sflag [#allocation5], %s591
        %s593 = sand.u32 %s445, 1
        %s594 = scalar_lea.vmem [#allocation4], %s593
        %p595 = scmp.lt.s32.totalorder %s33, 1
        %s596 = scalar_select %p595, %s33, 1
        %s597 = smul.addr %s596, 8
        %s598 = smul.addr %s597, 4
        %s599 = scalar_lea.vmem %s0, %s598
        %v601 = vld [vmem:[%s599] sm:$0xff]
        %v602 = vld [vmem:[%s599 + $0x8] sm:$0xff]
        %v603 = vld [vmem:[%s599 + $0x10] sm:$0xff]
        %v604 = vld [vmem:[%s599 + $0x18] sm:$0xff]
        %v605 = vld [vmem:[%s3] sm:$0xf]
        %v606 = vld [vmem:[%s3 + $0x4] sm:$0xf]
        %v607 = vld [vmem:[%s3 + $0x8] sm:$0xf]
        %v608 = vld [vmem:[%s3 + $0xc] sm:$0xf]
        %v609 = vld [vmem:[%s4] sm:$0xff]
        %v610 = vld [vmem:[%s4 + $0x8] sm:$0xff]
        %v611 = vld [vmem:[%s4 + $0x10] sm:$0xff]
        %v612 = vld [vmem:[%s4 + $0x18] sm:$0xff]
        %614 = vset.pattern.permute.xlu0 0
        %615 = vperm.xlu0 %614, %v609
        %v616 = vpop.permute.xlu0 %615
        %619 = vset.pattern.permute.xlu0 0
        %620 = vperm.xlu0 %619, %v610
        %v621 = vpop.permute.xlu0 %620
        %624 = vset.pattern.permute.xlu0 0
        %625 = vperm.xlu0 %624, %v611
        %v626 = vpop.permute.xlu0 %625
        %629 = vset.pattern.permute.xlu0 0
        %630 = vperm.xlu0 %629, %v612
        %v631 = vpop.permute.xlu0 %630
        %v637 = vunpack.c.l.b16 %v605
        %v638 = vunpack.c.l.b16 %v606
        %v639 = vunpack.c.l.b16 %v607
        %v640 = vunpack.c.l.b16 %v608
        %v641 = vpack.c.b16 %v638, %v637
        %v642 = vpack.c.b16 %v640, %v639
        %v647 = vunpack.c.l.b16 %v601
        %v648 = vunpack.c.h.b16 %v601
        %v649 = vunpack.c.l.b16 %v602
        %v650 = vunpack.c.h.b16 %v602
        %v651 = vunpack.c.l.b16 %v603
        %v652 = vunpack.c.h.b16 %v603
        %v653 = vunpack.c.l.b16 %v604
        %v654 = vunpack.c.h.b16 %v604
        %v655 = vpack.c.b16 %v649, %v647
        %v656 = vpack.c.b16 %v650, %v648
        %v657 = vpack.c.b16 %v653, %v651
        %v658 = vpack.c.b16 %v654, %v652
        %vm663 = vcmask 261120
        %v665 = vsel %vm663, %v641, 0
        %v668 = vsel %vm663, %v642, 0
        %670 = vmatpush.bf16.msra.mxu0 0
        %671 = vmatpush.bf16.msra.mxu0 0
        %672 = vmatpush.bf16.msra.mxu0 0
        %673 = vmatpush.bf16.msra.mxu0 0
        %674 = vmatpush.bf16.msra.mxu0 0
        %675 = vmatpush.bf16.msra.mxu0 0
        %676 = vmatpush.bf16.msra.mxu0 %v657
        %677 = vmatpush.bf16.msra.mxu0 %v655
        %678 = vmatmul.bf16.gmra.mxu0 %v665
        %v679 = vpop.f32.mrf.mxu0
        %v680 = vadd.f32 %v616, %v679
        %v681 = vpop.f32.mrf.mxu0
        %v682 = vadd.f32 %v621, %v681
        %683 = vmatmul.bf16.gmra.mxu0 %v668
        %v684 = vpop.f32.mrf.mxu0
        %v685 = vadd.f32 %v626, %v684
        %v686 = vpop.f32.mrf.mxu0
        %v687 = vadd.f32 %v631, %v686
        %688 = vdwg.mxu0
        %689 = vmatpush.bf16.msra.mxu0 0
        %690 = vmatpush.bf16.msra.mxu0 0
        %691 = vmatpush.bf16.msra.mxu0 0
        %692 = vmatpush.bf16.msra.mxu0 0
        %693 = vmatpush.bf16.msra.mxu0 0
        %694 = vmatpush.bf16.msra.mxu0 0
        %695 = vmatpush.bf16.msra.mxu0 %v658
        %696 = vmatpush.bf16.msra.mxu0 %v656
        %697 = vmatmul.bf16.gmra.mxu0 %v665
        %v698 = vpop.f32.mrf.mxu0
        %v699 = vadd.f32 %v616, %v698
        %v700 = vpop.f32.mrf.mxu0
        %v701 = vadd.f32 %v621, %v700
        %702 = vmatmul.bf16.gmra.mxu0 %v668
        %v703 = vpop.f32.mrf.mxu0
        %v704 = vadd.f32 %v626, %v703
        %v705 = vpop.f32.mrf.mxu0
        %v706 = vadd.f32 %v631, %v705
        %707 = vdwg.mxu0
        %v708 = vmax.f32 %v680, 0.0
        %v709 = vmax.f32 %v699, 0.0
        %v710 = vmax.f32 %v682, 0.0
        %v711 = vmax.f32 %v701, 0.0
        %v712 = vmax.f32 %v685, 0.0
        %v713 = vmax.f32 %v704, 0.0
        %v714 = vmax.f32 %v687, 0.0
        %v715 = vmax.f32 %v706, 0.0
        %v716 = vpack.c.bf16 %v710, %v708
        %v717 = vpack.c.bf16 %v711, %v709
        %v718 = vpack.c.bf16 %v714, %v712
        %v719 = vpack.c.bf16 %v715, %v713
        %v720 = vld [vmem:[%s5] sm:$0xf]
        %v721 = vld [vmem:[%s5 + $0x4] sm:$0xf]
        %v722 = vld [vmem:[%s5 + $0x8] sm:$0xf]
        %v723 = vld [vmem:[%s5 + $0xc] sm:$0xf]
        %v724 = vld [vmem:[%s5 + $0x10] sm:$0xf]
        %v725 = vld [vmem:[%s5 + $0x14] sm:$0xf]
        %v726 = vld [vmem:[%s5 + $0x18] sm:$0xf]
        %v727 = vld [vmem:[%s5 + $0x1c] sm:$0xf]
        %v728 = vld [vmem:[%s6] sm:$0xff]
        %v729 = vld [vmem:[%s6 + $0x8] sm:$0xff]
        %v730 = vld [vmem:[%s6 + $0x10] sm:$0xff]
        %v731 = vld [vmem:[%s6 + $0x18] sm:$0xff]
        %v732 = vld [vmem:[%s6 + $0x20] sm:$0xff]
        %v733 = vld [vmem:[%s6 + $0x28] sm:$0xff]
        %v734 = vld [vmem:[%s6 + $0x30] sm:$0xff]
        %v735 = vld [vmem:[%s6 + $0x38] sm:$0xff]
        %737 = vset.pattern.permute.xlu0 0
        %738 = vperm.xlu0 %737, %v728
        %v739 = vpop.permute.xlu0 %738
        %742 = vset.pattern.permute.xlu0 0
        %743 = vperm.xlu0 %742, %v729
        %v744 = vpop.permute.xlu0 %743
        %747 = vset.pattern.permute.xlu0 0
        %748 = vperm.xlu0 %747, %v730
        %v749 = vpop.permute.xlu0 %748
        %752 = vset.pattern.permute.xlu0 0
        %753 = vperm.xlu0 %752, %v731
        %v754 = vpop.permute.xlu0 %753
        %757 = vset.pattern.permute.xlu0 0
        %758 = vperm.xlu0 %757, %v732
        %v759 = vpop.permute.xlu0 %758
        %762 = vset.pattern.permute.xlu0 0
        %763 = vperm.xlu0 %762, %v733
        %v764 = vpop.permute.xlu0 %763
        %767 = vset.pattern.permute.xlu0 0
        %768 = vperm.xlu0 %767, %v734
        %v769 = vpop.permute.xlu0 %768
        %772 = vset.pattern.permute.xlu0 0
        %773 = vperm.xlu0 %772, %v735
        %v774 = vpop.permute.xlu0 %773
        %v784 = vunpack.c.l.b16 %v720
        %v785 = vunpack.c.l.b16 %v721
        %v786 = vunpack.c.l.b16 %v722
        %v787 = vunpack.c.l.b16 %v723
        %v788 = vunpack.c.l.b16 %v724
        %v789 = vunpack.c.l.b16 %v725
        %v790 = vunpack.c.l.b16 %v726
        %v791 = vunpack.c.l.b16 %v727
        %v792 = vpack.c.b16 %v785, %v784
        %v793 = vpack.c.b16 %v787, %v786
        %v794 = vpack.c.b16 %v789, %v788
        %v795 = vpack.c.b16 %v791, %v790
        %v797 = vsel %vm663, %v792, 0
        %v800 = vsel %vm663, %v793, 0
        %v803 = vsel %vm663, %v794, 0
        %v806 = vsel %vm663, %v795, 0
        %808 = vmatpush.bf16.msra.mxu0 0
        %809 = vmatpush.bf16.msra.mxu0 0
        %810 = vmatpush.bf16.msra.mxu0 0
        %811 = vmatpush.bf16.msra.mxu0 0
        %812 = vmatpush.bf16.msra.mxu0 0
        %813 = vmatpush.bf16.msra.mxu0 0
        %814 = vmatpush.bf16.msra.mxu0 %v718
        %815 = vmatpush.bf16.msra.mxu0 %v716
        %816 = vmatmul.bf16.gmra.mxu0 %v797
        %v817 = vpop.f32.mrf.mxu0
        %v818 = vadd.f32 %v739, %v817
        %v819 = vpop.f32.mrf.mxu0
        %v820 = vadd.f32 %v744, %v819
        %821 = vmatmul.bf16.gmra.mxu0 %v800
        %v822 = vpop.f32.mrf.mxu0
        %v823 = vadd.f32 %v749, %v822
        %v824 = vpop.f32.mrf.mxu0
        %v825 = vadd.f32 %v754, %v824
        %826 = vmatmul.bf16.gmra.mxu0 %v803
        %v827 = vpop.f32.mrf.mxu0
        %v828 = vadd.f32 %v759, %v827
        %v829 = vpop.f32.mrf.mxu0
        %v830 = vadd.f32 %v764, %v829
        %831 = vmatmul.bf16.gmra.mxu0 %v806
        %v832 = vpop.f32.mrf.mxu0
        %v833 = vadd.f32 %v769, %v832
        %v834 = vpop.f32.mrf.mxu0
        %v835 = vadd.f32 %v774, %v834
        %836 = vdwg.mxu0
        %837 = vmatpush.bf16.msra.mxu0 0
        %838 = vmatpush.bf16.msra.mxu0 0
        %839 = vmatpush.bf16.msra.mxu0 0
        %840 = vmatpush.bf16.msra.mxu0 0
        %841 = vmatpush.bf16.msra.mxu0 0
        %842 = vmatpush.bf16.msra.mxu0 0
        %843 = vmatpush.bf16.msra.mxu0 %v719
        %844 = vmatpush.bf16.msra.mxu0 %v717
        %845 = vmatmul.bf16.gmra.mxu0 %v797
        %v846 = vpop.f32.mrf.mxu0
        %v847 = vadd.f32 %v739, %v846
        %v848 = vpop.f32.mrf.mxu0
        %v849 = vadd.f32 %v744, %v848
        %850 = vmatmul.bf16.gmra.mxu0 %v800
        %v851 = vpop.f32.mrf.mxu0
        %v852 = vadd.f32 %v749, %v851
        %v853 = vpop.f32.mrf.mxu0
        %v854 = vadd.f32 %v754, %v853
        %855 = vmatmul.bf16.gmra.mxu0 %v803
        %v856 = vpop.f32.mrf.mxu0
        %v857 = vadd.f32 %v759, %v856
        %v858 = vpop.f32.mrf.mxu0
        %v859 = vadd.f32 %v764, %v858
        %860 = vmatmul.bf16.gmra.mxu0 %v806
        %v861 = vpop.f32.mrf.mxu0
        %v862 = vadd.f32 %v769, %v861
        %v863 = vpop.f32.mrf.mxu0
        %v864 = vadd.f32 %v774, %v863
        %865 = vdwg.mxu0
        %v866 = vpack.c.bf16 %v847, %v818
        %v867 = vpack.c.bf16 %v849, %v820
        %v868 = vpack.c.bf16 %v852, %v823
        %v869 = vpack.c.bf16 %v854, %v825
        %v870 = vpack.c.bf16 %v857, %v828
        %v871 = vpack.c.bf16 %v859, %v830
        %v872 = vpack.c.bf16 %v862, %v833
        %v873 = vpack.c.bf16 %v864, %v835
        %874 = vst [vmem:[#allocation2] sm:$0xff] %v866
        %875 = vst [vmem:[#allocation2 + $0x8] sm:$0xff] %v867
        %876 = vst [vmem:[#allocation2 + $0x10] sm:$0xff] %v868
        %877 = vst [vmem:[#allocation2 + $0x18] sm:$0xff] %v869
        %878 = vst [vmem:[#allocation2 + $0x20] sm:$0xff] %v870
        %879 = vst [vmem:[#allocation2 + $0x28] sm:$0xff] %v871
        %880 = vst [vmem:[#allocation2 + $0x30] sm:$0xff] %v872
        %881 = vst [vmem:[#allocation2 + $0x38] sm:$0xff] %v873
        %v882 = vld [vmem:[#allocation2] sm:$0xff]
        %v883 = vld [vmem:[#allocation2 + $0x20] sm:$0xff]
        %v884 = vld [vmem:[%s1] sm:$0xf]
        %v886 = vunpack.c.l.b16 %v882
        %v887 = vunpack.c.h.b16 %v882
        %v888 = vpack.c.b16 %v886, %v886
        %v889 = vpack.c.b16 %v887, %v887
        %vm890 = vcmask 64512
        %v892 = vsel %vm890, %v884, 0
        %vm894 = vcmask 1043456
        %v896 = vsel %vm894, %v888, 0
        %v899 = vsel %vm894, %v889, 0
        %901 = vmatpush.bf16.msra.mxu0 0
        %902 = vmatpush.bf16.msra.mxu0 0
        %903 = vmatpush.bf16.msra.mxu0 0
        %904 = vmatpush.bf16.msra.mxu0 0
        %905 = vmatpush.bf16.msra.mxu0 0
        %906 = vmatpush.bf16.msra.mxu0 0
        %907 = vmatpush.bf16.msra.mxu0 0
        %908 = vmatpush.bf16.msra.mxu0 %v896
        %909 = vmatmul.bf16.gmra.mxu0 %v892
        %v910 = vpop.f32.mrf.mxu0
        %v911 = vadd.f32 0.0, %v910
        %v912 = vpop.f32.mrf.mxu0
        %913 = vdwg.mxu0
        %914 = vmatpush.bf16.msra.mxu0 0
        %915 = vmatpush.bf16.msra.mxu0 0
        %916 = vmatpush.bf16.msra.mxu0 0
        %917 = vmatpush.bf16.msra.mxu0 0
        %918 = vmatpush.bf16.msra.mxu0 0
        %919 = vmatpush.bf16.msra.mxu0 0
        %920 = vmatpush.bf16.msra.mxu0 0
        %921 = vmatpush.bf16.msra.mxu0 %v899
        %922 = vmatmul.bf16.gmra.mxu0 %v892
        %v923 = vpop.f32.mrf.mxu0
        %v924 = vadd.f32 0.0, %v923
        %v925 = vpop.f32.mrf.mxu0
        %926 = vdwg.mxu0
        %v927 = vmax.f32 %v911, %v924
        %928 = vmax.xlane.f32.xlu0 %v927
        %v929 = vpop.xlane.xlu0 %928
        %v930 = vsub.f32 %v911, %v929
        %v931 = vsub.f32 %v924, %v929
        %v932 = vmul.f32 %v930, 1.442695
        %v933 = vpow.pop %v932
        %v934 = vmul.f32 %v931, 1.442695
        %v935 = vpow.pop %v934
        %v936 = vadd.f32 %v933, %v935
        %937 = vadd.xlane.f32.xlu0 %v936
        %v938 = vpop.xlane.xlu0 %937
        %v939 = vrcp.pop %v938
        %v940 = vmul.f32 %v933, %v939
        %v941 = vmul.f32 %v935, %v939
        %v942 = vpack.c.bf16 %v940, %v940
        %v943 = vpack.c.bf16 %v941, %v941
        %v945 = vunpack.c.l.b16 %v883
        %v946 = vunpack.c.h.b16 %v883
        %v947 = vpack.c.b16 %v945, %v945
        %v948 = vpack.c.b16 %v946, %v946
        %951 = vmatpush.bf16.xpose.msra.mxu0 0
        %952 = vmatpush.bf16.xpose.msra.mxu0 0
        %953 = vmatpush.bf16.xpose.msra.mxu0 0
        %954 = vmatpush.bf16.xpose.msra.mxu0 0
        %955 = vmatpush.bf16.xpose.msra.mxu0 0
        %956 = vmatpush.bf16.xpose.msra.mxu0 0
        %957 = vmatpush.bf16.xpose.msra.mxu0 0
        %958 = vmatpush.bf16.xpose.msra.mxu0 %v947
        %959 = vmatmul.bf16.gmra.mxu0 %v942
        %v960 = vpop.f32.mrf.mxu0
        %v961 = vadd.f32 0.0, %v960
        %v962 = vpop.f32.mrf.mxu0
        %963 = vdwg.mxu0
        %964 = vmatpush.bf16.xpose.msra.mxu0 0
        %965 = vmatpush.bf16.xpose.msra.mxu0 0
        %966 = vmatpush.bf16.xpose.msra.mxu0 0
        %967 = vmatpush.bf16.xpose.msra.mxu0 0
        %968 = vmatpush.bf16.xpose.msra.mxu0 0
        %969 = vmatpush.bf16.xpose.msra.mxu0 0
        %970 = vmatpush.bf16.xpose.msra.mxu0 0
        %971 = vmatpush.bf16.xpose.msra.mxu0 %v948
        %972 = vmatmul.bf16.gmra.mxu0 %v943
        %v973 = vpop.f32.mrf.mxu0
        %v974 = vadd.f32 %v961, %v973
        %v975 = vpop.f32.mrf.mxu0
        %976 = vdwg.mxu0
        %v977 = vpack.c.bf16 %v974, %v974
        %v978 = vld [vmem:[%s7] sm:$0xf]
        %v979 = vld [vmem:[#allocation2 + $0x8] sm:$0xff]
        %v980 = vld [vmem:[#allocation2 + $0x28] sm:$0xff]
        %s981 = scalar_lea.vmem %s1, 4
        %v982 = vld [vmem:[%s981] sm:$0xf]
        %v984 = vunpack.c.l.b16 %v979
        %v985 = vunpack.c.h.b16 %v979
        %v986 = vpack.c.b16 %v984, %v984
        %v987 = vpack.c.b16 %v985, %v985
        %v989 = vsel %vm890, %v982, 0
        %v992 = vsel %vm894, %v986, 0
        %v995 = vsel %vm894, %v987, 0
        %997 = vmatpush.bf16.msra.mxu0 0
        %998 = vmatpush.bf16.msra.mxu0 0
        %999 = vmatpush.bf16.msra.mxu0 0
        %1000 = vmatpush.bf16.msra.mxu0 0
        %1001 = vmatpush.bf16.msra.mxu0 0
        %1002 = vmatpush.bf16.msra.mxu0 0
        %1003 = vmatpush.bf16.msra.mxu0 0
        %1004 = vmatpush.bf16.msra.mxu0 %v992
        %1005 = vmatmul.bf16.gmra.mxu0 %v989
        %v1006 = vpop.f32.mrf.mxu0
        %v1007 = vadd.f32 0.0, %v1006
        %v1008 = vpop.f32.mrf.mxu0
        %1009 = vdwg.mxu0
        %1010 = vmatpush.bf16.msra.mxu0 0
        %1011 = vmatpush.bf16.msra.mxu0 0
        %1012 = vmatpush.bf16.msra.mxu0 0
        %1013 = vmatpush.bf16.msra.mxu0 0
        %1014 = vmatpush.bf16.msra.mxu0 0
        %1015 = vmatpush.bf16.msra.mxu0 0
        %1016 = vmatpush.bf16.msra.mxu0 0
        %1017 = vmatpush.bf16.msra.mxu0 %v995
        %1018 = vmatmul.bf16.gmra.mxu0 %v989
        %v1019 = vpop.f32.mrf.mxu0
        %v1020 = vadd.f32 0.0, %v1019
        %v1021 = vpop.f32.mrf.mxu0
        %1022 = vdwg.mxu0
        %v1023 = vmax.f32 %v1007, %v1020
        %1024 = vmax.xlane.f32.xlu0 %v1023
        %v1025 = vpop.xlane.xlu0 %1024
        %v1026 = vsub.f32 %v1007, %v1025
        %v1027 = vsub.f32 %v1020, %v1025
        %v1028 = vmul.f32 %v1026, 1.442695
        %v1029 = vpow.pop %v1028
        %v1030 = vmul.f32 %v1027, 1.442695
        %v1031 = vpow.pop %v1030
        %v1032 = vadd.f32 %v1029, %v1031
        %1033 = vadd.xlane.f32.xlu0 %v1032
        %v1034 = vpop.xlane.xlu0 %1033
        %v1035 = vrcp.pop %v1034
        %v1036 = vmul.f32 %v1029, %v1035
        %v1037 = vmul.f32 %v1031, %v1035
        %v1038 = vpack.c.bf16 %v1036, %v1036
        %v1039 = vpack.c.bf16 %v1037, %v1037
        %v1041 = vunpack.c.l.b16 %v980
        %v1042 = vunpack.c.h.b16 %v980
        %v1043 = vpack.c.b16 %v1041, %v1041
        %v1044 = vpack.c.b16 %v1042, %v1042
        %1047 = vmatpush.bf16.xpose.msra.mxu0 0
        %1048 = vmatpush.bf16.xpose.msra.mxu0 0
        %1049 = vmatpush.bf16.xpose.msra.mxu0 0
        %1050 = vmatpush.bf16.xpose.msra.mxu0 0
        %1051 = vmatpush.bf16.xpose.msra.mxu0 0
        %1052 = vmatpush.bf16.xpose.msra.mxu0 0
        %1053 = vmatpush.bf16.xpose.msra.mxu0 0
        %1054 = vmatpush.bf16.xpose.msra.mxu0 %v1043
        %1055 = vmatmul.bf16.gmra.mxu0 %v1038
        %v1056 = vpop.f32.mrf.mxu0
        %v1057 = vadd.f32 0.0, %v1056
        %v1058 = vpop.f32.mrf.mxu0
        %1059 = vdwg.mxu0
        %1060 = vmatpush.bf16.xpose.msra.mxu0 0
        %1061 = vmatpush.bf16.xpose.msra.mxu0 0
        %1062 = vmatpush.bf16.xpose.msra.mxu0 0
        %1063 = vmatpush.bf16.xpose.msra.mxu0 0
        %1064 = vmatpush.bf16.xpose.msra.mxu0 0
        %1065 = vmatpush.bf16.xpose.msra.mxu0 0
        %1066 = vmatpush.bf16.xpose.msra.mxu0 0
        %1067 = vmatpush.bf16.xpose.msra.mxu0 %v1044
        %1068 = vmatmul.bf16.gmra.mxu0 %v1039
        %v1069 = vpop.f32.mrf.mxu0
        %v1070 = vadd.f32 %v1057, %v1069
        %v1071 = vpop.f32.mrf.mxu0
        %1072 = vdwg.mxu0
        %v1073 = vpack.c.bf16 %v1070, %v1070
        %s1074 = scalar_lea.vmem %s7, 4
        %v1075 = vld [vmem:[%s1074] sm:$0xf]
        %v1077 = vsel %vm890, %v1073, 0
        %v1080 = vsel %vm894, %v1075, 0
        %1082 = vmatpush.bf16.msra.mxu0 0
        %1083 = vmatpush.bf16.msra.mxu0 0
        %1084 = vmatpush.bf16.msra.mxu0 0
        %1085 = vmatpush.bf16.msra.mxu0 0
        %1086 = vmatpush.bf16.msra.mxu0 0
        %1087 = vmatpush.bf16.msra.mxu0 0
        %1088 = vmatpush.bf16.msra.mxu0 0
        %1089 = vmatpush.bf16.msra.mxu0 %v1080
        %1090 = vmatmul.bf16.gmra.mxu0 %v1077
        %v1091 = vpop.f32.mrf.mxu0
        %v1092 = vadd.f32 0.0, %v1091
        %v1093 = vpop.f32.mrf.mxu0
        %1094 = vdwg.mxu0
        %v1096 = vsel %vm890, %v977, 0
        %v1099 = vsel %vm894, %v978, 0
        %1101 = vmatpush.bf16.msra.mxu0 0
        %1102 = vmatpush.bf16.msra.mxu0 0
        %1103 = vmatpush.bf16.msra.mxu0 0
        %1104 = vmatpush.bf16.msra.mxu0 0
        %1105 = vmatpush.bf16.msra.mxu0 0
        %1106 = vmatpush.bf16.msra.mxu0 0
        %1107 = vmatpush.bf16.msra.mxu0 0
        %1108 = vmatpush.bf16.msra.mxu0 %v1099
        %1109 = vmatmul.bf16.gmra.mxu0 %v1096
        %v1110 = vpop.f32.mrf.mxu0
        %v1111 = vadd.f32 %v1092, %v1110
        %v1112 = vpop.f32.mrf.mxu0
        %1113 = vdwg.mxu0
        %v1114 = vld [vmem:[#allocation2 + $0x10] sm:$0xff]
        %v1115 = vld [vmem:[#allocation2 + $0x30] sm:$0xff]
        %s1116 = scalar_lea.vmem %s1, 8
        %v1117 = vld [vmem:[%s1116] sm:$0xf]
        %v1119 = vunpack.c.l.b16 %v1114
        %v1120 = vunpack.c.h.b16 %v1114
        %v1121 = vpack.c.b16 %v1119, %v1119
        %v1122 = vpack.c.b16 %v1120, %v1120
        %v1124 = vsel %vm890, %v1117, 0
        %v1127 = vsel %vm894, %v1121, 0
        %v1130 = vsel %vm894, %v1122, 0
        %1132 = vmatpush.bf16.msra.mxu0 0
        %1133 = vmatpush.bf16.msra.mxu0 0
        %1134 = vmatpush.bf16.msra.mxu0 0
        %1135 = vmatpush.bf16.msra.mxu0 0
        %1136 = vmatpush.bf16.msra.mxu0 0
        %1137 = vmatpush.bf16.msra.mxu0 0
        %1138 = vmatpush.bf16.msra.mxu0 0
        %1139 = vmatpush.bf16.msra.mxu0 %v1127
        %1140 = vmatmul.bf16.gmra.mxu0 %v1124
        %v1141 = vpop.f32.mrf.mxu0
        %v1142 = vadd.f32 0.0, %v1141
        %v1143 = vpop.f32.mrf.mxu0
        %1144 = vdwg.mxu0
        %1145 = vmatpush.bf16.msra.mxu0 0
        %1146 = vmatpush.bf16.msra.mxu0 0
        %1147 = vmatpush.bf16.msra.mxu0 0
        %1148 = vmatpush.bf16.msra.mxu0 0
        %1149 = vmatpush.bf16.msra.mxu0 0
        %1150 = vmatpush.bf16.msra.mxu0 0
        %1151 = vmatpush.bf16.msra.mxu0 0
        %1152 = vmatpush.bf16.msra.mxu0 %v1130
        %1153 = vmatmul.bf16.gmra.mxu0 %v1124
        %v1154 = vpop.f32.mrf.mxu0
        %v1155 = vadd.f32 0.0, %v1154
        %v1156 = vpop.f32.mrf.mxu0
        %1157 = vdwg.mxu0
        %v1158 = vmax.f32 %v1142, %v1155
        %1159 = vmax.xlane.f32.xlu0 %v1158
        %v1160 = vpop.xlane.xlu0 %1159
        %v1161 = vsub.f32 %v1142, %v1160
        %v1162 = vsub.f32 %v1155, %v1160
        %v1163 = vmul.f32 %v1161, 1.442695
        %v1164 = vpow.pop %v1163
        %v1165 = vmul.f32 %v1162, 1.442695
        %v1166 = vpow.pop %v1165
        %v1167 = vadd.f32 %v1164, %v1166
        %1168 = vadd.xlane.f32.xlu0 %v1167
        %v1169 = vpop.xlane.xlu0 %1168
        %v1170 = vrcp.pop %v1169
        %v1171 = vmul.f32 %v1164, %v1170
        %v1172 = vmul.f32 %v1166, %v1170
        %v1173 = vpack.c.bf16 %v1171, %v1171
        %v1174 = vpack.c.bf16 %v1172, %v1172
        %v1176 = vunpack.c.l.b16 %v1115
        %v1177 = vunpack.c.h.b16 %v1115
        %v1178 = vpack.c.b16 %v1176, %v1176
        %v1179 = vpack.c.b16 %v1177, %v1177
        %1182 = vmatpush.bf16.xpose.msra.mxu0 0
        %1183 = vmatpush.bf16.xpose.msra.mxu0 0
        %1184 = vmatpush.bf16.xpose.msra.mxu0 0
        %1185 = vmatpush.bf16.xpose.msra.mxu0 0
        %1186 = vmatpush.bf16.xpose.msra.mxu0 0
        %1187 = vmatpush.bf16.xpose.msra.mxu0 0
        %1188 = vmatpush.bf16.xpose.msra.mxu0 0
        %1189 = vmatpush.bf16.xpose.msra.mxu0 %v1178
        %1190 = vmatmul.bf16.gmra.mxu0 %v1173
        %v1191 = vpop.f32.mrf.mxu0
        %v1192 = vadd.f32 0.0, %v1191
        %v1193 = vpop.f32.mrf.mxu0
        %1194 = vdwg.mxu0
        %1195 = vmatpush.bf16.xpose.msra.mxu0 0
        %1196 = vmatpush.bf16.xpose.msra.mxu0 0
        %1197 = vmatpush.bf16.xpose.msra.mxu0 0
        %1198 = vmatpush.bf16.xpose.msra.mxu0 0
        %1199 = vmatpush.bf16.xpose.msra.mxu0 0
        %1200 = vmatpush.bf16.xpose.msra.mxu0 0
        %1201 = vmatpush.bf16.xpose.msra.mxu0 0
        %1202 = vmatpush.bf16.xpose.msra.mxu0 %v1179
        %1203 = vmatmul.bf16.gmra.mxu0 %v1174
        %v1204 = vpop.f32.mrf.mxu0
        %v1205 = vadd.f32 %v1192, %v1204
        %v1206 = vpop.f32.mrf.mxu0
        %1207 = vdwg.mxu0
        %v1208 = vpack.c.bf16 %v1205, %v1205
        %s1209 = scalar_lea.vmem %s7, 8
        %v1210 = vld [vmem:[%s1209] sm:$0xf]
        %v1212 = vsel %vm890, %v1208, 0
        %v1215 = vsel %vm894, %v1210, 0
        %1217 = vmatpush.bf16.msra.mxu0 0
        %1218 = vmatpush.bf16.msra.mxu0 0
        %1219 = vmatpush.bf16.msra.mxu0 0
        %1220 = vmatpush.bf16.msra.mxu0 0
        %1221 = vmatpush.bf16.msra.mxu0 0
        %1222 = vmatpush.bf16.msra.mxu0 0
        %1223 = vmatpush.bf16.msra.mxu0 0
        %1224 = vmatpush.bf16.msra.mxu0 %v1215
        %1225 = vmatmul.bf16.gmra.mxu0 %v1212
        %v1226 = vpop.f32.mrf.mxu0
        %v1227 = vadd.f32 0.0, %v1226
        %v1228 = vpop.f32.mrf.mxu0
        %1229 = vdwg.mxu0
        %v1230 = vadd.f32 %v1111, %v1227
        %v1231 = vld [vmem:[#allocation2 + $0x18] sm:$0xff]
        %v1232 = vld [vmem:[#allocation2 + $0x38] sm:$0xff]
        %s1233 = scalar_lea.vmem %s1, 12
        %v1234 = vld [vmem:[%s1233] sm:$0xf]
        %v1236 = vunpack.c.l.b16 %v1231
        %v1237 = vunpack.c.h.b16 %v1231
        %v1238 = vpack.c.b16 %v1236, %v1236
        %v1239 = vpack.c.b16 %v1237, %v1237
        %v1241 = vsel %vm890, %v1234, 0
        %v1244 = vsel %vm894, %v1238, 0
        %v1247 = vsel %vm894, %v1239, 0
        %1249 = vmatpush.bf16.msra.mxu0 0
        %1250 = vmatpush.bf16.msra.mxu0 0
        %1251 = vmatpush.bf16.msra.mxu0 0
        %1252 = vmatpush.bf16.msra.mxu0 0
        %1253 = vmatpush.bf16.msra.mxu0 0
        %1254 = vmatpush.bf16.msra.mxu0 0
        %1255 = vmatpush.bf16.msra.mxu0 0
        %1256 = vmatpush.bf16.msra.mxu0 %v1244
        %1257 = vmatmul.bf16.gmra.mxu0 %v1241
        %v1258 = vpop.f32.mrf.mxu0
        %v1259 = vadd.f32 0.0, %v1258
        %v1260 = vpop.f32.mrf.mxu0
        %1261 = vdwg.mxu0
        %1262 = vmatpush.bf16.msra.mxu0 0
        %1263 = vmatpush.bf16.msra.mxu0 0
        %1264 = vmatpush.bf16.msra.mxu0 0
        %1265 = vmatpush.bf16.msra.mxu0 0
        %1266 = vmatpush.bf16.msra.mxu0 0
        %1267 = vmatpush.bf16.msra.mxu0 0
        %1268 = vmatpush.bf16.msra.mxu0 0
        %1269 = vmatpush.bf16.msra.mxu0 %v1247
        %1270 = vmatmul.bf16.gmra.mxu0 %v1241
        %v1271 = vpop.f32.mrf.mxu0
        %v1272 = vadd.f32 0.0, %v1271
        %v1273 = vpop.f32.mrf.mxu0
        %1274 = vdwg.mxu0
        %v1275 = vmax.f32 %v1259, %v1272
        %1276 = vmax.xlane.f32.xlu0 %v1275
        %v1277 = vpop.xlane.xlu0 %1276
        %v1278 = vsub.f32 %v1259, %v1277
        %v1279 = vsub.f32 %v1272, %v1277
        %v1280 = vmul.f32 %v1278, 1.442695
        %v1281 = vpow.pop %v1280
        %v1282 = vmul.f32 %v1279, 1.442695
        %v1283 = vpow.pop %v1282
        %v1284 = vadd.f32 %v1281, %v1283
        %1285 = vadd.xlane.f32.xlu0 %v1284
        %v1286 = vpop.xlane.xlu0 %1285
        %v1287 = vrcp.pop %v1286
        %v1288 = vmul.f32 %v1281, %v1287
        %v1289 = vmul.f32 %v1283, %v1287
        %v1290 = vpack.c.bf16 %v1288, %v1288
        %v1291 = vpack.c.bf16 %v1289, %v1289
        %v1293 = vunpack.c.l.b16 %v1232
        %v1294 = vunpack.c.h.b16 %v1232
        %v1295 = vpack.c.b16 %v1293, %v1293
        %v1296 = vpack.c.b16 %v1294, %v1294
        %1299 = vmatpush.bf16.xpose.msra.mxu0 0
        %1300 = vmatpush.bf16.xpose.msra.mxu0 0
        %1301 = vmatpush.bf16.xpose.msra.mxu0 0
        %1302 = vmatpush.bf16.xpose.msra.mxu0 0
        %1303 = vmatpush.bf16.xpose.msra.mxu0 0
        %1304 = vmatpush.bf16.xpose.msra.mxu0 0
        %1305 = vmatpush.bf16.xpose.msra.mxu0 0
        %1306 = vmatpush.bf16.xpose.msra.mxu0 %v1295
        %1307 = vmatmul.bf16.gmra.mxu0 %v1290
        %v1308 = vpop.f32.mrf.mxu0
        %v1309 = vadd.f32 0.0, %v1308
        %v1310 = vpop.f32.mrf.mxu0
        %1311 = vdwg.mxu0
        %1312 = vmatpush.bf16.xpose.msra.mxu0 0
        %1313 = vmatpush.bf16.xpose.msra.mxu0 0
        %1314 = vmatpush.bf16.xpose.msra.mxu0 0
        %1315 = vmatpush.bf16.xpose.msra.mxu0 0
        %1316 = vmatpush.bf16.xpose.msra.mxu0 0
        %1317 = vmatpush.bf16.xpose.msra.mxu0 0
        %1318 = vmatpush.bf16.xpose.msra.mxu0 0
        %1319 = vmatpush.bf16.xpose.msra.mxu0 %v1296
        %1320 = vmatmul.bf16.gmra.mxu0 %v1291
        %v1321 = vpop.f32.mrf.mxu0
        %v1322 = vadd.f32 %v1309, %v1321
        %v1323 = vpop.f32.mrf.mxu0
        %1324 = vdwg.mxu0
        %v1325 = vpack.c.bf16 %v1322, %v1322
        %s1326 = scalar_lea.vmem %s7, 12
        %v1327 = vld [vmem:[%s1326] sm:$0xf]
        %v1329 = vsel %vm890, %v1325, 0
        %v1332 = vsel %vm894, %v1327, 0
        %1334 = vmatpush.bf16.msra.mxu0 0
        %1335 = vmatpush.bf16.msra.mxu0 0
        %1336 = vmatpush.bf16.msra.mxu0 0
        %1337 = vmatpush.bf16.msra.mxu0 0
        %1338 = vmatpush.bf16.msra.mxu0 0
        %1339 = vmatpush.bf16.msra.mxu0 0
        %1340 = vmatpush.bf16.msra.mxu0 0
        %1341 = vmatpush.bf16.msra.mxu0 %v1332
        %1342 = vmatmul.bf16.gmra.mxu0 %v1329
        %v1343 = vpop.f32.mrf.mxu0
        %v1344 = vadd.f32 0.0, %v1343
        %v1345 = vpop.f32.mrf.mxu0
        %1346 = vdwg.mxu0
        %v1347 = vadd.f32 %v1230, %v1344
        %v1348 = vld [vmem:[%s2] sm:$0xff]
        %v1349 = vadd.f32 %v1348, %v1347
        %v1350 = vld [vmem:[%s8] sm:$0x1]
        %v1352 = vperm.slane %v1350, 0
        %v1354 = vadd.f32 %v1349, %v1352
        %v1355 = vld [vmem:[%s9] sm:$0x1]
        %v1356 = vld [vmem:[%s10] sm:$0x1]
        %v1357 = vsel %vm663, %v1354, 0.0
        %1358 = vadd.xlane.f32.xlu0 %v1357
        %v1359 = vpop.xlane.xlu0 %1358
        %v1360 = vrcp.pop 32.0
        %v1361 = vmul.f32 32.0, %v1360
        %v1362 = vsub.f32 1.0, %v1361
        %v1363 = vmul.f32 %v1360, %v1362
        %v1364 = vadd.f32 %v1360, %v1363
        %vm1365 = vweird.f32 %v1360
        %v1366 = vsel %vm1365, %v1360, %v1364
        %v1367 = vmul.f32 %v1359, %v1366
        %v1368 = vsub.f32 %v1354, %v1367
        %v1369 = vmul.f32 %v1368, %v1368
        %v1370 = vsel %vm663, %v1369, 0.0
        %1371 = vadd.xlane.f32.xlu0 %v1370
        %v1372 = vpop.xlane.xlu0 %1371
        %v1373 = vmul.f32 %v1372, %v1366
        %v1374 = vadd.f32 %v1373, 1e-05
        %v1375 = vrsqrt.pop %v1374
        %v1376 = vmul.f32 %v1375, %v1374
        %v1377 = vmul.f32 %v1376, %v1375
        %v1378 = vmul.f32 0.5, %v1377
        %v1379 = vsub.f32 1.5, %v1378
        %v1380 = vmul.f32 %v1375, %v1379
        %vm1381 = vweird.f32 %v1374
        %vm1382 = vweird.f32 %v1375
        %vm1383 = vmor %vm1381, %vm1382
        %v1384 = vsel %vm1383, %v1375, %v1380
        %v1385 = vmul.f32 %v1368, %v1384
        %v1387 = vperm.slane %v1355, 0
        %v1389 = vmul.f32 %v1385, %v1387
        %v1391 = vperm.slane %v1356, 0
        %v1393 = vadd.f32 %v1389, %v1391
        %1394 = vst.msk [vmem:[#allocation3] sm:$0xff] %vm663, %v1393
        %v1395 = vld [vmem:[#allocation3] sm:$0xff]
        %v1396 = vpack.c.bf16 %v1395, %v1395
        %v1397 = vld [vmem:[%s13] sm:$0xf]
        %v1398 = vld [vmem:[%s13 + $0x4] sm:$0xf]
        %v1399 = vld [vmem:[%s13 + $0x8] sm:$0xf]
        %v1400 = vld [vmem:[%s13 + $0xc] sm:$0xf]
        %v1401 = vld [vmem:[%s14] sm:$0x1]
        %v1403 = vperm.slane %v1401, 0
        %v1409 = vunpack.c.l.b16 %v1397
        %v1410 = vunpack.c.l.b16 %v1398
        %v1411 = vunpack.c.l.b16 %v1399
        %v1412 = vunpack.c.l.b16 %v1400
        %v1413 = vpack.c.b16 %v1410, %v1409
        %v1414 = vpack.c.b16 %v1412, %v1411
        %v1418 = vsel %vm663, %v1396, 0
        %1420 = vmatpush.bf16.msra.mxu0 0
        %1421 = vmatpush.bf16.msra.mxu0 0
        %1422 = vmatpush.bf16.msra.mxu0 0
        %1423 = vmatpush.bf16.msra.mxu0 0
        %1424 = vmatpush.bf16.msra.mxu0 0
        %1425 = vmatpush.bf16.msra.mxu0 0
        %1426 = vmatpush.bf16.msra.mxu0 %v1414
        %1427 = vmatpush.bf16.msra.mxu0 %v1413
        %1428 = vmatmul.bf16.gmra.mxu0 %v1418
        %v1429 = vpop.f32.mrf.mxu0
        %v1430 = vadd.f32 %v1403, %v1429
        %v1431 = vpop.f32.mrf.mxu0
        %1432 = vdwg.mxu0
        %v1433 = vmax.f32 %v1430, 0.0
        %v1434 = vpack.c.bf16 %v1433, %v1433
        %v1435 = vld [vmem:[%s15] sm:$0xf]
        %v1436 = vld [vmem:[%s15 + $0x4] sm:$0xf]
        %v1437 = vld [vmem:[%s15 + $0x8] sm:$0xf]
        %v1438 = vld [vmem:[%s15 + $0xc] sm:$0xf]
        %v1439 = vld [vmem:[%s15 + $0x10] sm:$0xf]
        %v1440 = vld [vmem:[%s15 + $0x14] sm:$0xf]
        %v1441 = vld [vmem:[%s15 + $0x18] sm:$0xf]
        %v1442 = vld [vmem:[%s15 + $0x1c] sm:$0xf]
        %v1443 = vld [vmem:[%s16] sm:$0x1]
        %v1445 = vperm.slane %v1443, 0
        %v1455 = vunpack.c.l.b16 %v1435
        %v1456 = vunpack.c.l.b16 %v1436
        %v1457 = vunpack.c.l.b16 %v1437
        %v1458 = vunpack.c.l.b16 %v1438
        %v1459 = vunpack.c.l.b16 %v1439
        %v1460 = vunpack.c.l.b16 %v1440
        %v1461 = vunpack.c.l.b16 %v1441
        %v1462 = vunpack.c.l.b16 %v1442
        %v1463 = vpack.c.b16 %v1456, %v1455
        %v1464 = vpack.c.b16 %v1458, %v1457
        %v1465 = vpack.c.b16 %v1460, %v1459
        %v1466 = vpack.c.b16 %v1462, %v1461
        %vm1471 = vcmask 523264
        %v1473 = vsel %vm1471, %v1434, 0
        %1475 = vmatpush.bf16.msra.mxu0 0
        %1476 = vmatpush.bf16.msra.mxu0 0
        %1477 = vmatpush.bf16.msra.mxu0 0
        %1478 = vmatpush.bf16.msra.mxu0 0
        %1479 = vmatpush.bf16.msra.mxu0 %v1466
        %1480 = vmatpush.bf16.msra.mxu0 %v1465
        %1481 = vmatpush.bf16.msra.mxu0 %v1464
        %1482 = vmatpush.bf16.msra.mxu0 %v1463
        %1483 = vmatmul.bf16.gmra.mxu0 %v1473
        %v1484 = vpop.f32.mrf.mxu0
        %v1485 = vadd.f32 %v1445, %v1484
        %v1486 = vpop.f32.mrf.mxu0
        %1487 = vdwg.mxu0
        %v1488 = vadd.f32 %v1395, %v1485
        %v1489 = vld [vmem:[%s11] sm:$0x1]
        %v1490 = vld [vmem:[%s12] sm:$0x1]
        %v1491 = vsel %vm663, %v1488, 0.0
        %1492 = vadd.xlane.f32.xlu0 %v1491
        %v1493 = vpop.xlane.xlu0 %1492
        %v1494 = vmul.f32 %v1493, %v1366
        %v1495 = vsub.f32 %v1488, %v1494
        %v1496 = vmul.f32 %v1495, %v1495
        %v1497 = vsel %vm663, %v1496, 0.0
        %1498 = vadd.xlane.f32.xlu0 %v1497
        %v1499 = vpop.xlane.xlu0 %1498
        %v1500 = vmul.f32 %v1499, %v1366
        %v1501 = vadd.f32 %v1500, 1e-05
        %v1502 = vrsqrt.pop %v1501
        %v1503 = vmul.f32 %v1502, %v1501
        %v1504 = vmul.f32 %v1503, %v1502
        %v1505 = vmul.f32 0.5, %v1504
        %v1506 = vsub.f32 1.5, %v1505
        %v1507 = vmul.f32 %v1502, %v1506
        %vm1508 = vweird.f32 %v1501
        %vm1509 = vweird.f32 %v1502
        %vm1510 = vmor %vm1508, %vm1509
        %v1511 = vsel %vm1510, %v1502, %v1507
        %v1512 = vmul.f32 %v1495, %v1511
        %v1514 = vperm.slane %v1489, 0
        %v1516 = vmul.f32 %v1512, %v1514
        %v1518 = vperm.slane %v1490, 0
        %v1520 = vadd.f32 %v1516, %v1518
        %v1521 = vld [vmem:[%s17] sm:$0xff]
        %v1522 = vmul.f32 %v1520, %v1521
        %v1523 = vsel %vm663, %v1522, 0.0
        %1524 = vadd.xlane.f32.xlu0 %v1523
        %v1525 = vpop.xlane.xlu0 %1524
        %v1526 = vld [vmem:[%s18] sm:$0x1]
        %v1528 = vperm.slane %v1526, 0
        %v1529 = vlaneseq
        %v1530 = vshrl.u32 %v1529, 7
        %1532 = vset.pattern.permute.xlu0 %v1530
        %1533 = vperm.xlu0 %1532, %v1528
        %v1534 = vpop.permute.xlu0 %1533
        %v1536 = vadd.f32 %v1525, %v1534
        %1538 = vset.pattern.permute.xlu0 0
        %1539 = vperm.xlu0 %1538, %v1536
        %v1540 = vpop.permute.xlu0 %1539
        %v1541 = vlaneseq
        %v1542 = vand.u32 %v1541, 127
        %v1543 = vperm.slane %v1540, %v1542
        %vm1545 = vcmask 57344
        %1546 = vst.msk [vmem:[%s594] sm:$0x1] %vm1545, %v1543
        %s1547 = sand.u32 %s445, 1
        %s1548 = scalar_lea.sflag [#allocation5], %s1547
        %s1549 = sand.u32 %s445, 1
        %s1550 = scalar_lea.vmem [#allocation4], %s1549
        // Predicated region
        $region97: #{tpu_custom_call.1} parent=95 // pred_check
          %p1551 = pneg %p455
        $region98: #{tpu_custom_call.1} parent=95 // pred_check_branch
          %1553 = sbr.rel (%p1551) target = $region100
        $region99: #{tpu_custom_call.1} parent=95 // pred_region
          %1555 = vsyncadd %s1548, 0
          %s1556 = scalar_lea.hbm %s19, %s33
          %s1558 = sshll.u32 %s1550, 4
          %s1559 = int_to_ptr.vmem [resolvable:$true] %s1558
          %s1560 = sshll.u32 %s1556, 4
          %s1561 = int_to_ptr.hbm [resolvable:$true] %s1560
          %1563 = dma.vmem_to_hbm [thread:$0]  %s1559, 16, %s1561, %s1548
        $region100: #{tpu_custom_call.1} parent=95 // pred_fallthru
          _
      $region96: #{tpu_custom_call.1} parent=5 // pred_fallthru
        _
      %p1564 = scmp.le.s32.totalorder 2, %s28
      // Predicated region
      $region101: #{tpu_custom_call.1} parent=5 // pred_check
        %p1565 = pneg %p1564
      $region102: #{tpu_custom_call.1} parent=5 // pred_check_branch
        %1567 = sbr.rel (%p1565) target = $region104
      $region103: #{tpu_custom_call.1} parent=5 // pred_region
        %s1568 = ssub.s32 %s28, 2
        // Predicated region
        $region105: #{tpu_custom_call.1} parent=103 // pred_check
          %p1569 = pneg %p461
        $region106: #{tpu_custom_call.1} parent=103 // pred_check_branch
          %1571 = sbr.rel (%p1569) target = $region108
        $region107: #{tpu_custom_call.1} parent=103 // pred_region
          %s1572 = sand.u32 %s446, 1
          %s1573 = scalar_lea.sflag [#allocation5], %s1572
          %s1574 = sand.u32 %s446, 1
          %s1575 = scalar_lea.vmem [#allocation4], %s1574
          %1577 = dma.done %s1573, 16
        $region108: #{tpu_custom_call.1} parent=103 // pred_fallthru
          _
      $region104: #{tpu_custom_call.1} parent=5 // pred_fallthru
        _
    $region6: #{tpu_custom_call.1} parent=1 // loop_footer
      %s32 = sadd.s32 1, %s28
    $region7: #{tpu_custom_call.1} parent=1 // loop_footer_branch
      %27 = sbr.rel target = $region3
    $region8: #{tpu_custom_call.1} parent=1 // loop_exit
      _
    %1578 = vsyncpa [#allocation5], 1
    %s1579 = scalar_lea.sflag [#allocation5], 1
    %1580 = vsyncpa %s1579, 1

</llo_original>
